<compile_context>
chip_gen: v7x
topology: tpu7x:2x2x1
jax: 0.10.0
libtpu: 0.0.40
codegen_flags: <defaults>
</compile_context>

<pallas_src>
import functools
import math

import jax
import jax.numpy as jnp
import numpy as np
from jax.experimental import pallas as pl
from jax.experimental.pallas import tpu as pltpu

# ----------------------------- model hyperparams -----------------------------
VOCAB = 50
VOCAB_PAD = 64          # token one-hot columns 0:64 (only 0:50 used)
LOGIT_PAD = 128         # final fc output lanes padded -> lane-dense stores
D_MODEL = 32
HEADS = 4
HEAD_DIM = D_MODEL // HEADS
NUM_LAYERS = 2
D_FF = 64
MAX_SEQ_LEN = 16
SEQ_LEN = 8
BATCH = 2
LN_EPS = 1e-5
NEG_INF = -1e9          # PyTorch masked_fill value (within-batch masking)
NEG_XBATCH = -1e30      # cross-batch "never attend" (strictly below NEG_INF)

# ------------------------------ packed slab layout ----------------------------
SLOT = 128                               # lane-tile slot width
QKV_W = 3 * HEADS * SLOT                 # 1536: Q heads 0-3, K heads 0-3, V heads 0-3
OFF_WO = QKV_W                           # 1536
OFF_W1 = OFF_WO + SLOT                   # 1664
OFF_W2 = OFF_W1 + SLOT                   # 1792
MAT_W = OFF_W2 + SLOT                    # 1920
MAT_ROWS = max(D_MODEL, D_FF)            # 64 (QKV/Wo/W1 use rows 0:32, W2 rows 0:64)
VEC_ROWS = 8                             # row 0 biases, rows 1-4 LN params
TBL_ROWS = 128                           # rows 0:VOCAB emb, rows 64:64+MAX_SEQ_LEN pe
FC_ROWS = 40                             # rows 0:32 weight, row 32 bias (sublane padded)


# ------------------------------ fused Pallas kernel ----------------------------
def _fused_decoder_kernel(
    idx_ref,      # (BL, 2) int32 : [:,0] token id, [:,1] VOCAB_PAD + position
    tbl_ref,      # (TBL_ROWS, D) f32 combined embedding + positional-encoding table
    mat_ref,      # (NL, MAT_ROWS, MAT_W) f32 per-layer matrix slab
    vec_ref,      # (NL, VEC_ROWS, MAT_W) f32 per-layer bias / LayerNorm slab
    fc_ref,       # (FC_ROWS, LOGIT_PAD) f32 final projection (weight + bias row)
    out_ref,      # (BL, LOGIT_PAD) f32 padded logits
    attn_sc,      # (BL, D) f32 VMEM scratch: per-head attention accumulator
    *, batch, seq_len,
):
    f32 = jnp.float32
    B, L, D, H, Dh = batch, seq_len, D_MODEL, HEADS, HEAD_DIM
    BL = B * L

    tok = idx_ref[:, 0:1]                                           # (BL,1) i32
    posid = idx_ref[:, 1:2]                                         # (BL,1) i32

    # ---- embedding lookup + positional encoding as ONE one-hot MXU matmul ----
    lane = jax.lax.broadcasted_iota(jnp.int32, (BL, TBL_ROWS), 1)
    onehot = jnp.logical_or(lane == tok, lane == posid).astype(f32)  # (BL,128)
    x = jnp.dot(onehot, tbl_ref[...], preferred_element_type=f32)    # (BL,D)
    # (dropout after embedding+PE is identity in eval mode)

    # ---- masks, built once: block-diagonal batch + causal + query-row padding ----
    # PyTorch: tgt_mask = (tgt != 0)[:,None,:,None] & tril(ones(L,L))
    ridx = jax.lax.broadcasted_iota(jnp.int32, (BL, BL), 0)
    cidx = jax.lax.broadcasted_iota(jnp.int32, (BL, BL), 1)
    same_batch = None
    for b in range(B):                                   # static, tiny (B=2)
        blk = ((ridx >= b * L) & (ridx < (b + 1) * L)
               & (cidx >= b * L) & (cidx < (b + 1) * L))
        same_batch = blk if same_batch is None else jnp.logical_or(same_batch, blk)
    # within the same batch block, global r >= c  <=>  within-batch causal
    keep = jnp.logical_and(jnp.logical_and(same_batch, ridx >= cidx), tok != 0)

    def layer_norm(z, g, be):
        mean = jnp.mean(z, axis=-1, keepdims=True)
        zc = z - mean
        var = jnp.mean(zc * zc, axis=-1, keepdims=True)
        return zc * jax.lax.rsqrt(var + LN_EPS) * g + be

    scale = f32(1.0 / math.sqrt(Dh))
    qk_dims = (((1,), (1,)), ((), ()))                    # contract last dims: q @ k^T

    for layer in range(NUM_LAYERS):
        # ---- fused, head-slot-aligned Q/K/V projection: one (BL,D)x(D,1536) pass ----
        qkv = (jnp.dot(x, mat_ref[layer, 0:D, 0:QKV_W], preferred_element_type=f32)
               + vec_ref[layer, 0:1, 0:QKV_W])

        # ---- attention: one (BL,BL) score matrix per head over ALL batches ----
        for hd in range(H):
            q_h = qkv[:, hd * SLOT: hd * SLOT + Dh]                   # aligned slices
            k_h = qkv[:, (H + hd) * SLOT: (H + hd) * SLOT + Dh]
            v_h = qkv[:, (2 * H + hd) * SLOT: (2 * H + hd) * SLOT + Dh]
            s = jax.lax.dot_general(q_h, k_h, qk_dims,
                                    preferred_element_type=f32) * scale
            s = jnp.where(keep, s, f32(NEG_INF))          # masked_fill semantics
            s = jnp.where(same_batch, s, f32(NEG_XBATCH))  # cross-batch: never attend
            s = s - jnp.max(s, axis=-1, keepdims=True)
            p = jnp.exp(s)
            p = p * pl.reciprocal(jnp.sum(p, axis=-1, keepdims=True), approx=True)
            attn_sc[:, hd * Dh:(hd + 1) * Dh] = jnp.dot(
                p, v_h, preferred_element_type=f32)        # write head slice to scratch

        attn = (jnp.dot(attn_sc[...], mat_ref[layer, 0:D, OFF_WO:OFF_WO + D],
                        preferred_element_type=f32)
                + vec_ref[layer, 0:1, OFF_WO:OFF_WO + D])
        # residual + LayerNorm 1 (attention dropout is identity in eval)
        x1 = layer_norm(x + attn,
                        vec_ref[layer, 1:2, 0:D], vec_ref[layer, 2:3, 0:D])

        # ------------------------- feed-forward block ------------------------
        hid = jnp.maximum(
            jnp.dot(x1, mat_ref[layer, 0:D, OFF_W1:OFF_W1 + D_FF],
                    preferred_element_type=f32)
            + vec_ref[layer, 0:1, OFF_W1:OFF_W1 + D_FF], 0.0)
        ff = (jnp.dot(hid, mat_ref[layer, 0:D_FF, OFF_W2:OFF_W2 + D],
                      preferred_element_type=f32)
              + vec_ref[layer, 0:1, OFF_W2:OFF_W2 + D])
        x = layer_norm(x1 + ff,
                       vec_ref[layer, 3:4, 0:D], vec_ref[layer, 4:5, 0:D])

    # ------------- final projection to (padded) vocab, lane-dense store -------
    out_ref[...] = (jnp.dot(x, fc_ref[0:D_MODEL, :], preferred_element_type=f32)
                    + fc_ref[D_MODEL:D_MODEL + 1, :])


def _fused_forward_call(batch, seq_len):
    BL = batch * seq_len
    vmem = pl.BlockSpec(memory_space=pltpu.MemorySpace.VMEM)
    kernel = functools.partial(_fused_decoder_kernel, batch=batch, seq_len=seq_len)

    flops = (
        2 * BL * TBL_ROWS * D_MODEL                              # embedding+PE matmul
        + NUM_LAYERS * (
            2 * BL * D_MODEL * QKV_W                             # fused QKV
            + HEADS * 2 * (2 * BL * BL * HEAD_DIM)               # scores + PV per head
            + 2 * BL * D_MODEL * D_MODEL                         # Wo
            + 2 * BL * D_MODEL * D_FF + 2 * BL * D_FF * D_MODEL  # feed-forward
        )
        + 2 * BL * D_MODEL * LOGIT_PAD                           # final fc
    )
    transcendentals = NUM_LAYERS * HEADS * BL * BL + NUM_LAYERS * 2 * BL + NUM_LAYERS * HEADS * BL
    bytes_accessed = 4 * (BL * 2 + TBL_ROWS * D_MODEL
                          + NUM_LAYERS * MAT_ROWS * MAT_W
                          + NUM_LAYERS * VEC_ROWS * MAT_W
                          + FC_ROWS * LOGIT_PAD + BL * LOGIT_PAD)

    # TODO(synk): for large batch counts, add a leading grid axis over
    # super-batches (weights with constant index_maps stay VMEM-resident and
    # v7x can split the grid across its two TensorCores); pointless at BL=16.
    return pl.pallas_call(
        kernel,
        out_shape=jax.ShapeDtypeStruct((BL, LOGIT_PAD), jnp.float32),
        in_specs=[vmem] * 5,
        out_specs=vmem,
        scratch_shapes=[pltpu.VMEM((BL, D_MODEL), jnp.float32)],
        cost_estimate=pl.CostEstimate(flops=flops,
                                      transcendentals=transcendentals,
                                      bytes_accessed=bytes_accessed),
    )


# ------------------------------ parameter setup -------------------------------
def sinusoidal_pe(max_len, d):
    pos = np.arange(max_len, dtype=np.float32)[:, None]
    div = np.exp(np.arange(0, d, 2, dtype=np.float32) * -(np.log(10000.0) / d))
    pe = np.zeros((max_len, d), dtype=np.float32)
    pe[:, 0::2] = np.sin(pos * div)
    pe[:, 1::2] = np.cos(pos * div)
    return pe


def init_params(key):
    keys = iter(jax.random.split(key, 64))

    def nrm(shape, scale=0.05):
        return np.asarray(scale * jax.random.normal(next(keys), shape),
                          dtype=np.float32)

    # combined embedding + positional-encoding table (one-hot matmul target)
    table = np.zeros((TBL_ROWS, D_MODEL), np.float32)
    table[:VOCAB] = nrm((VOCAB, D_MODEL), 1.0)
    table[VOCAB_PAD:VOCAB_PAD + MAX_SEQ_LEN] = sinusoidal_pe(MAX_SEQ_LEN, D_MODEL)

    mat = np.zeros((NUM_LAYERS, MAT_ROWS, MAT_W), np.float32)
    vec = np.zeros((NUM_LAYERS, VEC_ROWS, MAT_W), np.float32)
    for l in range(NUM_LAYERS):
        # Q/K/V weights, packed so every head's Dh block starts at a 128-lane slot
        for which in range(3):                       # 0=Q, 1=K, 2=V
            w = nrm((D_MODEL, D_MODEL))
            b = nrm((1, D_MODEL))
            for hd in range(HEADS):
                slot = which * HEADS + hd
                c0 = slot * SLOT
                mat[l, :D_MODEL, c0:c0 + HEAD_DIM] = w[:, hd * HEAD_DIM:(hd + 1) * HEAD_DIM]
                vec[l, 0, c0:c0 + HEAD_DIM] = b[0, hd * HEAD_DIM:(hd + 1) * HEAD_DIM]
        mat[l, :D_MODEL, OFF_WO:OFF_WO + D_MODEL] = nrm((D_MODEL, D_MODEL))   # Wo
        vec[l, 0, OFF_WO:OFF_WO + D_MODEL] = nrm((1, D_MODEL))[0]
        mat[l, :D_MODEL, OFF_W1:OFF_W1 + D_FF] = nrm((D_MODEL, D_FF))         # W1
        vec[l, 0, OFF_W1:OFF_W1 + D_FF] = nrm((1, D_FF))[0]
        mat[l, :D_FF, OFF_W2:OFF_W2 + D_MODEL] = nrm((D_FF, D_MODEL))         # W2
        vec[l, 0, OFF_W2:OFF_W2 + D_MODEL] = nrm((1, D_MODEL))[0]
        vec[l, 1, :D_MODEL] = 1.0   # LayerNorm1 gamma
        vec[l, 2, :D_MODEL] = 0.0   # LayerNorm1 beta
        vec[l, 3, :D_MODEL] = 1.0   # LayerNorm2 gamma
        vec[l, 4, :D_MODEL] = 0.0   # LayerNorm2 beta

    fc = np.zeros((FC_ROWS, LOGIT_PAD), np.float32)
    fc[:D_MODEL, :VOCAB] = nrm((D_MODEL, VOCAB))     # final fc weight
    fc[D_MODEL, :VOCAB] = nrm((1, VOCAB))[0]         # final fc bias (extra row)

    return {
        "table": jnp.asarray(table),
        "mat": jnp.asarray(mat),
        "vec": jnp.asarray(vec),
        "fc": jnp.asarray(fc),
    }


# -------------------------------- forward pass --------------------------------
def decoder_only_transformer_forward(params, tgt):
    B, L = tgt.shape
    BL = B * L
    tok = tgt.reshape(BL, 1).astype(jnp.int32)
    pos = (jnp.tile(jnp.arange(L, dtype=jnp.int32), B).reshape(BL, 1) + VOCAB_PAD)
    idx = jnp.concatenate([tok, pos], axis=1)            # (BL, 2) int32

    logits_pad = _fused_forward_call(B, L)(
        idx, params["table"], params["mat"], params["vec"], params["fc"])
    return logits_pad[:, :VOCAB].reshape(B, L, VOCAB)


# ------------------------------------ main -------------------------------------
if __name__ == "__main__":
    key = jax.random.PRNGKey(0)
    pkey, tkey = jax.random.split(key)
    params = init_params(pkey)

    # token ids in [0, VOCAB); id 0 acts as padding and exercises the pad mask
    tgt = jax.random.randint(tkey, (BATCH, SEQ_LEN), 0, VOCAB, dtype=jnp.int32)

    logits = jax.jit(decoder_only_transformer_forward)(params, tgt)
    logits = jax.block_until_ready(logits)

    assert logits.shape == (BATCH, SEQ_LEN, VOCAB)
    assert bool(jnp.all(jnp.isfinite(logits)))
    print("KERNEL_OK")
</pallas_src>

<mosaic_0001>
module attributes {stable_mosaic.version = 11 : i64} {
  func.func @_fused_decoder_kernel(%arg0: memref<16x2xi32, #tpu.memory_space<vmem>>, %arg1: memref<128x32xf32, #tpu.memory_space<vmem>>, %arg2: memref<2x64x1920xf32, #tpu.memory_space<vmem>>, %arg3: memref<2x8x1920xf32, #tpu.memory_space<vmem>>, %arg4: memref<40x128xf32, #tpu.memory_space<vmem>>, %arg5: memref<16x128xf32, #tpu.memory_space<vmem>>, %arg6: memref<16x32xf32, #tpu.memory_space<vmem>>) attributes {dimension_semantics = [], scalar_prefetch = 0 : i64, scratch_operands = 1 : i64, tpu.core_type = #tpu.core_type<tc>} {
    %c0 = arith.constant 0 : index
    %c0_0 = arith.constant 0 : index
    %0 = vector.load %arg0[%c0, %c0_0] : memref<16x2xi32, #tpu.memory_space<vmem>>, vector<16x1xi32>
    %c0_1 = arith.constant 0 : index
    %c1 = arith.constant 1 : index
    %1 = vector.load %arg0[%c0_1, %c1] : memref<16x2xi32, #tpu.memory_space<vmem>>, vector<16x1xi32>
    %2 = tpu.iota {dimensions = array<i32: 1>} : vector<16x128xi32>
    %3 = vector.broadcast %0 : vector<16x1xi32> to vector<16x128xi32>
    %4 = arith.cmpi eq, %2, %3 : vector<16x128xi32>
    %5 = vector.broadcast %1 : vector<16x1xi32> to vector<16x128xi32>
    %6 = arith.cmpi eq, %2, %5 : vector<16x128xi32>
    %7 = arith.ori %4, %6 : vector<16x128xi1>
    %8 = arith.extui %7 : vector<16x128xi1> to vector<16x128xi32>
    %9 = arith.sitofp %8 : vector<16x128xi32> to vector<16x128xf32>
    %c0_2 = arith.constant 0 : index
    %c0_3 = arith.constant 0 : index
    %10 = vector.load %arg1[%c0_2, %c0_3] : memref<128x32xf32, #tpu.memory_space<vmem>>, vector<128x32xf32>
    %cst = arith.constant dense<0.000000e+00> : vector<16x32xf32>
    %11 = tpu.matmul %9, %10, %cst {dimension_numbers = #tpu.dot_dimension_numbers<[1], [0], [0], [1], [0, 0, 1, 1], [], []>} : vector<16x128xf32>, vector<128x32xf32>, vector<16x32xf32> -> vector<16x32xf32>
    %12 = tpu.iota {dimensions = array<i32: 0>} : vector<16x16xi32>
    %13 = tpu.iota {dimensions = array<i32: 1>} : vector<16x16xi32>
    %c0_i32 = arith.constant 0 : i32
    %14 = vector.broadcast %c0_i32 : i32 to vector<16x16xi32>
    %15 = arith.cmpi sge, %12, %14 : vector<16x16xi32>
    %c8_i32 = arith.constant 8 : i32
    %16 = vector.broadcast %c8_i32 : i32 to vector<16x16xi32>
    %17 = arith.cmpi slt, %12, %16 : vector<16x16xi32>
    %18 = arith.andi %15, %17 : vector<16x16xi1>
    %c0_i32_4 = arith.constant 0 : i32
    %19 = vector.broadcast %c0_i32_4 : i32 to vector<16x16xi32>
    %20 = arith.cmpi sge, %13, %19 : vector<16x16xi32>
    %21 = arith.andi %18, %20 : vector<16x16xi1>
    %c8_i32_5 = arith.constant 8 : i32
    %22 = vector.broadcast %c8_i32_5 : i32 to vector<16x16xi32>
    %23 = arith.cmpi slt, %13, %22 : vector<16x16xi32>
    %24 = arith.andi %21, %23 : vector<16x16xi1>
    %c8_i32_6 = arith.constant 8 : i32
    %25 = vector.broadcast %c8_i32_6 : i32 to vector<16x16xi32>
    %26 = arith.cmpi sge, %12, %25 : vector<16x16xi32>
    %c16_i32 = arith.constant 16 : i32
    %27 = vector.broadcast %c16_i32 : i32 to vector<16x16xi32>
    %28 = arith.cmpi slt, %12, %27 : vector<16x16xi32>
    %29 = arith.andi %26, %28 : vector<16x16xi1>
    %c8_i32_7 = arith.constant 8 : i32
    %30 = vector.broadcast %c8_i32_7 : i32 to vector<16x16xi32>
    %31 = arith.cmpi sge, %13, %30 : vector<16x16xi32>
    %32 = arith.andi %29, %31 : vector<16x16xi1>
    %c16_i32_8 = arith.constant 16 : i32
    %33 = vector.broadcast %c16_i32_8 : i32 to vector<16x16xi32>
    %34 = arith.cmpi slt, %13, %33 : vector<16x16xi32>
    %35 = arith.andi %32, %34 : vector<16x16xi1>
    %36 = arith.ori %24, %35 : vector<16x16xi1>
    %37 = arith.cmpi sge, %12, %13 : vector<16x16xi32>
    %38 = arith.andi %36, %37 : vector<16x16xi1>
    %c0_i32_9 = arith.constant 0 : i32
    %39 = vector.broadcast %c0_i32_9 : i32 to vector<16x1xi32>
    %40 = arith.cmpi ne, %0, %39 : vector<16x1xi32>
    %41 = vector.broadcast %40 : vector<16x1xi1> to vector<16x16xi1>
    %42 = arith.andi %38, %41 : vector<16x16xi1>
    %c0_10 = arith.constant 0 : index
    %c0_11 = arith.constant 0 : index
    %c0_12 = arith.constant 0 : index
    %43 = vector.load %arg2[%c0_10, %c0_11, %c0_12] : memref<2x64x1920xf32, #tpu.memory_space<vmem>>, vector<1x32x1536xf32>
    %44 = vector.shape_cast %43 : vector<1x32x1536xf32> to vector<32x1536xf32>
    %cst_13 = arith.constant dense<0.000000e+00> : vector<16x1536xf32>
    %45 = tpu.matmul %11, %44, %cst_13 {dimension_numbers = #tpu.dot_dimension_numbers<[1], [0], [0], [1], [0, 0, 1, 1], [], []>} : vector<16x32xf32>, vector<32x1536xf32>, vector<16x1536xf32> -> vector<16x1536xf32>
    %c0_14 = arith.constant 0 : index
    %c0_15 = arith.constant 0 : index
    %c0_16 = arith.constant 0 : index
    %46 = vector.load %arg3[%c0_14, %c0_15, %c0_16] : memref<2x8x1920xf32, #tpu.memory_space<vmem>>, vector<1x1x1536xf32>
    %47 = vector.shape_cast %46 : vector<1x1x1536xf32> to vector<1x1536xf32>
    %48 = vector.broadcast %47 : vector<1x1536xf32> to vector<16x1536xf32>
    %49 = arith.addf %45, %48 : vector<16x1536xf32>
    %50 = vector.extract_strided_slice %49 {offsets = [0, 0], sizes = [16, 8], strides = [1, 1]} : vector<16x1536xf32> to vector<16x8xf32>
    %51 = vector.extract_strided_slice %49 {offsets = [0, 512], sizes = [16, 8], strides = [1, 1]} : vector<16x1536xf32> to vector<16x8xf32>
    %52 = vector.extract_strided_slice %49 {offsets = [0, 1024], sizes = [16, 8], strides = [1, 1]} : vector<16x1536xf32> to vector<16x8xf32>
    %cst_17 = arith.constant dense<0.000000e+00> : vector<16x16xf32>
    %53 = tpu.matmul %50, %51, %cst_17 {dimension_numbers = #tpu.dot_dimension_numbers<[1], [1], [0], [0], [0, 0, 1, 0], [], []>} : vector<16x8xf32>, vector<16x8xf32>, vector<16x16xf32> -> vector<16x16xf32>
    %cst_18 = arith.constant 0.353553385 : f32
    %54 = vector.broadcast %cst_18 : f32 to vector<16x16xf32>
    %55 = arith.mulf %53, %54 : vector<16x16xf32>
    %cst_19 = arith.constant -1.000000e+09 : f32
    %56 = vector.broadcast %cst_19 : f32 to vector<16x16xf32>
    %57 = arith.select %42, %55, %56 : vector<16x16xi1>, vector<16x16xf32>
    %cst_20 = arith.constant -1.000000e+30 : f32
    %58 = vector.broadcast %cst_20 : f32 to vector<16x16xf32>
    %59 = arith.select %36, %57, %58 : vector<16x16xi1>, vector<16x16xf32>
    %cst_21 = arith.constant dense<0xFF800000> : vector<16xf32>
    %60 = vector.multi_reduction <maximumf>, %59, %cst_21 [1] : vector<16x16xf32> to vector<16xf32>
    %61 = vector.shape_cast %60 : vector<16xf32> to vector<16x1xf32>
    %62 = vector.broadcast %61 : vector<16x1xf32> to vector<16x16xf32>
    %63 = arith.subf %59, %62 : vector<16x16xf32>
    %64 = math.exp %63 : vector<16x16xf32>
    %cst_22 = arith.constant dense<0.000000e+00> : vector<16xf32>
    %65 = vector.multi_reduction <add>, %64, %cst_22 [1] : vector<16x16xf32> to vector<16xf32>
    %66 = vector.shape_cast %65 : vector<16xf32> to vector<16x1xf32>
    %67 = tpu.reciprocal %66 {approx = true} : vector<16x1xf32> -> vector<16x1xf32>
    %68 = vector.broadcast %67 : vector<16x1xf32> to vector<16x16xf32>
    %69 = arith.mulf %64, %68 : vector<16x16xf32>
    %cst_23 = arith.constant dense<0.000000e+00> : vector<16x8xf32>
    %70 = tpu.matmul %69, %52, %cst_23 {dimension_numbers = #tpu.dot_dimension_numbers<[1], [0], [0], [1], [0, 0, 1, 1], [], []>} : vector<16x16xf32>, vector<16x8xf32>, vector<16x8xf32> -> vector<16x8xf32>
    %c0_24 = arith.constant 0 : index
    %c0_25 = arith.constant 0 : index
    %71 = vector.load %arg6[%c0_24, %c0_25] : memref<16x32xf32, #tpu.memory_space<vmem>>, vector<16x8xf32>
    tpu.vector_store %arg6[%c0_24, %c0_25], %70 {strides = array<i32>} : memref<16x32xf32, #tpu.memory_space<vmem>>, vector<16x8xf32>,
    %72 = vector.extract_strided_slice %49 {offsets = [0, 128], sizes = [16, 8], strides = [1, 1]} : vector<16x1536xf32> to vector<16x8xf32>
    %73 = vector.extract_strided_slice %49 {offsets = [0, 640], sizes = [16, 8], strides = [1, 1]} : vector<16x1536xf32> to vector<16x8xf32>
    %74 = vector.extract_strided_slice %49 {offsets = [0, 1152], sizes = [16, 8], strides = [1, 1]} : vector<16x1536xf32> to vector<16x8xf32>
    %cst_26 = arith.constant dense<0.000000e+00> : vector<16x16xf32>
    %75 = tpu.matmul %72, %73, %cst_26 {dimension_numbers = #tpu.dot_dimension_numbers<[1], [1], [0], [0], [0, 0, 1, 0], [], []>} : vector<16x8xf32>, vector<16x8xf32>, vector<16x16xf32> -> vector<16x16xf32>
    %cst_27 = arith.constant 0.353553385 : f32
    %76 = vector.broadcast %cst_27 : f32 to vector<16x16xf32>
    %77 = arith.mulf %75, %76 : vector<16x16xf32>
    %cst_28 = arith.constant -1.000000e+09 : f32
    %78 = vector.broadcast %cst_28 : f32 to vector<16x16xf32>
    %79 = arith.select %42, %77, %78 : vector<16x16xi1>, vector<16x16xf32>
    %cst_29 = arith.constant -1.000000e+30 : f32
    %80 = vector.broadcast %cst_29 : f32 to vector<16x16xf32>
    %81 = arith.select %36, %79, %80 : vector<16x16xi1>, vector<16x16xf32>
    %cst_30 = arith.constant dense<0xFF800000> : vector<16xf32>
    %82 = vector.multi_reduction <maximumf>, %81, %cst_30 [1] : vector<16x16xf32> to vector<16xf32>
    %83 = vector.shape_cast %82 : vector<16xf32> to vector<16x1xf32>
    %84 = vector.broadcast %83 : vector<16x1xf32> to vector<16x16xf32>
    %85 = arith.subf %81, %84 : vector<16x16xf32>
    %86 = math.exp %85 : vector<16x16xf32>
    %cst_31 = arith.constant dense<0.000000e+00> : vector<16xf32>
    %87 = vector.multi_reduction <add>, %86, %cst_31 [1] : vector<16x16xf32> to vector<16xf32>
    %88 = vector.shape_cast %87 : vector<16xf32> to vector<16x1xf32>
    %89 = tpu.reciprocal %88 {approx = true} : vector<16x1xf32> -> vector<16x1xf32>
    %90 = vector.broadcast %89 : vector<16x1xf32> to vector<16x16xf32>
    %91 = arith.mulf %86, %90 : vector<16x16xf32>
    %cst_32 = arith.constant dense<0.000000e+00> : vector<16x8xf32>
    %92 = tpu.matmul %91, %74, %cst_32 {dimension_numbers = #tpu.dot_dimension_numbers<[1], [0], [0], [1], [0, 0, 1, 1], [], []>} : vector<16x16xf32>, vector<16x8xf32>, vector<16x8xf32> -> vector<16x8xf32>
    %c0_33 = arith.constant 0 : index
    %c8 = arith.constant 8 : index
    %93 = vector.load %arg6[%c0_33, %c8] : memref<16x32xf32, #tpu.memory_space<vmem>>, vector<16x8xf32>
    tpu.vector_store %arg6[%c0_33, %c8], %92 {strides = array<i32>} : memref<16x32xf32, #tpu.memory_space<vmem>>, vector<16x8xf32>,
    %94 = vector.extract_strided_slice %49 {offsets = [0, 256], sizes = [16, 8], strides = [1, 1]} : vector<16x1536xf32> to vector<16x8xf32>
    %95 = vector.extract_strided_slice %49 {offsets = [0, 768], sizes = [16, 8], strides = [1, 1]} : vector<16x1536xf32> to vector<16x8xf32>
    %96 = vector.extract_strided_slice %49 {offsets = [0, 1280], sizes = [16, 8], strides = [1, 1]} : vector<16x1536xf32> to vector<16x8xf32>
    %cst_34 = arith.constant dense<0.000000e+00> : vector<16x16xf32>
    %97 = tpu.matmul %94, %95, %cst_34 {dimension_numbers = #tpu.dot_dimension_numbers<[1], [1], [0], [0], [0, 0, 1, 0], [], []>} : vector<16x8xf32>, vector<16x8xf32>, vector<16x16xf32> -> vector<16x16xf32>
    %cst_35 = arith.constant 0.353553385 : f32
    %98 = vector.broadcast %cst_35 : f32 to vector<16x16xf32>
    %99 = arith.mulf %97, %98 : vector<16x16xf32>
    %cst_36 = arith.constant -1.000000e+09 : f32
    %100 = vector.broadcast %cst_36 : f32 to vector<16x16xf32>
    %101 = arith.select %42, %99, %100 : vector<16x16xi1>, vector<16x16xf32>
    %cst_37 = arith.constant -1.000000e+30 : f32
    %102 = vector.broadcast %cst_37 : f32 to vector<16x16xf32>
    %103 = arith.select %36, %101, %102 : vector<16x16xi1>, vector<16x16xf32>
    %cst_38 = arith.constant dense<0xFF800000> : vector<16xf32>
    %104 = vector.multi_reduction <maximumf>, %103, %cst_38 [1] : vector<16x16xf32> to vector<16xf32>
    %105 = vector.shape_cast %104 : vector<16xf32> to vector<16x1xf32>
    %106 = vector.broadcast %105 : vector<16x1xf32> to vector<16x16xf32>
    %107 = arith.subf %103, %106 : vector<16x16xf32>
    %108 = math.exp %107 : vector<16x16xf32>
    %cst_39 = arith.constant dense<0.000000e+00> : vector<16xf32>
    %109 = vector.multi_reduction <add>, %108, %cst_39 [1] : vector<16x16xf32> to vector<16xf32>
    %110 = vector.shape_cast %109 : vector<16xf32> to vector<16x1xf32>
    %111 = tpu.reciprocal %110 {approx = true} : vector<16x1xf32> -> vector<16x1xf32>
    %112 = vector.broadcast %111 : vector<16x1xf32> to vector<16x16xf32>
    %113 = arith.mulf %108, %112 : vector<16x16xf32>
    %cst_40 = arith.constant dense<0.000000e+00> : vector<16x8xf32>
    %114 = tpu.matmul %113, %96, %cst_40 {dimension_numbers = #tpu.dot_dimension_numbers<[1], [0], [0], [1], [0, 0, 1, 1], [], []>} : vector<16x16xf32>, vector<16x8xf32>, vector<16x8xf32> -> vector<16x8xf32>
    %c0_41 = arith.constant 0 : index
    %c16 = arith.constant 16 : index
    %115 = vector.load %arg6[%c0_41, %c16] : memref<16x32xf32, #tpu.memory_space<vmem>>, vector<16x8xf32>
    tpu.vector_store %arg6[%c0_41, %c16], %114 {strides = array<i32>} : memref<16x32xf32, #tpu.memory_space<vmem>>, vector<16x8xf32>,
    %116 = vector.extract_strided_slice %49 {offsets = [0, 384], sizes = [16, 8], strides = [1, 1]} : vector<16x1536xf32> to vector<16x8xf32>
    %117 = vector.extract_strided_slice %49 {offsets = [0, 896], sizes = [16, 8], strides = [1, 1]} : vector<16x1536xf32> to vector<16x8xf32>
    %118 = vector.extract_strided_slice %49 {offsets = [0, 1408], sizes = [16, 8], strides = [1, 1]} : vector<16x1536xf32> to vector<16x8xf32>
    %cst_42 = arith.constant dense<0.000000e+00> : vector<16x16xf32>
    %119 = tpu.matmul %116, %117, %cst_42 {dimension_numbers = #tpu.dot_dimension_numbers<[1], [1], [0], [0], [0, 0, 1, 0], [], []>} : vector<16x8xf32>, vector<16x8xf32>, vector<16x16xf32> -> vector<16x16xf32>
    %cst_43 = arith.constant 0.353553385 : f32
    %120 = vector.broadcast %cst_43 : f32 to vector<16x16xf32>
    %121 = arith.mulf %119, %120 : vector<16x16xf32>
    %cst_44 = arith.constant -1.000000e+09 : f32
    %122 = vector.broadcast %cst_44 : f32 to vector<16x16xf32>
    %123 = arith.select %42, %121, %122 : vector<16x16xi1>, vector<16x16xf32>
    %cst_45 = arith.constant -1.000000e+30 : f32
    %124 = vector.broadcast %cst_45 : f32 to vector<16x16xf32>
    %125 = arith.select %36, %123, %124 : vector<16x16xi1>, vector<16x16xf32>
    %cst_46 = arith.constant dense<0xFF800000> : vector<16xf32>
    %126 = vector.multi_reduction <maximumf>, %125, %cst_46 [1] : vector<16x16xf32> to vector<16xf32>
    %127 = vector.shape_cast %126 : vector<16xf32> to vector<16x1xf32>
    %128 = vector.broadcast %127 : vector<16x1xf32> to vector<16x16xf32>
    %129 = arith.subf %125, %128 : vector<16x16xf32>
    %130 = math.exp %129 : vector<16x16xf32>
    %cst_47 = arith.constant dense<0.000000e+00> : vector<16xf32>
    %131 = vector.multi_reduction <add>, %130, %cst_47 [1] : vector<16x16xf32> to vector<16xf32>
    %132 = vector.shape_cast %131 : vector<16xf32> to vector<16x1xf32>
    %133 = tpu.reciprocal %132 {approx = true} : vector<16x1xf32> -> vector<16x1xf32>
    %134 = vector.broadcast %133 : vector<16x1xf32> to vector<16x16xf32>
    %135 = arith.mulf %130, %134 : vector<16x16xf32>
    %cst_48 = arith.constant dense<0.000000e+00> : vector<16x8xf32>
    %136 = tpu.matmul %135, %118, %cst_48 {dimension_numbers = #tpu.dot_dimension_numbers<[1], [0], [0], [1], [0, 0, 1, 1], [], []>} : vector<16x16xf32>, vector<16x8xf32>, vector<16x8xf32> -> vector<16x8xf32>
    %c0_49 = arith.constant 0 : index
    %c24 = arith.constant 24 : index
    %137 = vector.load %arg6[%c0_49, %c24] : memref<16x32xf32, #tpu.memory_space<vmem>>, vector<16x8xf32>
    tpu.vector_store %arg6[%c0_49, %c24], %136 {strides = array<i32>} : memref<16x32xf32, #tpu.memory_space<vmem>>, vector<16x8xf32>,
    %c0_50 = arith.constant 0 : index
    %c0_51 = arith.constant 0 : index
    %138 = vector.load %arg6[%c0_50, %c0_51] : memref<16x32xf32, #tpu.memory_space<vmem>>, vector<16x32xf32>
    %c0_52 = arith.constant 0 : index
    %c0_53 = arith.constant 0 : index
    %c1536 = arith.constant 1536 : index
    %139 = vector.load %arg2[%c0_52, %c0_53, %c1536] : memref<2x64x1920xf32, #tpu.memory_space<vmem>>, vector<1x32x32xf32>
    %140 = vector.shape_cast %139 : vector<1x32x32xf32> to vector<32x32xf32>
    %cst_54 = arith.constant dense<0.000000e+00> : vector<16x32xf32>
    %141 = tpu.matmul %138, %140, %cst_54 {dimension_numbers = #tpu.dot_dimension_numbers<[1], [0], [0], [1], [0, 0, 1, 1], [], []>} : vector<16x32xf32>, vector<32x32xf32>, vector<16x32xf32> -> vector<16x32xf32>
    %c0_55 = arith.constant 0 : index
    %c0_56 = arith.constant 0 : index
    %c1536_57 = arith.constant 1536 : index
    %142 = vector.load %arg3[%c0_55, %c0_56, %c1536_57] : memref<2x8x1920xf32, #tpu.memory_space<vmem>>, vector<1x1x32xf32>
    %143 = vector.shape_cast %142 : vector<1x1x32xf32> to vector<1x32xf32>
    %144 = vector.broadcast %143 : vector<1x32xf32> to vector<16x32xf32>
    %145 = arith.addf %141, %144 : vector<16x32xf32>
    %146 = arith.addf %11, %145 : vector<16x32xf32>
    %c0_58 = arith.constant 0 : index
    %c1_59 = arith.constant 1 : index
    %c0_60 = arith.constant 0 : index
    %147 = vector.load %arg3[%c0_58, %c1_59, %c0_60] : memref<2x8x1920xf32, #tpu.memory_space<vmem>>, vector<1x1x32xf32>
    %148 = vector.shape_cast %147 : vector<1x1x32xf32> to vector<1x32xf32>
    %c0_61 = arith.constant 0 : index
    %c2 = arith.constant 2 : index
    %c0_62 = arith.constant 0 : index
    %149 = vector.load %arg3[%c0_61, %c2, %c0_62] : memref<2x8x1920xf32, #tpu.memory_space<vmem>>, vector<1x1x32xf32>
    %150 = vector.shape_cast %149 : vector<1x1x32xf32> to vector<1x32xf32>
    %cst_63 = arith.constant dense<0.000000e+00> : vector<16xf32>
    %151 = vector.multi_reduction <add>, %146, %cst_63 [1] : vector<16x32xf32> to vector<16xf32>
    %152 = vector.shape_cast %151 : vector<16xf32> to vector<16x1xf32>
    %cst_64 = arith.constant 3.200000e+01 : f32
    %153 = vector.broadcast %cst_64 : f32 to vector<16x1xf32>
    %154 = arith.divf %152, %153 : vector<16x1xf32>
    %155 = vector.broadcast %154 : vector<16x1xf32> to vector<16x32xf32>
    %156 = arith.subf %146, %155 : vector<16x32xf32>
    %157 = arith.mulf %156, %156 : vector<16x32xf32>
    %cst_65 = arith.constant dense<0.000000e+00> : vector<16xf32>
    %158 = vector.multi_reduction <add>, %157, %cst_65 [1] : vector<16x32xf32> to vector<16xf32>
    %159 = vector.shape_cast %158 : vector<16xf32> to vector<16x1xf32>
    %cst_66 = arith.constant 3.200000e+01 : f32
    %160 = vector.broadcast %cst_66 : f32 to vector<16x1xf32>
    %161 = arith.divf %159, %160 : vector<16x1xf32>
    %cst_67 = arith.constant 9.99999974E-6 : f32
    %162 = vector.broadcast %cst_67 : f32 to vector<16x1xf32>
    %163 = arith.addf %161, %162 : vector<16x1xf32>
    %164 = math.rsqrt %163 : vector<16x1xf32>
    %165 = vector.broadcast %164 : vector<16x1xf32> to vector<16x32xf32>
    %166 = arith.mulf %156, %165 : vector<16x32xf32>
    %167 = vector.broadcast %148 : vector<1x32xf32> to vector<16x32xf32>
    %168 = arith.mulf %166, %167 : vector<16x32xf32>
    %169 = vector.broadcast %150 : vector<1x32xf32> to vector<16x32xf32>
    %170 = arith.addf %168, %169 : vector<16x32xf32>
    %c0_68 = arith.constant 0 : index
    %c0_69 = arith.constant 0 : index
    %c1664 = arith.constant 1664 : index
    %171 = vector.load %arg2[%c0_68, %c0_69, %c1664] : memref<2x64x1920xf32, #tpu.memory_space<vmem>>, vector<1x32x64xf32>
    %172 = vector.shape_cast %171 : vector<1x32x64xf32> to vector<32x64xf32>
    %cst_70 = arith.constant dense<0.000000e+00> : vector<16x64xf32>
    %173 = tpu.matmul %170, %172, %cst_70 {dimension_numbers = #tpu.dot_dimension_numbers<[1], [0], [0], [1], [0, 0, 1, 1], [], []>} : vector<16x32xf32>, vector<32x64xf32>, vector<16x64xf32> -> vector<16x64xf32>
    %c0_71 = arith.constant 0 : index
    %c0_72 = arith.constant 0 : index
    %c1664_73 = arith.constant 1664 : index
    %174 = vector.load %arg3[%c0_71, %c0_72, %c1664_73] : memref<2x8x1920xf32, #tpu.memory_space<vmem>>, vector<1x1x64xf32>
    %175 = vector.shape_cast %174 : vector<1x1x64xf32> to vector<1x64xf32>
    %176 = vector.broadcast %175 : vector<1x64xf32> to vector<16x64xf32>
    %177 = arith.addf %173, %176 : vector<16x64xf32>
    %cst_74 = arith.constant 0.000000e+00 : f32
    %178 = vector.broadcast %cst_74 : f32 to vector<16x64xf32>
    %179 = arith.maximumf %177, %178 : vector<16x64xf32>
    %c0_75 = arith.constant 0 : index
    %c0_76 = arith.constant 0 : index
    %c1792 = arith.constant 1792 : index
    %180 = vector.load %arg2[%c0_75, %c0_76, %c1792] : memref<2x64x1920xf32, #tpu.memory_space<vmem>>, vector<1x64x32xf32>
    %181 = vector.shape_cast %180 : vector<1x64x32xf32> to vector<64x32xf32>
    %cst_77 = arith.constant dense<0.000000e+00> : vector<16x32xf32>
    %182 = tpu.matmul %179, %181, %cst_77 {dimension_numbers = #tpu.dot_dimension_numbers<[1], [0], [0], [1], [0, 0, 1, 1], [], []>} : vector<16x64xf32>, vector<64x32xf32>, vector<16x32xf32> -> vector<16x32xf32>
    %c0_78 = arith.constant 0 : index
    %c0_79 = arith.constant 0 : index
    %c1792_80 = arith.constant 1792 : index
    %183 = vector.load %arg3[%c0_78, %c0_79, %c1792_80] : memref<2x8x1920xf32, #tpu.memory_space<vmem>>, vector<1x1x32xf32>
    %184 = vector.shape_cast %183 : vector<1x1x32xf32> to vector<1x32xf32>
    %185 = vector.broadcast %184 : vector<1x32xf32> to vector<16x32xf32>
    %186 = arith.addf %182, %185 : vector<16x32xf32>
    %187 = arith.addf %170, %186 : vector<16x32xf32>
    %c0_81 = arith.constant 0 : index
    %c3 = arith.constant 3 : index
    %c0_82 = arith.constant 0 : index
    %188 = vector.load %arg3[%c0_81, %c3, %c0_82] : memref<2x8x1920xf32, #tpu.memory_space<vmem>>, vector<1x1x32xf32>
    %189 = vector.shape_cast %188 : vector<1x1x32xf32> to vector<1x32xf32>
    %c0_83 = arith.constant 0 : index
    %c4 = arith.constant 4 : index
    %c0_84 = arith.constant 0 : index
    %190 = vector.load %arg3[%c0_83, %c4, %c0_84] : memref<2x8x1920xf32, #tpu.memory_space<vmem>>, vector<1x1x32xf32>
    %191 = vector.shape_cast %190 : vector<1x1x32xf32> to vector<1x32xf32>
    %cst_85 = arith.constant dense<0.000000e+00> : vector<16xf32>
    %192 = vector.multi_reduction <add>, %187, %cst_85 [1] : vector<16x32xf32> to vector<16xf32>
    %193 = vector.shape_cast %192 : vector<16xf32> to vector<16x1xf32>
    %cst_86 = arith.constant 3.200000e+01 : f32
    %194 = vector.broadcast %cst_86 : f32 to vector<16x1xf32>
    %195 = arith.divf %193, %194 : vector<16x1xf32>
    %196 = vector.broadcast %195 : vector<16x1xf32> to vector<16x32xf32>
    %197 = arith.subf %187, %196 : vector<16x32xf32>
    %198 = arith.mulf %197, %197 : vector<16x32xf32>
    %cst_87 = arith.constant dense<0.000000e+00> : vector<16xf32>
    %199 = vector.multi_reduction <add>, %198, %cst_87 [1] : vector<16x32xf32> to vector<16xf32>
    %200 = vector.shape_cast %199 : vector<16xf32> to vector<16x1xf32>
    %cst_88 = arith.constant 3.200000e+01 : f32
    %201 = vector.broadcast %cst_88 : f32 to vector<16x1xf32>
    %202 = arith.divf %200, %201 : vector<16x1xf32>
    %cst_89 = arith.constant 9.99999974E-6 : f32
    %203 = vector.broadcast %cst_89 : f32 to vector<16x1xf32>
    %204 = arith.addf %202, %203 : vector<16x1xf32>
    %205 = math.rsqrt %204 : vector<16x1xf32>
    %206 = vector.broadcast %205 : vector<16x1xf32> to vector<16x32xf32>
    %207 = arith.mulf %197, %206 : vector<16x32xf32>
    %208 = vector.broadcast %189 : vector<1x32xf32> to vector<16x32xf32>
    %209 = arith.mulf %207, %208 : vector<16x32xf32>
    %210 = vector.broadcast %191 : vector<1x32xf32> to vector<16x32xf32>
    %211 = arith.addf %209, %210 : vector<16x32xf32>
    %c1_90 = arith.constant 1 : index
    %c0_91 = arith.constant 0 : index
    %c0_92 = arith.constant 0 : index
    %212 = vector.load %arg2[%c1_90, %c0_91, %c0_92] : memref<2x64x1920xf32, #tpu.memory_space<vmem>>, vector<1x32x1536xf32>
    %213 = vector.shape_cast %212 : vector<1x32x1536xf32> to vector<32x1536xf32>
    %cst_93 = arith.constant dense<0.000000e+00> : vector<16x1536xf32>
    %214 = tpu.matmul %211, %213, %cst_93 {dimension_numbers = #tpu.dot_dimension_numbers<[1], [0], [0], [1], [0, 0, 1, 1], [], []>} : vector<16x32xf32>, vector<32x1536xf32>, vector<16x1536xf32> -> vector<16x1536xf32>
    %c1_94 = arith.constant 1 : index
    %c0_95 = arith.constant 0 : index
    %c0_96 = arith.constant 0 : index
    %215 = vector.load %arg3[%c1_94, %c0_95, %c0_96] : memref<2x8x1920xf32, #tpu.memory_space<vmem>>, vector<1x1x1536xf32>
    %216 = vector.shape_cast %215 : vector<1x1x1536xf32> to vector<1x1536xf32>
    %217 = vector.broadcast %216 : vector<1x1536xf32> to vector<16x1536xf32>
    %218 = arith.addf %214, %217 : vector<16x1536xf32>
    %219 = vector.extract_strided_slice %218 {offsets = [0, 0], sizes = [16, 8], strides = [1, 1]} : vector<16x1536xf32> to vector<16x8xf32>
    %220 = vector.extract_strided_slice %218 {offsets = [0, 512], sizes = [16, 8], strides = [1, 1]} : vector<16x1536xf32> to vector<16x8xf32>
    %221 = vector.extract_strided_slice %218 {offsets = [0, 1024], sizes = [16, 8], strides = [1, 1]} : vector<16x1536xf32> to vector<16x8xf32>
    %cst_97 = arith.constant dense<0.000000e+00> : vector<16x16xf32>
    %222 = tpu.matmul %219, %220, %cst_97 {dimension_numbers = #tpu.dot_dimension_numbers<[1], [1], [0], [0], [0, 0, 1, 0], [], []>} : vector<16x8xf32>, vector<16x8xf32>, vector<16x16xf32> -> vector<16x16xf32>
    %cst_98 = arith.constant 0.353553385 : f32
    %223 = vector.broadcast %cst_98 : f32 to vector<16x16xf32>
    %224 = arith.mulf %222, %223 : vector<16x16xf32>
    %cst_99 = arith.constant -1.000000e+09 : f32
    %225 = vector.broadcast %cst_99 : f32 to vector<16x16xf32>
    %226 = arith.select %42, %224, %225 : vector<16x16xi1>, vector<16x16xf32>
    %cst_100 = arith.constant -1.000000e+30 : f32
    %227 = vector.broadcast %cst_100 : f32 to vector<16x16xf32>
    %228 = arith.select %36, %226, %227 : vector<16x16xi1>, vector<16x16xf32>
    %cst_101 = arith.constant dense<0xFF800000> : vector<16xf32>
    %229 = vector.multi_reduction <maximumf>, %228, %cst_101 [1] : vector<16x16xf32> to vector<16xf32>
    %230 = vector.shape_cast %229 : vector<16xf32> to vector<16x1xf32>
    %231 = vector.broadcast %230 : vector<16x1xf32> to vector<16x16xf32>
    %232 = arith.subf %228, %231 : vector<16x16xf32>
    %233 = math.exp %232 : vector<16x16xf32>
    %cst_102 = arith.constant dense<0.000000e+00> : vector<16xf32>
    %234 = vector.multi_reduction <add>, %233, %cst_102 [1] : vector<16x16xf32> to vector<16xf32>
    %235 = vector.shape_cast %234 : vector<16xf32> to vector<16x1xf32>
    %236 = tpu.reciprocal %235 {approx = true} : vector<16x1xf32> -> vector<16x1xf32>
    %237 = vector.broadcast %236 : vector<16x1xf32> to vector<16x16xf32>
    %238 = arith.mulf %233, %237 : vector<16x16xf32>
    %cst_103 = arith.constant dense<0.000000e+00> : vector<16x8xf32>
    %239 = tpu.matmul %238, %221, %cst_103 {dimension_numbers = #tpu.dot_dimension_numbers<[1], [0], [0], [1], [0, 0, 1, 1], [], []>} : vector<16x16xf32>, vector<16x8xf32>, vector<16x8xf32> -> vector<16x8xf32>
    %c0_104 = arith.constant 0 : index
    %c0_105 = arith.constant 0 : index
    %240 = vector.load %arg6[%c0_104, %c0_105] : memref<16x32xf32, #tpu.memory_space<vmem>>, vector<16x8xf32>
    tpu.vector_store %arg6[%c0_104, %c0_105], %239 {strides = array<i32>} : memref<16x32xf32, #tpu.memory_space<vmem>>, vector<16x8xf32>,
    %241 = vector.extract_strided_slice %218 {offsets = [0, 128], sizes = [16, 8], strides = [1, 1]} : vector<16x1536xf32> to vector<16x8xf32>
    %242 = vector.extract_strided_slice %218 {offsets = [0, 640], sizes = [16, 8], strides = [1, 1]} : vector<16x1536xf32> to vector<16x8xf32>
    %243 = vector.extract_strided_slice %218 {offsets = [0, 1152], sizes = [16, 8], strides = [1, 1]} : vector<16x1536xf32> to vector<16x8xf32>
    %cst_106 = arith.constant dense<0.000000e+00> : vector<16x16xf32>
    %244 = tpu.matmul %241, %242, %cst_106 {dimension_numbers = #tpu.dot_dimension_numbers<[1], [1], [0], [0], [0, 0, 1, 0], [], []>} : vector<16x8xf32>, vector<16x8xf32>, vector<16x16xf32> -> vector<16x16xf32>
    %cst_107 = arith.constant 0.353553385 : f32
    %245 = vector.broadcast %cst_107 : f32 to vector<16x16xf32>
    %246 = arith.mulf %244, %245 : vector<16x16xf32>
    %cst_108 = arith.constant -1.000000e+09 : f32
    %247 = vector.broadcast %cst_108 : f32 to vector<16x16xf32>
    %248 = arith.select %42, %246, %247 : vector<16x16xi1>, vector<16x16xf32>
    %cst_109 = arith.constant -1.000000e+30 : f32
    %249 = vector.broadcast %cst_109 : f32 to vector<16x16xf32>
    %250 = arith.select %36, %248, %249 : vector<16x16xi1>, vector<16x16xf32>
    %cst_110 = arith.constant dense<0xFF800000> : vector<16xf32>
    %251 = vector.multi_reduction <maximumf>, %250, %cst_110 [1] : vector<16x16xf32> to vector<16xf32>
    %252 = vector.shape_cast %251 : vector<16xf32> to vector<16x1xf32>
    %253 = vector.broadcast %252 : vector<16x1xf32> to vector<16x16xf32>
    %254 = arith.subf %250, %253 : vector<16x16xf32>
    %255 = math.exp %254 : vector<16x16xf32>
    %cst_111 = arith.constant dense<0.000000e+00> : vector<16xf32>
    %256 = vector.multi_reduction <add>, %255, %cst_111 [1] : vector<16x16xf32> to vector<16xf32>
    %257 = vector.shape_cast %256 : vector<16xf32> to vector<16x1xf32>
    %258 = tpu.reciprocal %257 {approx = true} : vector<16x1xf32> -> vector<16x1xf32>
    %259 = vector.broadcast %258 : vector<16x1xf32> to vector<16x16xf32>
    %260 = arith.mulf %255, %259 : vector<16x16xf32>
    %cst_112 = arith.constant dense<0.000000e+00> : vector<16x8xf32>
    %261 = tpu.matmul %260, %243, %cst_112 {dimension_numbers = #tpu.dot_dimension_numbers<[1], [0], [0], [1], [0, 0, 1, 1], [], []>} : vector<16x16xf32>, vector<16x8xf32>, vector<16x8xf32> -> vector<16x8xf32>
    %c0_113 = arith.constant 0 : index
    %c8_114 = arith.constant 8 : index
    %262 = vector.load %arg6[%c0_113, %c8_114] : memref<16x32xf32, #tpu.memory_space<vmem>>, vector<16x8xf32>
    tpu.vector_store %arg6[%c0_113, %c8_114], %261 {strides = array<i32>} : memref<16x32xf32, #tpu.memory_space<vmem>>, vector<16x8xf32>,
    %263 = vector.extract_strided_slice %218 {offsets = [0, 256], sizes = [16, 8], strides = [1, 1]} : vector<16x1536xf32> to vector<16x8xf32>
    %264 = vector.extract_strided_slice %218 {offsets = [0, 768], sizes = [16, 8], strides = [1, 1]} : vector<16x1536xf32> to vector<16x8xf32>
    %265 = vector.extract_strided_slice %218 {offsets = [0, 1280], sizes = [16, 8], strides = [1, 1]} : vector<16x1536xf32> to vector<16x8xf32>
    %cst_115 = arith.constant dense<0.000000e+00> : vector<16x16xf32>
    %266 = tpu.matmul %263, %264, %cst_115 {dimension_numbers = #tpu.dot_dimension_numbers<[1], [1], [0], [0], [0, 0, 1, 0], [], []>} : vector<16x8xf32>, vector<16x8xf32>, vector<16x16xf32> -> vector<16x16xf32>
    %cst_116 = arith.constant 0.353553385 : f32
    %267 = vector.broadcast %cst_116 : f32 to vector<16x16xf32>
    %268 = arith.mulf %266, %267 : vector<16x16xf32>
    %cst_117 = arith.constant -1.000000e+09 : f32
    %269 = vector.broadcast %cst_117 : f32 to vector<16x16xf32>
    %270 = arith.select %42, %268, %269 : vector<16x16xi1>, vector<16x16xf32>
    %cst_118 = arith.constant -1.000000e+30 : f32
    %271 = vector.broadcast %cst_118 : f32 to vector<16x16xf32>
    %272 = arith.select %36, %270, %271 : vector<16x16xi1>, vector<16x16xf32>
    %cst_119 = arith.constant dense<0xFF800000> : vector<16xf32>
    %273 = vector.multi_reduction <maximumf>, %272, %cst_119 [1] : vector<16x16xf32> to vector<16xf32>
    %274 = vector.shape_cast %273 : vector<16xf32> to vector<16x1xf32>
    %275 = vector.broadcast %274 : vector<16x1xf32> to vector<16x16xf32>
    %276 = arith.subf %272, %275 : vector<16x16xf32>
    %277 = math.exp %276 : vector<16x16xf32>
    %cst_120 = arith.constant dense<0.000000e+00> : vector<16xf32>
    %278 = vector.multi_reduction <add>, %277, %cst_120 [1] : vector<16x16xf32> to vector<16xf32>
    %279 = vector.shape_cast %278 : vector<16xf32> to vector<16x1xf32>
    %280 = tpu.reciprocal %279 {approx = true} : vector<16x1xf32> -> vector<16x1xf32>
    %281 = vector.broadcast %280 : vector<16x1xf32> to vector<16x16xf32>
    %282 = arith.mulf %277, %281 : vector<16x16xf32>
    %cst_121 = arith.constant dense<0.000000e+00> : vector<16x8xf32>
    %283 = tpu.matmul %282, %265, %cst_121 {dimension_numbers = #tpu.dot_dimension_numbers<[1], [0], [0], [1], [0, 0, 1, 1], [], []>} : vector<16x16xf32>, vector<16x8xf32>, vector<16x8xf32> -> vector<16x8xf32>
    %c0_122 = arith.constant 0 : index
    %c16_123 = arith.constant 16 : index
    %284 = vector.load %arg6[%c0_122, %c16_123] : memref<16x32xf32, #tpu.memory_space<vmem>>, vector<16x8xf32>
    tpu.vector_store %arg6[%c0_122, %c16_123], %283 {strides = array<i32>} : memref<16x32xf32, #tpu.memory_space<vmem>>, vector<16x8xf32>,
    %285 = vector.extract_strided_slice %218 {offsets = [0, 384], sizes = [16, 8], strides = [1, 1]} : vector<16x1536xf32> to vector<16x8xf32>
    %286 = vector.extract_strided_slice %218 {offsets = [0, 896], sizes = [16, 8], strides = [1, 1]} : vector<16x1536xf32> to vector<16x8xf32>
    %287 = vector.extract_strided_slice %218 {offsets = [0, 1408], sizes = [16, 8], strides = [1, 1]} : vector<16x1536xf32> to vector<16x8xf32>
    %cst_124 = arith.constant dense<0.000000e+00> : vector<16x16xf32>
    %288 = tpu.matmul %285, %286, %cst_124 {dimension_numbers = #tpu.dot_dimension_numbers<[1], [1], [0], [0], [0, 0, 1, 0], [], []>} : vector<16x8xf32>, vector<16x8xf32>, vector<16x16xf32> -> vector<16x16xf32>
    %cst_125 = arith.constant 0.353553385 : f32
    %289 = vector.broadcast %cst_125 : f32 to vector<16x16xf32>
    %290 = arith.mulf %288, %289 : vector<16x16xf32>
    %cst_126 = arith.constant -1.000000e+09 : f32
    %291 = vector.broadcast %cst_126 : f32 to vector<16x16xf32>
    %292 = arith.select %42, %290, %291 : vector<16x16xi1>, vector<16x16xf32>
    %cst_127 = arith.constant -1.000000e+30 : f32
    %293 = vector.broadcast %cst_127 : f32 to vector<16x16xf32>
    %294 = arith.select %36, %292, %293 : vector<16x16xi1>, vector<16x16xf32>
    %cst_128 = arith.constant dense<0xFF800000> : vector<16xf32>
    %295 = vector.multi_reduction <maximumf>, %294, %cst_128 [1] : vector<16x16xf32> to vector<16xf32>
    %296 = vector.shape_cast %295 : vector<16xf32> to vector<16x1xf32>
    %297 = vector.broadcast %296 : vector<16x1xf32> to vector<16x16xf32>
    %298 = arith.subf %294, %297 : vector<16x16xf32>
    %299 = math.exp %298 : vector<16x16xf32>
    %cst_129 = arith.constant dense<0.000000e+00> : vector<16xf32>
    %300 = vector.multi_reduction <add>, %299, %cst_129 [1] : vector<16x16xf32> to vector<16xf32>
    %301 = vector.shape_cast %300 : vector<16xf32> to vector<16x1xf32>
    %302 = tpu.reciprocal %301 {approx = true} : vector<16x1xf32> -> vector<16x1xf32>
    %303 = vector.broadcast %302 : vector<16x1xf32> to vector<16x16xf32>
    %304 = arith.mulf %299, %303 : vector<16x16xf32>
    %cst_130 = arith.constant dense<0.000000e+00> : vector<16x8xf32>
    %305 = tpu.matmul %304, %287, %cst_130 {dimension_numbers = #tpu.dot_dimension_numbers<[1], [0], [0], [1], [0, 0, 1, 1], [], []>} : vector<16x16xf32>, vector<16x8xf32>, vector<16x8xf32> -> vector<16x8xf32>
    %c0_131 = arith.constant 0 : index
    %c24_132 = arith.constant 24 : index
    %306 = vector.load %arg6[%c0_131, %c24_132] : memref<16x32xf32, #tpu.memory_space<vmem>>, vector<16x8xf32>
    tpu.vector_store %arg6[%c0_131, %c24_132], %305 {strides = array<i32>} : memref<16x32xf32, #tpu.memory_space<vmem>>, vector<16x8xf32>,
    %c0_133 = arith.constant 0 : index
    %c0_134 = arith.constant 0 : index
    %307 = vector.load %arg6[%c0_133, %c0_134] : memref<16x32xf32, #tpu.memory_space<vmem>>, vector<16x32xf32>
    %c1_135 = arith.constant 1 : index
    %c0_136 = arith.constant 0 : index
    %c1536_137 = arith.constant 1536 : index
    %308 = vector.load %arg2[%c1_135, %c0_136, %c1536_137] : memref<2x64x1920xf32, #tpu.memory_space<vmem>>, vector<1x32x32xf32>
    %309 = vector.shape_cast %308 : vector<1x32x32xf32> to vector<32x32xf32>
    %cst_138 = arith.constant dense<0.000000e+00> : vector<16x32xf32>
    %310 = tpu.matmul %307, %309, %cst_138 {dimension_numbers = #tpu.dot_dimension_numbers<[1], [0], [0], [1], [0, 0, 1, 1], [], []>} : vector<16x32xf32>, vector<32x32xf32>, vector<16x32xf32> -> vector<16x32xf32>
    %c1_139 = arith.constant 1 : index
    %c0_140 = arith.constant 0 : index
    %c1536_141 = arith.constant 1536 : index
    %311 = vector.load %arg3[%c1_139, %c0_140, %c1536_141] : memref<2x8x1920xf32, #tpu.memory_space<vmem>>, vector<1x1x32xf32>
    %312 = vector.shape_cast %311 : vector<1x1x32xf32> to vector<1x32xf32>
    %313 = vector.broadcast %312 : vector<1x32xf32> to vector<16x32xf32>
    %314 = arith.addf %310, %313 : vector<16x32xf32>
    %315 = arith.addf %211, %314 : vector<16x32xf32>
    %c1_142 = arith.constant 1 : index
    %c1_143 = arith.constant 1 : index
    %c0_144 = arith.constant 0 : index
    %316 = vector.load %arg3[%c1_142, %c1_143, %c0_144] : memref<2x8x1920xf32, #tpu.memory_space<vmem>>, vector<1x1x32xf32>
    %317 = vector.shape_cast %316 : vector<1x1x32xf32> to vector<1x32xf32>
    %c1_145 = arith.constant 1 : index
    %c2_146 = arith.constant 2 : index
    %c0_147 = arith.constant 0 : index
    %318 = vector.load %arg3[%c1_145, %c2_146, %c0_147] : memref<2x8x1920xf32, #tpu.memory_space<vmem>>, vector<1x1x32xf32>
    %319 = vector.shape_cast %318 : vector<1x1x32xf32> to vector<1x32xf32>
    %cst_148 = arith.constant dense<0.000000e+00> : vector<16xf32>
    %320 = vector.multi_reduction <add>, %315, %cst_148 [1] : vector<16x32xf32> to vector<16xf32>
    %321 = vector.shape_cast %320 : vector<16xf32> to vector<16x1xf32>
    %cst_149 = arith.constant 3.200000e+01 : f32
    %322 = vector.broadcast %cst_149 : f32 to vector<16x1xf32>
    %323 = arith.divf %321, %322 : vector<16x1xf32>
    %324 = vector.broadcast %323 : vector<16x1xf32> to vector<16x32xf32>
    %325 = arith.subf %315, %324 : vector<16x32xf32>
    %326 = arith.mulf %325, %325 : vector<16x32xf32>
    %cst_150 = arith.constant dense<0.000000e+00> : vector<16xf32>
    %327 = vector.multi_reduction <add>, %326, %cst_150 [1] : vector<16x32xf32> to vector<16xf32>
    %328 = vector.shape_cast %327 : vector<16xf32> to vector<16x1xf32>
    %cst_151 = arith.constant 3.200000e+01 : f32
    %329 = vector.broadcast %cst_151 : f32 to vector<16x1xf32>
    %330 = arith.divf %328, %329 : vector<16x1xf32>
    %cst_152 = arith.constant 9.99999974E-6 : f32
    %331 = vector.broadcast %cst_152 : f32 to vector<16x1xf32>
    %332 = arith.addf %330, %331 : vector<16x1xf32>
    %333 = math.rsqrt %332 : vector<16x1xf32>
    %334 = vector.broadcast %333 : vector<16x1xf32> to vector<16x32xf32>
    %335 = arith.mulf %325, %334 : vector<16x32xf32>
    %336 = vector.broadcast %317 : vector<1x32xf32> to vector<16x32xf32>
    %337 = arith.mulf %335, %336 : vector<16x32xf32>
    %338 = vector.broadcast %319 : vector<1x32xf32> to vector<16x32xf32>
    %339 = arith.addf %337, %338 : vector<16x32xf32>
    %c1_153 = arith.constant 1 : index
    %c0_154 = arith.constant 0 : index
    %c1664_155 = arith.constant 1664 : index
    %340 = vector.load %arg2[%c1_153, %c0_154, %c1664_155] : memref<2x64x1920xf32, #tpu.memory_space<vmem>>, vector<1x32x64xf32>
    %341 = vector.shape_cast %340 : vector<1x32x64xf32> to vector<32x64xf32>
    %cst_156 = arith.constant dense<0.000000e+00> : vector<16x64xf32>
    %342 = tpu.matmul %339, %341, %cst_156 {dimension_numbers = #tpu.dot_dimension_numbers<[1], [0], [0], [1], [0, 0, 1, 1], [], []>} : vector<16x32xf32>, vector<32x64xf32>, vector<16x64xf32> -> vector<16x64xf32>
    %c1_157 = arith.constant 1 : index
    %c0_158 = arith.constant 0 : index
    %c1664_159 = arith.constant 1664 : index
    %343 = vector.load %arg3[%c1_157, %c0_158, %c1664_159] : memref<2x8x1920xf32, #tpu.memory_space<vmem>>, vector<1x1x64xf32>
    %344 = vector.shape_cast %343 : vector<1x1x64xf32> to vector<1x64xf32>
    %345 = vector.broadcast %344 : vector<1x64xf32> to vector<16x64xf32>
    %346 = arith.addf %342, %345 : vector<16x64xf32>
    %cst_160 = arith.constant 0.000000e+00 : f32
    %347 = vector.broadcast %cst_160 : f32 to vector<16x64xf32>
    %348 = arith.maximumf %346, %347 : vector<16x64xf32>
    %c1_161 = arith.constant 1 : index
    %c0_162 = arith.constant 0 : index
    %c1792_163 = arith.constant 1792 : index
    %349 = vector.load %arg2[%c1_161, %c0_162, %c1792_163] : memref<2x64x1920xf32, #tpu.memory_space<vmem>>, vector<1x64x32xf32>
    %350 = vector.shape_cast %349 : vector<1x64x32xf32> to vector<64x32xf32>
    %cst_164 = arith.constant dense<0.000000e+00> : vector<16x32xf32>
    %351 = tpu.matmul %348, %350, %cst_164 {dimension_numbers = #tpu.dot_dimension_numbers<[1], [0], [0], [1], [0, 0, 1, 1], [], []>} : vector<16x64xf32>, vector<64x32xf32>, vector<16x32xf32> -> vector<16x32xf32>
    %c1_165 = arith.constant 1 : index
    %c0_166 = arith.constant 0 : index
    %c1792_167 = arith.constant 1792 : index
    %352 = vector.load %arg3[%c1_165, %c0_166, %c1792_167] : memref<2x8x1920xf32, #tpu.memory_space<vmem>>, vector<1x1x32xf32>
    %353 = vector.shape_cast %352 : vector<1x1x32xf32> to vector<1x32xf32>
    %354 = vector.broadcast %353 : vector<1x32xf32> to vector<16x32xf32>
    %355 = arith.addf %351, %354 : vector<16x32xf32>
    %356 = arith.addf %339, %355 : vector<16x32xf32>
    %c1_168 = arith.constant 1 : index
    %c3_169 = arith.constant 3 : index
    %c0_170 = arith.constant 0 : index
    %357 = vector.load %arg3[%c1_168, %c3_169, %c0_170] : memref<2x8x1920xf32, #tpu.memory_space<vmem>>, vector<1x1x32xf32>
    %358 = vector.shape_cast %357 : vector<1x1x32xf32> to vector<1x32xf32>
    %c1_171 = arith.constant 1 : index
    %c4_172 = arith.constant 4 : index
    %c0_173 = arith.constant 0 : index
    %359 = vector.load %arg3[%c1_171, %c4_172, %c0_173] : memref<2x8x1920xf32, #tpu.memory_space<vmem>>, vector<1x1x32xf32>
    %360 = vector.shape_cast %359 : vector<1x1x32xf32> to vector<1x32xf32>
    %cst_174 = arith.constant dense<0.000000e+00> : vector<16xf32>
    %361 = vector.multi_reduction <add>, %356, %cst_174 [1] : vector<16x32xf32> to vector<16xf32>
    %362 = vector.shape_cast %361 : vector<16xf32> to vector<16x1xf32>
    %cst_175 = arith.constant 3.200000e+01 : f32
    %363 = vector.broadcast %cst_175 : f32 to vector<16x1xf32>
    %364 = arith.divf %362, %363 : vector<16x1xf32>
    %365 = vector.broadcast %364 : vector<16x1xf32> to vector<16x32xf32>
    %366 = arith.subf %356, %365 : vector<16x32xf32>
    %367 = arith.mulf %366, %366 : vector<16x32xf32>
    %cst_176 = arith.constant dense<0.000000e+00> : vector<16xf32>
    %368 = vector.multi_reduction <add>, %367, %cst_176 [1] : vector<16x32xf32> to vector<16xf32>
    %369 = vector.shape_cast %368 : vector<16xf32> to vector<16x1xf32>
    %cst_177 = arith.constant 3.200000e+01 : f32
    %370 = vector.broadcast %cst_177 : f32 to vector<16x1xf32>
    %371 = arith.divf %369, %370 : vector<16x1xf32>
    %cst_178 = arith.constant 9.99999974E-6 : f32
    %372 = vector.broadcast %cst_178 : f32 to vector<16x1xf32>
    %373 = arith.addf %371, %372 : vector<16x1xf32>
    %374 = math.rsqrt %373 : vector<16x1xf32>
    %375 = vector.broadcast %374 : vector<16x1xf32> to vector<16x32xf32>
    %376 = arith.mulf %366, %375 : vector<16x32xf32>
    %377 = vector.broadcast %358 : vector<1x32xf32> to vector<16x32xf32>
    %378 = arith.mulf %376, %377 : vector<16x32xf32>
    %379 = vector.broadcast %360 : vector<1x32xf32> to vector<16x32xf32>
    %380 = arith.addf %378, %379 : vector<16x32xf32>
    %c0_179 = arith.constant 0 : index
    %c0_180 = arith.constant 0 : index
    %381 = vector.load %arg4[%c0_179, %c0_180] : memref<40x128xf32, #tpu.memory_space<vmem>>, vector<32x128xf32>
    %cst_181 = arith.constant dense<0.000000e+00> : vector<16x128xf32>
    %382 = tpu.matmul %380, %381, %cst_181 {dimension_numbers = #tpu.dot_dimension_numbers<[1], [0], [0], [1], [0, 0, 1, 1], [], []>} : vector<16x32xf32>, vector<32x128xf32>, vector<16x128xf32> -> vector<16x128xf32>
    %c32 = arith.constant 32 : index
    %c0_182 = arith.constant 0 : index
    %383 = vector.load %arg4[%c32, %c0_182] : memref<40x128xf32, #tpu.memory_space<vmem>>, vector<1x128xf32>
    %384 = vector.broadcast %383 : vector<1x128xf32> to vector<16x128xf32>
    %385 = arith.addf %382, %384 : vector<16x128xf32>
    %c0_183 = arith.constant 0 : index
    %c0_184 = arith.constant 0 : index
    %386 = vector.load %arg5[%c0_183, %c0_184] : memref<16x128xf32, #tpu.memory_space<vmem>>, vector<16x128xf32>
    tpu.vector_store %arg5[%c0_183, %c0_184], %385 {strides = array<i32>} : memref<16x128xf32, #tpu.memory_space<vmem>>, vector<16x128xf32>,
    return
  }
}

</mosaic_0001>

<llo_original>
// kernel: decoder_only_transformer_forward.1
$region0: #{decoder_only_transformer_forward.1}
  #allocation0 [shape = 'u32[]', space=smem, size = 0x4, offset = 0x4, fixed_abs, tag = 'smem constant byte address 0x4 - core index']
  #allocation1 [shape = 'u32[144,128]{1,0:T(1,128)}', space=vmem, size = 0x12000, scoped, tag = 'internal scratch']
  #allocation2 [shape = 'f32[16,32]{1,0:T(8,128)}', space=vmem, size = 0x2000, scoped, tag = 'scratch operand']
  %s0 = inlined_call_operand.vmem [shape: s32[16,2], index: 0, kind: input, shape index: {}]
  %s1 = inlined_call_operand.vmem [shape: f32[128,32], index: 1, kind: input, shape index: {}]
  %s2 = inlined_call_operand.hbm [shape: f32[2,64,1920], index: 2, kind: input, shape index: {}]
  %s3 = inlined_call_operand.hbm [shape: f32[2,8,1920], index: 3, kind: input, shape index: {}]
  %s4 = inlined_call_operand.vmem [shape: f32[40,128], index: 4, kind: input, shape index: {}]
  %s5 = inlined_call_operand.vmem [shape: f32[16,128], index: 5, kind: output, shape index: {}]
  %s6 = sld [smem:[#allocation0]]
  $region38: #{decoder_only_transformer_forward.1} parent=0
    _
  %s8 = ssub.s32 1, %s6
  %s9 = scalar_select 0, %s8, %s6
  $region1: #{decoder_only_transformer_forward.1} parent=0
    #allocation3 [shape = 'u8[983040]{0}', space=vmem, size = 0xf0000, scoped, tag = 'input window, operand 2, single buffered']
    #allocation4 [shape = 's32[1]{0}', space=sflag, size = 0x4, scoped, tag = 'scoped memory for decoder_only_transformer_forward.1']
    #allocation5 [shape = 'u8[122880]{0}', space=vmem, size = 0x1e000, scoped, tag = 'input window, operand 3, single buffered']
    #allocation6 [shape = 's32[1]{0}', space=sflag, size = 0x4, scoped, tag = 'scoped memory for decoder_only_transformer_forward.1']
    %10 = vsyncpa [#allocation4], 0
    %11 = vsyncpa [#allocation6], 0
    // Predicated region
    $region2: #{decoder_only_transformer_forward.1} parent=1 // pred_check
      _
    $region3: #{decoder_only_transformer_forward.1} parent=1 // pred_check_branch
      %13 = sbr.rel (0) target = $region5
    $region4: #{decoder_only_transformer_forward.1} parent=1 // pred_region
      _
    $region5: #{decoder_only_transformer_forward.1} parent=1 // pred_fallthru
      _
    // Predicated region
    $region6: #{decoder_only_transformer_forward.1} parent=1 // pred_check
      _
    $region7: #{decoder_only_transformer_forward.1} parent=1 // pred_check_branch
      %15 = sbr.rel (0) target = $region9
    $region8: #{decoder_only_transformer_forward.1} parent=1 // pred_region
      _
    $region9: #{decoder_only_transformer_forward.1} parent=1 // pred_fallthru
      _
    // Predicated region
    $region10: #{decoder_only_transformer_forward.1} parent=1 // pred_check
      _
    $region11: #{decoder_only_transformer_forward.1} parent=1 // pred_check_branch
      %17 = sbr.rel (0) target = $region13
    $region12: #{decoder_only_transformer_forward.1} parent=1 // pred_region
      %s19 = ssub.s32 30720, 30720
      %20 = vsyncadd [#allocation4], %s19
      %s21 = sshll.u32 [#allocation3], 4
      %s22 = int_to_ptr.vmem [resolvable:$true] %s21
      %27 = dma.hbm_to_vmem [thread:$0]  %s2, 30720, %s22, [#allocation4], 1920, 1920, 120
    $region13: #{decoder_only_transformer_forward.1} parent=1 // pred_fallthru
      _
    // Predicated region
    $region14: #{decoder_only_transformer_forward.1} parent=1 // pred_check
      _
    $region15: #{decoder_only_transformer_forward.1} parent=1 // pred_check_branch
      %29 = sbr.rel (0) target = $region17
    $region16: #{decoder_only_transformer_forward.1} parent=1 // pred_region
      %s31 = ssub.s32 3840, 3840
      %32 = vsyncadd [#allocation6], %s31
      %s33 = sshll.u32 [#allocation5], 4
      %s34 = int_to_ptr.vmem [resolvable:$true] %s33
      %39 = dma.hbm_to_vmem [thread:$0]  %s3, 3840, %s34, [#allocation6], 1920, 1920, 120
    $region17: #{decoder_only_transformer_forward.1} parent=1 // pred_fallthru
      _
    // Predicated region
    $region18: #{decoder_only_transformer_forward.1} parent=1 // pred_check
      _
    $region19: #{decoder_only_transformer_forward.1} parent=1 // pred_check_branch
      %41 = sbr.rel (0) target = $region21
    $region20: #{decoder_only_transformer_forward.1} parent=1 // pred_region
      _
    $region21: #{decoder_only_transformer_forward.1} parent=1 // pred_fallthru
      _
    // Predicated region
    $region22: #{decoder_only_transformer_forward.1} parent=1 // pred_check
      _
    $region23: #{decoder_only_transformer_forward.1} parent=1 // pred_check_branch
      %43 = sbr.rel (0) target = $region25
    $region24: #{decoder_only_transformer_forward.1} parent=1 // pred_region
      %44 = dma.done [#allocation4], 30720
    $region25: #{decoder_only_transformer_forward.1} parent=1 // pred_fallthru
      _
    // Predicated region
    $region26: #{decoder_only_transformer_forward.1} parent=1 // pred_check
      _
    $region27: #{decoder_only_transformer_forward.1} parent=1 // pred_check_branch
      %46 = sbr.rel (0) target = $region29
    $region28: #{decoder_only_transformer_forward.1} parent=1 // pred_region
      %47 = dma.done [#allocation6], 3840
    $region29: #{decoder_only_transformer_forward.1} parent=1 // pred_fallthru
      _
    %v48 = vld [vmem:[%s0] sm:$0xff]
    %v49 = vld [vmem:[%s0 + $0x8] sm:$0xff]
    %v50 = vlaneseq
    %v51 = vand.u32 %v50, 127
    %52 = vset.pattern.permute.xlu0 0
    %53 = vperm.xlu0 %52, %v48
    %v54 = vpop.permute.xlu0 %53
    %55 = vset.pattern.permute.xlu0 0
    %56 = vperm.xlu0 %55, %v49
    %v57 = vpop.permute.xlu0 %56
    %vm58 = vcmp.eq.s32.totalorder %v51, %v54
    %vm59 = vcmp.eq.s32.totalorder %v51, %v57
    %60 = vset.pattern.permute.xlu0 1
    %61 = vperm.xlu0 %60, %v48
    %v62 = vpop.permute.xlu0 %61
    %63 = vset.pattern.permute.xlu0 1
    %64 = vperm.xlu0 %63, %v49
    %v65 = vpop.permute.xlu0 %64
    %vm66 = vcmp.eq.s32.totalorder %v51, %v62
    %vm67 = vcmp.eq.s32.totalorder %v51, %v65
    %vm68 = vmor %vm58, %vm66
    %vm69 = vmor %vm59, %vm67
    %v70 = vsel %vm68, 1, 0
    %v71 = vsel %vm69, 1, 0
    %v72 = vcvt.s32.f32 %v70
    %v73 = vcvt.s32.f32 %v71
    %v74 = vld [vmem:[%s1] sm:$0xff]
    %v75 = vld [vmem:[%s1 + $0x8] sm:$0xff]
    %v76 = vld [vmem:[%s1 + $0x10] sm:$0xff]
    %v77 = vld [vmem:[%s1 + $0x18] sm:$0xff]
    %v78 = vld [vmem:[%s1 + $0x20] sm:$0xff]
    %v79 = vld [vmem:[%s1 + $0x28] sm:$0xff]
    %v80 = vld [vmem:[%s1 + $0x30] sm:$0xff]
    %v81 = vld [vmem:[%s1 + $0x38] sm:$0xff]
    %v82 = vld [vmem:[%s1 + $0x40] sm:$0xff]
    %v83 = vld [vmem:[%s1 + $0x48] sm:$0xff]
    %v84 = vld [vmem:[%s1 + $0x50] sm:$0xff]
    %v85 = vld [vmem:[%s1 + $0x58] sm:$0xff]
    %v86 = vld [vmem:[%s1 + $0x60] sm:$0xff]
    %v87 = vld [vmem:[%s1 + $0x68] sm:$0xff]
    %v88 = vld [vmem:[%s1 + $0x70] sm:$0xff]
    %v89 = vld [vmem:[%s1 + $0x78] sm:$0xff]
    %90 = vmatprep.subr.mxu0 0.0
    %91 = vmatpush1.msra.mxu0 %v74
    %92 = vmatprep.subr.mxu0 0.0
    %93 = vmatpush1.msra.mxu0 %v75
    %94 = vmatprep.subr.mxu0 0.0
    %95 = vmatpush1.msra.mxu0 %v76
    %96 = vmatprep.subr.mxu0 0.0
    %97 = vmatpush1.msra.mxu0 %v77
    %98 = vmatprep.subr.mxu0 0.0
    %99 = vmatpush1.msra.mxu0 %v78
    %100 = vmatprep.subr.mxu0 0.0
    %101 = vmatpush1.msra.mxu0 %v79
    %102 = vmatprep.subr.mxu0 0.0
    %103 = vmatpush1.msra.mxu0 %v80
    %104 = vmatprep.subr.mxu0 0.0
    %105 = vmatpush1.msra.mxu0 %v81
    %106 = vmatprep.subr.mxu0 0.0
    %107 = vmatpush1.msra.mxu0 %v82
    %108 = vmatprep.subr.mxu0 0.0
    %109 = vmatpush1.msra.mxu0 %v83
    %110 = vmatprep.subr.mxu0 0.0
    %111 = vmatpush1.msra.mxu0 %v84
    %112 = vmatprep.subr.mxu0 0.0
    %113 = vmatpush1.msra.mxu0 %v85
    %114 = vmatprep.subr.mxu0 0.0
    %115 = vmatpush1.msra.mxu0 %v86
    %116 = vmatprep.subr.mxu0 0.0
    %117 = vmatpush1.msra.mxu0 %v87
    %118 = vmatprep.subr.mxu0 0.0
    %119 = vmatpush1.msra.mxu0 %v88
    %120 = vmatprep.subr.mxu0 0.0
    %121 = vmatpush1.msra.mxu0 %v89
    %122 = vmatprep.subr.mxu0 0.0
    %123 = vmatpush1.msra.mxu0 0.0
    %124 = vmatprep.subr.mxu0 0.0
    %125 = vmatpush1.msra.mxu0 0.0
    %126 = vmatprep.subr.mxu0 0.0
    %127 = vmatpush1.msra.mxu0 0.0
    %128 = vmatprep.subr.mxu0 0.0
    %129 = vmatpush1.msra.mxu0 0.0
    %130 = vmatprep.subr.mxu0 0.0
    %131 = vmatpush1.msra.mxu0 0.0
    %132 = vmatprep.subr.mxu0 0.0
    %133 = vmatpush1.msra.mxu0 0.0
    %134 = vmatprep.subr.mxu0 0.0
    %135 = vmatpush1.msra.mxu0 0.0
    %136 = vmatprep.subr.mxu0 0.0
    %137 = vmatpush1.msra.mxu0 0.0
    %138 = vmatprep.subr.mxu0 0.0
    %139 = vmatpush1.msra.mxu0 0.0
    %140 = vmatprep.subr.mxu0 0.0
    %141 = vmatpush1.msra.mxu0 0.0
    %142 = vmatprep.subr.mxu0 0.0
    %143 = vmatpush1.msra.mxu0 0.0
    %144 = vmatprep.subr.mxu0 0.0
    %145 = vmatpush1.msra.mxu0 0.0
    %146 = vmatprep.subr.mxu0 0.0
    %147 = vmatpush1.msra.mxu0 0.0
    %148 = vmatprep.subr.mxu0 0.0
    %149 = vmatpush1.msra.mxu0 0.0
    %150 = vmatprep.subr.mxu0 0.0
    %151 = vmatpush1.msra.mxu0 0.0
    %152 = vmatprep.subr.mxu0 0.0
    %153 = vmatpush1.msra.mxu0 0.0
    %154 = vmatprep.mubr.f32.mxu0 0.0
    %155 = vmatmul.mubr.f32.gmra.mrb[0].mxu0 %v72
    %v156 = vpop.f32.mrb[0].mxu0
    %v157 = vadd.f32 0.0, %v156
    %v158 = vpop.f32.mrb[0].mxu0
    %159 = vmatprep.mubr.f32.mxu0 0.0
    %160 = vmatmul.mubr.f32.gmra.mrb[0].mxu0 %v73
    %v161 = vpop.f32.mrb[0].mxu0
    %v162 = vadd.f32 0.0, %v161
    %v163 = vpop.f32.mrb[0].mxu0
    %164 = vdwg.mxu0
    %v165 = vlaneseq
    %v166 = vshrl.u32 %v165, 7
    %v167 = vadd.s32 %v166, 8
    %vm168 = vcmp.ge.s32.totalorder %v166, 0
    %vm169 = vcmp.ge.s32.totalorder %v167, 0
    %vm170 = vcmp.lt.s32.totalorder %v166, 8
    %vm171 = vcmp.lt.s32.totalorder %v167, 8
    %vm172 = vmand %vm168, %vm170
    %vm173 = vmand %vm169, %vm171
    %vm174 = vcmp.ge.s32.totalorder %v51, 0
    %vm175 = vmand %vm172, %vm174
    %vm176 = vmand %vm173, %vm174
    %vm177 = vcmp.lt.s32.totalorder %v51, 8
    %vm178 = vmand %vm175, %vm177
    %vm179 = vmand %vm176, %vm177
    %vm180 = vcmp.ge.s32.totalorder %v166, 8
    %vm181 = vcmp.ge.s32.totalorder %v167, 8
    %vm182 = vcmp.lt.s32.totalorder %v166, 16
    %vm183 = vcmp.lt.s32.totalorder %v167, 16
    %vm184 = vmand %vm180, %vm182
    %vm185 = vmand %vm181, %vm183
    %vm186 = vcmp.ge.s32.totalorder %v51, 8
    %vm187 = vmand %vm184, %vm186
    %vm188 = vmand %vm185, %vm186
    %vm189 = vcmp.lt.s32.totalorder %v51, 16
    %vm190 = vmand %vm187, %vm189
    %vm191 = vmand %vm188, %vm189
    %vm192 = vmor %vm178, %vm190
    %vm193 = vmor %vm179, %vm191
    %vm194 = vcmp.ge.s32.totalorder %v166, %v51
    %vm195 = vcmp.ge.s32.totalorder %v167, %v51
    %vm196 = vmand %vm192, %vm194
    %vm197 = vmand %vm193, %vm195
    %vm198 = vcmp.ne.s32.totalorder %v48, 0
    %vm199 = vcmp.ne.s32.totalorder %v49, 0
    %v200 = vsel %vm198, 1, 0
    %v201 = vsel %vm199, 1, 0
    %202 = vset.pattern.permute.xlu0 0
    %203 = vperm.xlu0 %202, %v200
    %v204 = vpop.permute.xlu0 %203
    %205 = vset.pattern.permute.xlu0 0
    %206 = vperm.xlu0 %205, %v201
    %v207 = vpop.permute.xlu0 %206
    %vm208 = vcmp.eq.s32.totalorder %v204, 1
    %vm209 = vcmp.eq.s32.totalorder %v207, 1
    %vm210 = vmand %vm196, %vm208
    %vm211 = vmand %vm197, %vm209
    %v212 = vld [vmem:[#allocation3] sm:$0xff]
    %v213 = vld [vmem:[#allocation3 + $0x8] sm:$0xff]
    %v214 = vld [vmem:[#allocation3 + $0x10] sm:$0xff]
    %v215 = vld [vmem:[#allocation3 + $0x18] sm:$0xff]
    %v216 = vld [vmem:[#allocation3 + $0x20] sm:$0xff]
    %v217 = vld [vmem:[#allocation3 + $0x28] sm:$0xff]
    %v218 = vld [vmem:[#allocation3 + $0x30] sm:$0xff]
    %v219 = vld [vmem:[#allocation3 + $0x38] sm:$0xff]
    %v220 = vld [vmem:[#allocation3 + $0x40] sm:$0xff]
    %v221 = vld [vmem:[#allocation3 + $0x48] sm:$0xff]
    %v222 = vld [vmem:[#allocation3 + $0x50] sm:$0xff]
    %v223 = vld [vmem:[#allocation3 + $0x58] sm:$0xff]
    %v224 = vld [vmem:[#allocation3 + $0x78] sm:$0xff]
    %v225 = vld [vmem:[#allocation3 + $0x80] sm:$0xff]
    %v226 = vld [vmem:[#allocation3 + $0x88] sm:$0xff]
    %v227 = vld [vmem:[#allocation3 + $0x90] sm:$0xff]
    %v228 = vld [vmem:[#allocation3 + $0x98] sm:$0xff]
    %v229 = vld [vmem:[#allocation3 + $0xa0] sm:$0xff]
    %v230 = vld [vmem:[#allocation3 + $0xa8] sm:$0xff]
    %v231 = vld [vmem:[#allocation3 + $0xb0] sm:$0xff]
    %v232 = vld [vmem:[#allocation3 + $0xb8] sm:$0xff]
    %v233 = vld [vmem:[#allocation3 + $0xc0] sm:$0xff]
    %v234 = vld [vmem:[#allocation3 + $0xc8] sm:$0xff]
    %v235 = vld [vmem:[#allocation3 + $0xd0] sm:$0xff]
    %v236 = vld [vmem:[#allocation3 + $0xf0] sm:$0xff]
    %v237 = vld [vmem:[#allocation3 + $0xf8] sm:$0xff]
    %v238 = vld [vmem:[#allocation3 + $0x100] sm:$0xff]
    %v239 = vld [vmem:[#allocation3 + $0x108] sm:$0xff]
    %v240 = vld [vmem:[#allocation3 + $0x110] sm:$0xff]
    %v241 = vld [vmem:[#allocation3 + $0x118] sm:$0xff]
    %v242 = vld [vmem:[#allocation3 + $0x120] sm:$0xff]
    %v243 = vld [vmem:[#allocation3 + $0x128] sm:$0xff]
    %v244 = vld [vmem:[#allocation3 + $0x130] sm:$0xff]
    %v245 = vld [vmem:[#allocation3 + $0x138] sm:$0xff]
    %v246 = vld [vmem:[#allocation3 + $0x140] sm:$0xff]
    %v247 = vld [vmem:[#allocation3 + $0x148] sm:$0xff]
    %v248 = vld [vmem:[#allocation3 + $0x168] sm:$0xff]
    %v249 = vld [vmem:[#allocation3 + $0x170] sm:$0xff]
    %v250 = vld [vmem:[#allocation3 + $0x178] sm:$0xff]
    %v251 = vld [vmem:[#allocation3 + $0x180] sm:$0xff]
    %v252 = vld [vmem:[#allocation3 + $0x188] sm:$0xff]
    %v253 = vld [vmem:[#allocation3 + $0x190] sm:$0xff]
    %v254 = vld [vmem:[#allocation3 + $0x198] sm:$0xff]
    %v255 = vld [vmem:[#allocation3 + $0x1a0] sm:$0xff]
    %v256 = vld [vmem:[#allocation3 + $0x1a8] sm:$0xff]
    %v257 = vld [vmem:[#allocation3 + $0x1b0] sm:$0xff]
    %v258 = vld [vmem:[#allocation3 + $0x1b8] sm:$0xff]
    %v259 = vld [vmem:[#allocation3 + $0x1c0] sm:$0xff]
    %v260 = vld [vmem:[#allocation5] ss:$8 sm:$0xf]
    %v261 = vld [vmem:[#allocation5] ss:$8 sm:$0xf0]
    %v262 = vor.u32 %v260, %v261
    %s263 = scalar_lea.vmem [#allocation5], 64
    %v264 = vld [vmem:[%s263] ss:$8 sm:$0xf]
    %v267 = vlaneseq
    %v268 = vshrl.u32 %v267, 7
    %v269 = vsub.s32 0, %v268
    %v270 = vrot.slane %v262, %v269
    %v271 = vlaneseq
    %v272 = vshrl.u32 %v271, 7
    %v273 = vsub.s32 1, %v272
    %v274 = vrot.slane %v262, %v273
    %v275 = vlaneseq
    %v276 = vshrl.u32 %v275, 7
    %v277 = vsub.s32 2, %v276
    %v278 = vrot.slane %v262, %v277
    %v279 = vlaneseq
    %v280 = vshrl.u32 %v279, 7
    %v281 = vsub.s32 3, %v280
    %v282 = vrot.slane %v262, %v281
    %v283 = vlaneseq
    %v284 = vshrl.u32 %v283, 7
    %v285 = vsub.s32 4, %v284
    %v286 = vrot.slane %v262, %v285
    %v287 = vlaneseq
    %v288 = vshrl.u32 %v287, 7
    %v289 = vsub.s32 5, %v288
    %v290 = vrot.slane %v262, %v289
    %v291 = vlaneseq
    %v292 = vshrl.u32 %v291, 7
    %v293 = vsub.s32 6, %v292
    %v294 = vrot.slane %v262, %v293
    %v295 = vlaneseq
    %v296 = vshrl.u32 %v295, 7
    %v297 = vsub.s32 7, %v296
    %v298 = vrot.slane %v262, %v297
    %v299 = vlaneseq
    %v300 = vshrl.u32 %v299, 7
    %v301 = vsub.s32 0, %v300
    %v302 = vrot.slane %v264, %v301
    %v303 = vlaneseq
    %v304 = vshrl.u32 %v303, 7
    %v305 = vsub.s32 1, %v304
    %v306 = vrot.slane %v264, %v305
    %v307 = vlaneseq
    %v308 = vshrl.u32 %v307, 7
    %v309 = vsub.s32 2, %v308
    %v310 = vrot.slane %v264, %v309
    %v311 = vlaneseq
    %v312 = vshrl.u32 %v311, 7
    %v313 = vsub.s32 3, %v312
    %v314 = vrot.slane %v264, %v313
    %vm327 = vcmask 261120
    %v329 = vsel %vm327, %v157, 0
    %v332 = vsel %vm327, %v162, 0
    %334 = vmatprep.subr.mxu0 %v213
    %335 = vmatpush1.msra.mxu0 %v212
    %336 = vmatprep.subr.mxu0 %v225
    %337 = vmatpush1.msra.mxu0 %v224
    %338 = vmatprep.subr.mxu0 %v237
    %339 = vmatpush1.msra.mxu0 %v236
    %340 = vmatprep.subr.mxu0 %v249
    %341 = vmatpush1.msra.mxu0 %v248
    %342 = vmatprep.subr.mxu0 0.0
    %343 = vmatpush1.msra.mxu0 0.0
    %344 = vmatprep.subr.mxu0 0.0
    %345 = vmatpush1.msra.mxu0 0.0
    %346 = vmatprep.subr.mxu0 0.0
    %347 = vmatpush1.msra.mxu0 0.0
    %348 = vmatprep.subr.mxu0 0.0
    %349 = vmatpush1.msra.mxu0 0.0
    %350 = vmatprep.subr.mxu0 0.0
    %351 = vmatpush1.msra.mxu0 0.0
    %352 = vmatprep.subr.mxu0 0.0
    %353 = vmatpush1.msra.mxu0 0.0
    %354 = vmatprep.subr.mxu0 0.0
    %355 = vmatpush1.msra.mxu0 0.0
    %356 = vmatprep.subr.mxu0 0.0
    %357 = vmatpush1.msra.mxu0 0.0
    %358 = vmatprep.subr.mxu0 0.0
    %359 = vmatpush1.msra.mxu0 0.0
    %360 = vmatprep.subr.mxu0 0.0
    %361 = vmatpush1.msra.mxu0 0.0
    %362 = vmatprep.subr.mxu0 0.0
    %363 = vmatpush1.msra.mxu0 0.0
    %364 = vmatprep.subr.mxu0 0.0
    %365 = vmatpush1.msra.mxu0 0.0
    %366 = vmatprep.subr.mxu0 0.0
    %367 = vmatpush1.msra.mxu0 0.0
    %368 = vmatprep.subr.mxu0 0.0
    %369 = vmatpush1.msra.mxu0 0.0
    %370 = vmatprep.subr.mxu0 0.0
    %371 = vmatpush1.msra.mxu0 0.0
    %372 = vmatprep.subr.mxu0 0.0
    %373 = vmatpush1.msra.mxu0 0.0
    %374 = vmatprep.subr.mxu0 0.0
    %375 = vmatpush1.msra.mxu0 0.0
    %376 = vmatprep.subr.mxu0 0.0
    %377 = vmatpush1.msra.mxu0 0.0
    %378 = vmatprep.subr.mxu0 0.0
    %379 = vmatpush1.msra.mxu0 0.0
    %380 = vmatprep.subr.mxu0 0.0
    %381 = vmatpush1.msra.mxu0 0.0
    %382 = vmatprep.subr.mxu0 0.0
    %383 = vmatpush1.msra.mxu0 0.0
    %384 = vmatprep.subr.mxu0 0.0
    %385 = vmatpush1.msra.mxu0 0.0
    %386 = vmatprep.subr.mxu0 0.0
    %387 = vmatpush1.msra.mxu0 0.0
    %388 = vmatprep.subr.mxu0 0.0
    %389 = vmatpush1.msra.mxu0 0.0
    %390 = vmatprep.subr.mxu0 0.0
    %391 = vmatpush1.msra.mxu0 0.0
    %392 = vmatprep.subr.mxu0 0.0
    %393 = vmatpush1.msra.mxu0 0.0
    %394 = vmatprep.subr.mxu0 0.0
    %395 = vmatpush1.msra.mxu0 0.0
    %396 = vmatprep.subr.mxu0 0.0
    %397 = vmatpush1.msra.mxu0 0.0
    %398 = vmatprep.mubr.f32.mxu0 0.0
    %399 = vmatmul.mubr.f32.gmra.mrb[0].mxu0 %v329
    %v400 = vpop.f32.mrb[0].mxu0
    %v401 = vadd.f32 %v270, %v400
    %v402 = vpop.f32.mrb[0].mxu0
    %v403 = vadd.f32 %v274, %v402
    %404 = vmatprep.mubr.f32.mxu0 0.0
    %405 = vmatmul.mubr.f32.gmra.mrb[0].mxu0 %v332
    %v406 = vpop.f32.mrb[0].mxu0
    %v407 = vadd.f32 %v270, %v406
    %v408 = vpop.f32.mrb[0].mxu0
    %v409 = vadd.f32 %v274, %v408
    %410 = vdwg.mxu0
    %411 = vmatprep.subr.mxu0 %v215
    %412 = vmatpush1.msra.mxu0 %v214
    %413 = vmatprep.subr.mxu0 %v227
    %414 = vmatpush1.msra.mxu0 %v226
    %415 = vmatprep.subr.mxu0 %v239
    %416 = vmatpush1.msra.mxu0 %v238
    %417 = vmatprep.subr.mxu0 %v251
    %418 = vmatpush1.msra.mxu0 %v250
    %419 = vmatprep.subr.mxu0 0.0
    %420 = vmatpush1.msra.mxu0 0.0
    %421 = vmatprep.subr.mxu0 0.0
    %422 = vmatpush1.msra.mxu0 0.0
    %423 = vmatprep.subr.mxu0 0.0
    %424 = vmatpush1.msra.mxu0 0.0
    %425 = vmatprep.subr.mxu0 0.0
    %426 = vmatpush1.msra.mxu0 0.0
    %427 = vmatprep.subr.mxu0 0.0
    %428 = vmatpush1.msra.mxu0 0.0
    %429 = vmatprep.subr.mxu0 0.0
    %430 = vmatpush1.msra.mxu0 0.0
    %431 = vmatprep.subr.mxu0 0.0
    %432 = vmatpush1.msra.mxu0 0.0
    %433 = vmatprep.subr.mxu0 0.0
    %434 = vmatpush1.msra.mxu0 0.0
    %435 = vmatprep.subr.mxu0 0.0
    %436 = vmatpush1.msra.mxu0 0.0
    %437 = vmatprep.subr.mxu0 0.0
    %438 = vmatpush1.msra.mxu0 0.0
    %439 = vmatprep.subr.mxu0 0.0
    %440 = vmatpush1.msra.mxu0 0.0
    %441 = vmatprep.subr.mxu0 0.0
    %442 = vmatpush1.msra.mxu0 0.0
    %443 = vmatprep.subr.mxu0 0.0
    %444 = vmatpush1.msra.mxu0 0.0
    %445 = vmatprep.subr.mxu0 0.0
    %446 = vmatpush1.msra.mxu0 0.0
    %447 = vmatprep.subr.mxu0 0.0
    %448 = vmatpush1.msra.mxu0 0.0
    %449 = vmatprep.subr.mxu0 0.0
    %450 = vmatpush1.msra.mxu0 0.0
    %451 = vmatprep.subr.mxu0 0.0
    %452 = vmatpush1.msra.mxu0 0.0
    %453 = vmatprep.subr.mxu0 0.0
    %454 = vmatpush1.msra.mxu0 0.0
    %455 = vmatprep.subr.mxu0 0.0
    %456 = vmatpush1.msra.mxu0 0.0
    %457 = vmatprep.subr.mxu0 0.0
    %458 = vmatpush1.msra.mxu0 0.0
    %459 = vmatprep.subr.mxu0 0.0
    %460 = vmatpush1.msra.mxu0 0.0
    %461 = vmatprep.subr.mxu0 0.0
    %462 = vmatpush1.msra.mxu0 0.0
    %463 = vmatprep.subr.mxu0 0.0
    %464 = vmatpush1.msra.mxu0 0.0
    %465 = vmatprep.subr.mxu0 0.0
    %466 = vmatpush1.msra.mxu0 0.0
    %467 = vmatprep.subr.mxu0 0.0
    %468 = vmatpush1.msra.mxu0 0.0
    %469 = vmatprep.subr.mxu0 0.0
    %470 = vmatpush1.msra.mxu0 0.0
    %471 = vmatprep.subr.mxu0 0.0
    %472 = vmatpush1.msra.mxu0 0.0
    %473 = vmatprep.subr.mxu0 0.0
    %474 = vmatpush1.msra.mxu0 0.0
    %475 = vmatprep.mubr.f32.mxu0 0.0
    %476 = vmatmul.mubr.f32.gmra.mrb[0].mxu0 %v329
    %v477 = vpop.f32.mrb[0].mxu0
    %v478 = vadd.f32 %v278, %v477
    %v479 = vpop.f32.mrb[0].mxu0
    %v480 = vadd.f32 %v282, %v479
    %481 = vmatprep.mubr.f32.mxu0 0.0
    %482 = vmatmul.mubr.f32.gmra.mrb[0].mxu0 %v332
    %v483 = vpop.f32.mrb[0].mxu0
    %v484 = vadd.f32 %v278, %v483
    %v485 = vpop.f32.mrb[0].mxu0
    %v486 = vadd.f32 %v282, %v485
    %487 = vdwg.mxu0
    %488 = vmatprep.subr.mxu0 %v217
    %489 = vmatpush1.msra.mxu0 %v216
    %490 = vmatprep.subr.mxu0 %v229
    %491 = vmatpush1.msra.mxu0 %v228
    %492 = vmatprep.subr.mxu0 %v241
    %493 = vmatpush1.msra.mxu0 %v240
    %494 = vmatprep.subr.mxu0 %v253
    %495 = vmatpush1.msra.mxu0 %v252
    %496 = vmatprep.subr.mxu0 0.0
    %497 = vmatpush1.msra.mxu0 0.0
    %498 = vmatprep.subr.mxu0 0.0
    %499 = vmatpush1.msra.mxu0 0.0
    %500 = vmatprep.subr.mxu0 0.0
    %501 = vmatpush1.msra.mxu0 0.0
    %502 = vmatprep.subr.mxu0 0.0
    %503 = vmatpush1.msra.mxu0 0.0
    %504 = vmatprep.subr.mxu0 0.0
    %505 = vmatpush1.msra.mxu0 0.0
    %506 = vmatprep.subr.mxu0 0.0
    %507 = vmatpush1.msra.mxu0 0.0
    %508 = vmatprep.subr.mxu0 0.0
    %509 = vmatpush1.msra.mxu0 0.0
    %510 = vmatprep.subr.mxu0 0.0
    %511 = vmatpush1.msra.mxu0 0.0
    %512 = vmatprep.subr.mxu0 0.0
    %513 = vmatpush1.msra.mxu0 0.0
    %514 = vmatprep.subr.mxu0 0.0
    %515 = vmatpush1.msra.mxu0 0.0
    %516 = vmatprep.subr.mxu0 0.0
    %517 = vmatpush1.msra.mxu0 0.0
    %518 = vmatprep.subr.mxu0 0.0
    %519 = vmatpush1.msra.mxu0 0.0
    %520 = vmatprep.subr.mxu0 0.0
    %521 = vmatpush1.msra.mxu0 0.0
    %522 = vmatprep.subr.mxu0 0.0
    %523 = vmatpush1.msra.mxu0 0.0
    %524 = vmatprep.subr.mxu0 0.0
    %525 = vmatpush1.msra.mxu0 0.0
    %526 = vmatprep.subr.mxu0 0.0
    %527 = vmatpush1.msra.mxu0 0.0
    %528 = vmatprep.subr.mxu0 0.0
    %529 = vmatpush1.msra.mxu0 0.0
    %530 = vmatprep.subr.mxu0 0.0
    %531 = vmatpush1.msra.mxu0 0.0
    %532 = vmatprep.subr.mxu0 0.0
    %533 = vmatpush1.msra.mxu0 0.0
    %534 = vmatprep.subr.mxu0 0.0
    %535 = vmatpush1.msra.mxu0 0.0
    %536 = vmatprep.subr.mxu0 0.0
    %537 = vmatpush1.msra.mxu0 0.0
    %538 = vmatprep.subr.mxu0 0.0
    %539 = vmatpush1.msra.mxu0 0.0
    %540 = vmatprep.subr.mxu0 0.0
    %541 = vmatpush1.msra.mxu0 0.0
    %542 = vmatprep.subr.mxu0 0.0
    %543 = vmatpush1.msra.mxu0 0.0
    %544 = vmatprep.subr.mxu0 0.0
    %545 = vmatpush1.msra.mxu0 0.0
    %546 = vmatprep.subr.mxu0 0.0
    %547 = vmatpush1.msra.mxu0 0.0
    %548 = vmatprep.subr.mxu0 0.0
    %549 = vmatpush1.msra.mxu0 0.0
    %550 = vmatprep.subr.mxu0 0.0
    %551 = vmatpush1.msra.mxu0 0.0
    %552 = vmatprep.mubr.f32.mxu0 0.0
    %553 = vmatmul.mubr.f32.gmra.mrb[0].mxu0 %v329
    %v554 = vpop.f32.mrb[0].mxu0
    %v555 = vadd.f32 %v286, %v554
    %v556 = vpop.f32.mrb[0].mxu0
    %v557 = vadd.f32 %v290, %v556
    %558 = vmatprep.mubr.f32.mxu0 0.0
    %559 = vmatmul.mubr.f32.gmra.mrb[0].mxu0 %v332
    %v560 = vpop.f32.mrb[0].mxu0
    %v561 = vadd.f32 %v286, %v560
    %v562 = vpop.f32.mrb[0].mxu0
    %v563 = vadd.f32 %v290, %v562
    %564 = vdwg.mxu0
    %565 = vmatprep.subr.mxu0 %v219
    %566 = vmatpush1.msra.mxu0 %v218
    %567 = vmatprep.subr.mxu0 %v231
    %568 = vmatpush1.msra.mxu0 %v230
    %569 = vmatprep.subr.mxu0 %v243
    %570 = vmatpush1.msra.mxu0 %v242
    %571 = vmatprep.subr.mxu0 %v255
    %572 = vmatpush1.msra.mxu0 %v254
    %573 = vmatprep.subr.mxu0 0.0
    %574 = vmatpush1.msra.mxu0 0.0
    %575 = vmatprep.subr.mxu0 0.0
    %576 = vmatpush1.msra.mxu0 0.0
    %577 = vmatprep.subr.mxu0 0.0
    %578 = vmatpush1.msra.mxu0 0.0
    %579 = vmatprep.subr.mxu0 0.0
    %580 = vmatpush1.msra.mxu0 0.0
    %581 = vmatprep.subr.mxu0 0.0
    %582 = vmatpush1.msra.mxu0 0.0
    %583 = vmatprep.subr.mxu0 0.0
    %584 = vmatpush1.msra.mxu0 0.0
    %585 = vmatprep.subr.mxu0 0.0
    %586 = vmatpush1.msra.mxu0 0.0
    %587 = vmatprep.subr.mxu0 0.0
    %588 = vmatpush1.msra.mxu0 0.0
    %589 = vmatprep.subr.mxu0 0.0
    %590 = vmatpush1.msra.mxu0 0.0
    %591 = vmatprep.subr.mxu0 0.0
    %592 = vmatpush1.msra.mxu0 0.0
    %593 = vmatprep.subr.mxu0 0.0
    %594 = vmatpush1.msra.mxu0 0.0
    %595 = vmatprep.subr.mxu0 0.0
    %596 = vmatpush1.msra.mxu0 0.0
    %597 = vmatprep.subr.mxu0 0.0
    %598 = vmatpush1.msra.mxu0 0.0
    %599 = vmatprep.subr.mxu0 0.0
    %600 = vmatpush1.msra.mxu0 0.0
    %601 = vmatprep.subr.mxu0 0.0
    %602 = vmatpush1.msra.mxu0 0.0
    %603 = vmatprep.subr.mxu0 0.0
    %604 = vmatpush1.msra.mxu0 0.0
    %605 = vmatprep.subr.mxu0 0.0
    %606 = vmatpush1.msra.mxu0 0.0
    %607 = vmatprep.subr.mxu0 0.0
    %608 = vmatpush1.msra.mxu0 0.0
    %609 = vmatprep.subr.mxu0 0.0
    %610 = vmatpush1.msra.mxu0 0.0
    %611 = vmatprep.subr.mxu0 0.0
    %612 = vmatpush1.msra.mxu0 0.0
    %613 = vmatprep.subr.mxu0 0.0
    %614 = vmatpush1.msra.mxu0 0.0
    %615 = vmatprep.subr.mxu0 0.0
    %616 = vmatpush1.msra.mxu0 0.0
    %617 = vmatprep.subr.mxu0 0.0
    %618 = vmatpush1.msra.mxu0 0.0
    %619 = vmatprep.subr.mxu0 0.0
    %620 = vmatpush1.msra.mxu0 0.0
    %621 = vmatprep.subr.mxu0 0.0
    %622 = vmatpush1.msra.mxu0 0.0
    %623 = vmatprep.subr.mxu0 0.0
    %624 = vmatpush1.msra.mxu0 0.0
    %625 = vmatprep.subr.mxu0 0.0
    %626 = vmatpush1.msra.mxu0 0.0
    %627 = vmatprep.subr.mxu0 0.0
    %628 = vmatpush1.msra.mxu0 0.0
    %629 = vmatprep.mubr.f32.mxu0 0.0
    %630 = vmatmul.mubr.f32.gmra.mrb[0].mxu0 %v329
    %v631 = vpop.f32.mrb[0].mxu0
    %v632 = vadd.f32 %v294, %v631
    %v633 = vpop.f32.mrb[0].mxu0
    %v634 = vadd.f32 %v298, %v633
    %635 = vmatprep.mubr.f32.mxu0 0.0
    %636 = vmatmul.mubr.f32.gmra.mrb[0].mxu0 %v332
    %v637 = vpop.f32.mrb[0].mxu0
    %v638 = vadd.f32 %v294, %v637
    %v639 = vpop.f32.mrb[0].mxu0
    %v640 = vadd.f32 %v298, %v639
    %641 = vdwg.mxu0
    %642 = vmatprep.subr.mxu0 %v221
    %643 = vmatpush1.msra.mxu0 %v220
    %644 = vmatprep.subr.mxu0 %v233
    %645 = vmatpush1.msra.mxu0 %v232
    %646 = vmatprep.subr.mxu0 %v245
    %647 = vmatpush1.msra.mxu0 %v244
    %648 = vmatprep.subr.mxu0 %v257
    %649 = vmatpush1.msra.mxu0 %v256
    %650 = vmatprep.subr.mxu0 0.0
    %651 = vmatpush1.msra.mxu0 0.0
    %652 = vmatprep.subr.mxu0 0.0
    %653 = vmatpush1.msra.mxu0 0.0
    %654 = vmatprep.subr.mxu0 0.0
    %655 = vmatpush1.msra.mxu0 0.0
    %656 = vmatprep.subr.mxu0 0.0
    %657 = vmatpush1.msra.mxu0 0.0
    %658 = vmatprep.subr.mxu0 0.0
    %659 = vmatpush1.msra.mxu0 0.0
    %660 = vmatprep.subr.mxu0 0.0
    %661 = vmatpush1.msra.mxu0 0.0
    %662 = vmatprep.subr.mxu0 0.0
    %663 = vmatpush1.msra.mxu0 0.0
    %664 = vmatprep.subr.mxu0 0.0
    %665 = vmatpush1.msra.mxu0 0.0
    %666 = vmatprep.subr.mxu0 0.0
    %667 = vmatpush1.msra.mxu0 0.0
    %668 = vmatprep.subr.mxu0 0.0
    %669 = vmatpush1.msra.mxu0 0.0
    %670 = vmatprep.subr.mxu0 0.0
    %671 = vmatpush1.msra.mxu0 0.0
    %672 = vmatprep.subr.mxu0 0.0
    %673 = vmatpush1.msra.mxu0 0.0
    %674 = vmatprep.subr.mxu0 0.0
    %675 = vmatpush1.msra.mxu0 0.0
    %676 = vmatprep.subr.mxu0 0.0
    %677 = vmatpush1.msra.mxu0 0.0
    %678 = vmatprep.subr.mxu0 0.0
    %679 = vmatpush1.msra.mxu0 0.0
    %680 = vmatprep.subr.mxu0 0.0
    %681 = vmatpush1.msra.mxu0 0.0
    %682 = vmatprep.subr.mxu0 0.0
    %683 = vmatpush1.msra.mxu0 0.0
    %684 = vmatprep.subr.mxu0 0.0
    %685 = vmatpush1.msra.mxu0 0.0
    %686 = vmatprep.subr.mxu0 0.0
    %687 = vmatpush1.msra.mxu0 0.0
    %688 = vmatprep.subr.mxu0 0.0
    %689 = vmatpush1.msra.mxu0 0.0
    %690 = vmatprep.subr.mxu0 0.0
    %691 = vmatpush1.msra.mxu0 0.0
    %692 = vmatprep.subr.mxu0 0.0
    %693 = vmatpush1.msra.mxu0 0.0
    %694 = vmatprep.subr.mxu0 0.0
    %695 = vmatpush1.msra.mxu0 0.0
    %696 = vmatprep.subr.mxu0 0.0
    %697 = vmatpush1.msra.mxu0 0.0
    %698 = vmatprep.subr.mxu0 0.0
    %699 = vmatpush1.msra.mxu0 0.0
    %700 = vmatprep.subr.mxu0 0.0
    %701 = vmatpush1.msra.mxu0 0.0
    %702 = vmatprep.subr.mxu0 0.0
    %703 = vmatpush1.msra.mxu0 0.0
    %704 = vmatprep.subr.mxu0 0.0
    %705 = vmatpush1.msra.mxu0 0.0
    %706 = vmatprep.mubr.f32.mxu0 0.0
    %707 = vmatmul.mubr.f32.gmra.mrb[0].mxu0 %v329
    %v708 = vpop.f32.mrb[0].mxu0
    %v709 = vadd.f32 %v302, %v708
    %v710 = vpop.f32.mrb[0].mxu0
    %v711 = vadd.f32 %v306, %v710
    %712 = vmatprep.mubr.f32.mxu0 0.0
    %713 = vmatmul.mubr.f32.gmra.mrb[0].mxu0 %v332
    %v714 = vpop.f32.mrb[0].mxu0
    %v715 = vadd.f32 %v302, %v714
    %v716 = vpop.f32.mrb[0].mxu0
    %v717 = vadd.f32 %v306, %v716
    %718 = vdwg.mxu0
    %719 = vmatprep.subr.mxu0 %v223
    %720 = vmatpush1.msra.mxu0 %v222
    %721 = vmatprep.subr.mxu0 %v235
    %722 = vmatpush1.msra.mxu0 %v234
    %723 = vmatprep.subr.mxu0 %v247
    %724 = vmatpush1.msra.mxu0 %v246
    %725 = vmatprep.subr.mxu0 %v259
    %726 = vmatpush1.msra.mxu0 %v258
    %727 = vmatprep.subr.mxu0 0.0
    %728 = vmatpush1.msra.mxu0 0.0
    %729 = vmatprep.subr.mxu0 0.0
    %730 = vmatpush1.msra.mxu0 0.0
    %731 = vmatprep.subr.mxu0 0.0
    %732 = vmatpush1.msra.mxu0 0.0
    %733 = vmatprep.subr.mxu0 0.0
    %734 = vmatpush1.msra.mxu0 0.0
    %735 = vmatprep.subr.mxu0 0.0
    %736 = vmatpush1.msra.mxu0 0.0
    %737 = vmatprep.subr.mxu0 0.0
    %738 = vmatpush1.msra.mxu0 0.0
    %739 = vmatprep.subr.mxu0 0.0
    %740 = vmatpush1.msra.mxu0 0.0
    %741 = vmatprep.subr.mxu0 0.0
    %742 = vmatpush1.msra.mxu0 0.0
    %743 = vmatprep.subr.mxu0 0.0
    %744 = vmatpush1.msra.mxu0 0.0
    %745 = vmatprep.subr.mxu0 0.0
    %746 = vmatpush1.msra.mxu0 0.0
    %747 = vmatprep.subr.mxu0 0.0
    %748 = vmatpush1.msra.mxu0 0.0
    %749 = vmatprep.subr.mxu0 0.0
    %750 = vmatpush1.msra.mxu0 0.0
    %751 = vmatprep.subr.mxu0 0.0
    %752 = vmatpush1.msra.mxu0 0.0
    %753 = vmatprep.subr.mxu0 0.0
    %754 = vmatpush1.msra.mxu0 0.0
    %755 = vmatprep.subr.mxu0 0.0
    %756 = vmatpush1.msra.mxu0 0.0
    %757 = vmatprep.subr.mxu0 0.0
    %758 = vmatpush1.msra.mxu0 0.0
    %759 = vmatprep.subr.mxu0 0.0
    %760 = vmatpush1.msra.mxu0 0.0
    %761 = vmatprep.subr.mxu0 0.0
    %762 = vmatpush1.msra.mxu0 0.0
    %763 = vmatprep.subr.mxu0 0.0
    %764 = vmatpush1.msra.mxu0 0.0
    %765 = vmatprep.subr.mxu0 0.0
    %766 = vmatpush1.msra.mxu0 0.0
    %767 = vmatprep.subr.mxu0 0.0
    %768 = vmatpush1.msra.mxu0 0.0
    %769 = vmatprep.subr.mxu0 0.0
    %770 = vmatpush1.msra.mxu0 0.0
    %771 = vmatprep.subr.mxu0 0.0
    %772 = vmatpush1.msra.mxu0 0.0
    %773 = vmatprep.subr.mxu0 0.0
    %774 = vmatpush1.msra.mxu0 0.0
    %775 = vmatprep.subr.mxu0 0.0
    %776 = vmatpush1.msra.mxu0 0.0
    %777 = vmatprep.subr.mxu0 0.0
    %778 = vmatpush1.msra.mxu0 0.0
    %779 = vmatprep.subr.mxu0 0.0
    %780 = vmatpush1.msra.mxu0 0.0
    %781 = vmatprep.subr.mxu0 0.0
    %782 = vmatpush1.msra.mxu0 0.0
    %783 = vmatprep.mubr.f32.mxu0 0.0
    %784 = vmatmul.mubr.f32.gmra.mrb[0].mxu0 %v329
    %v785 = vpop.f32.mrb[0].mxu0
    %v786 = vadd.f32 %v310, %v785
    %v787 = vpop.f32.mrb[0].mxu0
    %v788 = vadd.f32 %v314, %v787
    %789 = vmatprep.mubr.f32.mxu0 0.0
    %790 = vmatmul.mubr.f32.gmra.mrb[0].mxu0 %v332
    %v791 = vpop.f32.mrb[0].mxu0
    %v792 = vadd.f32 %v310, %v791
    %v793 = vpop.f32.mrb[0].mxu0
    %v794 = vadd.f32 %v314, %v793
    %795 = vdwg.mxu0
    %vm796 = vcmask 64512
    %v798 = vsel %vm796, %v401, 0
    %v801 = vsel %vm796, %v407, 0
    %v804 = vsel %vm796, %v555, 0
    %v807 = vsel %vm796, %v561, 0
    %809 = vmatprep.subr.mxu0 0.0
    %810 = vmatpush1.xpose.msra.mxu0 %v804
    %811 = vmatprep.subr.mxu0 0.0
    %812 = vmatpush1.xpose.msra.mxu0 %v807
    %813 = vmatprep.subr.mxu0 0.0
    %814 = vmatpush1.xpose.msra.mxu0 0.0
    %815 = vmatprep.subr.mxu0 0.0
    %816 = vmatpush1.xpose.msra.mxu0 0.0
    %817 = vmatprep.subr.mxu0 0.0
    %818 = vmatpush1.xpose.msra.mxu0 0.0
    %819 = vmatprep.subr.mxu0 0.0
    %820 = vmatpush1.xpose.msra.mxu0 0.0
    %821 = vmatprep.subr.mxu0 0.0
    %822 = vmatpush1.xpose.msra.mxu0 0.0
    %823 = vmatprep.subr.mxu0 0.0
    %824 = vmatpush1.xpose.msra.mxu0 0.0
    %825 = vmatprep.subr.mxu0 0.0
    %826 = vmatpush1.xpose.msra.mxu0 0.0
    %827 = vmatprep.subr.mxu0 0.0
    %828 = vmatpush1.xpose.msra.mxu0 0.0
    %829 = vmatprep.subr.mxu0 0.0
    %830 = vmatpush1.xpose.msra.mxu0 0.0
    %831 = vmatprep.subr.mxu0 0.0
    %832 = vmatpush1.xpose.msra.mxu0 0.0
    %833 = vmatprep.subr.mxu0 0.0
    %834 = vmatpush1.xpose.msra.mxu0 0.0
    %835 = vmatprep.subr.mxu0 0.0
    %836 = vmatpush1.xpose.msra.mxu0 0.0
    %837 = vmatprep.subr.mxu0 0.0
    %838 = vmatpush1.xpose.msra.mxu0 0.0
    %839 = vmatprep.subr.mxu0 0.0
    %840 = vmatpush1.xpose.msra.mxu0 0.0
    %841 = vmatprep.subr.mxu0 0.0
    %842 = vmatpush1.xpose.msra.mxu0 0.0
    %843 = vmatprep.subr.mxu0 0.0
    %844 = vmatpush1.xpose.msra.mxu0 0.0
    %845 = vmatprep.subr.mxu0 0.0
    %846 = vmatpush1.xpose.msra.mxu0 0.0
    %847 = vmatprep.subr.mxu0 0.0
    %848 = vmatpush1.xpose.msra.mxu0 0.0
    %849 = vmatprep.subr.mxu0 0.0
    %850 = vmatpush1.xpose.msra.mxu0 0.0
    %851 = vmatprep.subr.mxu0 0.0
    %852 = vmatpush1.xpose.msra.mxu0 0.0
    %853 = vmatprep.subr.mxu0 0.0
    %854 = vmatpush1.xpose.msra.mxu0 0.0
    %855 = vmatprep.subr.mxu0 0.0
    %856 = vmatpush1.xpose.msra.mxu0 0.0
    %857 = vmatprep.subr.mxu0 0.0
    %858 = vmatpush1.xpose.msra.mxu0 0.0
    %859 = vmatprep.subr.mxu0 0.0
    %860 = vmatpush1.xpose.msra.mxu0 0.0
    %861 = vmatprep.subr.mxu0 0.0
    %862 = vmatpush1.xpose.msra.mxu0 0.0
    %863 = vmatprep.subr.mxu0 0.0
    %864 = vmatpush1.xpose.msra.mxu0 0.0
    %865 = vmatprep.subr.mxu0 0.0
    %866 = vmatpush1.xpose.msra.mxu0 0.0
    %867 = vmatprep.subr.mxu0 0.0
    %868 = vmatpush1.xpose.msra.mxu0 0.0
    %869 = vmatprep.subr.mxu0 0.0
    %870 = vmatpush1.xpose.msra.mxu0 0.0
    %871 = vmatprep.subr.mxu0 0.0
    %872 = vmatpush1.xpose.msra.mxu0 0.0
    %873 = vmatprep.mubr.f32.mxu0 0.0
    %874 = vmatmul.mubr.f32.gmra.mrb[0].mxu0 %v798
    %v875 = vpop.f32.mrb[0].mxu0
    %v876 = vadd.f32 0.0, %v875
    %v877 = vpop.f32.mrb[0].mxu0
    %878 = vmatprep.mubr.f32.mxu0 0.0
    %879 = vmatmul.mubr.f32.gmra.mrb[0].mxu0 %v801
    %v880 = vpop.f32.mrb[0].mxu0
    %v881 = vadd.f32 0.0, %v880
    %v882 = vpop.f32.mrb[0].mxu0
    %883 = vdwg.mxu0
    %v884 = vmul.f32 %v876, 0.35355338
    %v885 = vmul.f32 %v881, 0.35355338
    %v886 = vsel %vm210, %v884, -1e+09
    %v887 = vsel %vm211, %v885, -1e+09
    %v888 = vsel %vm192, %v886, -1e+30
    %v889 = vsel %vm193, %v887, -1e+30
    %vm890 = vcmask 130048
    %v891 = vsel %vm890, %v888, -inf
    %892 = vmax.xlane.f32.xlu0 %v891
    %v893 = vpop.xlane.xlu0 %892
    %v894 = vsel %vm890, %v889, -inf
    %895 = vmax.xlane.f32.xlu0 %v894
    %v896 = vpop.xlane.xlu0 %895
    %v897 = vsub.f32 %v888, %v893
    %v898 = vsub.f32 %v889, %v896
    %v899 = vmul.f32 %v897, 1.442695
    %v900 = vpow.pop %v899
    %v901 = vmul.f32 %v898, 1.442695
    %v902 = vpow.pop %v901
    %v903 = vsel %vm890, %v900, 0.0
    %904 = vadd.xlane.f32.xlu0 %v903
    %v905 = vpop.xlane.xlu0 %904
    %v906 = vsel %vm890, %v902, 0.0
    %907 = vadd.xlane.f32.xlu0 %v906
    %v908 = vpop.xlane.xlu0 %907
    %v909 = vrcp.pop %v905
    %v910 = vrcp.pop %v908
    %v911 = vmul.f32 %v900, %v909
    %v912 = vmul.f32 %v902, %v910
    %v914 = vsel %vm890, %v911, 0
    %v917 = vsel %vm890, %v912, 0
    %919 = vmatprep.subr.mxu0 0.0
    %920 = vmatpush1.msra.mxu0 %v709
    %921 = vmatprep.subr.mxu0 0.0
    %922 = vmatpush1.msra.mxu0 %v715
    %923 = vmatprep.subr.mxu0 0.0
    %924 = vmatpush1.msra.mxu0 0.0
    %925 = vmatprep.subr.mxu0 0.0
    %926 = vmatpush1.msra.mxu0 0.0
    %927 = vmatprep.subr.mxu0 0.0
    %928 = vmatpush1.msra.mxu0 0.0
    %929 = vmatprep.subr.mxu0 0.0
    %930 = vmatpush1.msra.mxu0 0.0
    %931 = vmatprep.subr.mxu0 0.0
    %932 = vmatpush1.msra.mxu0 0.0
    %933 = vmatprep.subr.mxu0 0.0
    %934 = vmatpush1.msra.mxu0 0.0
    %935 = vmatprep.subr.mxu0 0.0
    %936 = vmatpush1.msra.mxu0 0.0
    %937 = vmatprep.subr.mxu0 0.0
    %938 = vmatpush1.msra.mxu0 0.0
    %939 = vmatprep.subr.mxu0 0.0
    %940 = vmatpush1.msra.mxu0 0.0
    %941 = vmatprep.subr.mxu0 0.0
    %942 = vmatpush1.msra.mxu0 0.0
    %943 = vmatprep.subr.mxu0 0.0
    %944 = vmatpush1.msra.mxu0 0.0
    %945 = vmatprep.subr.mxu0 0.0
    %946 = vmatpush1.msra.mxu0 0.0
    %947 = vmatprep.subr.mxu0 0.0
    %948 = vmatpush1.msra.mxu0 0.0
    %949 = vmatprep.subr.mxu0 0.0
    %950 = vmatpush1.msra.mxu0 0.0
    %951 = vmatprep.subr.mxu0 0.0
    %952 = vmatpush1.msra.mxu0 0.0
    %953 = vmatprep.subr.mxu0 0.0
    %954 = vmatpush1.msra.mxu0 0.0
    %955 = vmatprep.subr.mxu0 0.0
    %956 = vmatpush1.msra.mxu0 0.0
    %957 = vmatprep.subr.mxu0 0.0
    %958 = vmatpush1.msra.mxu0 0.0
    %959 = vmatprep.subr.mxu0 0.0
    %960 = vmatpush1.msra.mxu0 0.0
    %961 = vmatprep.subr.mxu0 0.0
    %962 = vmatpush1.msra.mxu0 0.0
    %963 = vmatprep.subr.mxu0 0.0
    %964 = vmatpush1.msra.mxu0 0.0
    %965 = vmatprep.subr.mxu0 0.0
    %966 = vmatpush1.msra.mxu0 0.0
    %967 = vmatprep.subr.mxu0 0.0
    %968 = vmatpush1.msra.mxu0 0.0
    %969 = vmatprep.subr.mxu0 0.0
    %970 = vmatpush1.msra.mxu0 0.0
    %971 = vmatprep.subr.mxu0 0.0
    %972 = vmatpush1.msra.mxu0 0.0
    %973 = vmatprep.subr.mxu0 0.0
    %974 = vmatpush1.msra.mxu0 0.0
    %975 = vmatprep.subr.mxu0 0.0
    %976 = vmatpush1.msra.mxu0 0.0
    %977 = vmatprep.subr.mxu0 0.0
    %978 = vmatpush1.msra.mxu0 0.0
    %979 = vmatprep.subr.mxu0 0.0
    %980 = vmatpush1.msra.mxu0 0.0
    %981 = vmatprep.subr.mxu0 0.0
    %982 = vmatpush1.msra.mxu0 0.0
    %983 = vmatprep.mubr.f32.mxu0 0.0
    %984 = vmatmul.mubr.f32.gmra.mrb[0].mxu0 %v914
    %v985 = vpop.f32.mrb[0].mxu0
    %v986 = vadd.f32 0.0, %v985
    %v987 = vpop.f32.mrb[0].mxu0
    %988 = vmatprep.mubr.f32.mxu0 0.0
    %989 = vmatmul.mubr.f32.gmra.mrb[0].mxu0 %v917
    %v990 = vpop.f32.mrb[0].mxu0
    %v991 = vadd.f32 0.0, %v990
    %v992 = vpop.f32.mrb[0].mxu0
    %993 = vdwg.mxu0
    %994 = vst.msk [vmem:[#allocation2] sm:$0xff] %vm796, %v986
    %995 = vst.msk [vmem:[#allocation2 + $0x8] sm:$0xff] %vm796, %v991
    %v997 = vsel %vm796, %v403, 0
    %v1000 = vsel %vm796, %v409, 0
    %v1003 = vsel %vm796, %v557, 0
    %v1006 = vsel %vm796, %v563, 0
    %1008 = vmatprep.subr.mxu0 0.0
    %1009 = vmatpush1.xpose.msra.mxu0 %v1003
    %1010 = vmatprep.subr.mxu0 0.0
    %1011 = vmatpush1.xpose.msra.mxu0 %v1006
    %1012 = vmatprep.subr.mxu0 0.0
    %1013 = vmatpush1.xpose.msra.mxu0 0.0
    %1014 = vmatprep.subr.mxu0 0.0
    %1015 = vmatpush1.xpose.msra.mxu0 0.0
    %1016 = vmatprep.subr.mxu0 0.0
    %1017 = vmatpush1.xpose.msra.mxu0 0.0
    %1018 = vmatprep.subr.mxu0 0.0
    %1019 = vmatpush1.xpose.msra.mxu0 0.0
    %1020 = vmatprep.subr.mxu0 0.0
    %1021 = vmatpush1.xpose.msra.mxu0 0.0
    %1022 = vmatprep.subr.mxu0 0.0
    %1023 = vmatpush1.xpose.msra.mxu0 0.0
    %1024 = vmatprep.subr.mxu0 0.0
    %1025 = vmatpush1.xpose.msra.mxu0 0.0
    %1026 = vmatprep.subr.mxu0 0.0
    %1027 = vmatpush1.xpose.msra.mxu0 0.0
    %1028 = vmatprep.subr.mxu0 0.0
    %1029 = vmatpush1.xpose.msra.mxu0 0.0
    %1030 = vmatprep.subr.mxu0 0.0
    %1031 = vmatpush1.xpose.msra.mxu0 0.0
    %1032 = vmatprep.subr.mxu0 0.0
    %1033 = vmatpush1.xpose.msra.mxu0 0.0
    %1034 = vmatprep.subr.mxu0 0.0
    %1035 = vmatpush1.xpose.msra.mxu0 0.0
    %1036 = vmatprep.subr.mxu0 0.0
    %1037 = vmatpush1.xpose.msra.mxu0 0.0
    %1038 = vmatprep.subr.mxu0 0.0
    %1039 = vmatpush1.xpose.msra.mxu0 0.0
    %1040 = vmatprep.subr.mxu0 0.0
    %1041 = vmatpush1.xpose.msra.mxu0 0.0
    %1042 = vmatprep.subr.mxu0 0.0
    %1043 = vmatpush1.xpose.msra.mxu0 0.0
    %1044 = vmatprep.subr.mxu0 0.0
    %1045 = vmatpush1.xpose.msra.mxu0 0.0
    %1046 = vmatprep.subr.mxu0 0.0
    %1047 = vmatpush1.xpose.msra.mxu0 0.0
    %1048 = vmatprep.subr.mxu0 0.0
    %1049 = vmatpush1.xpose.msra.mxu0 0.0
    %1050 = vmatprep.subr.mxu0 0.0
    %1051 = vmatpush1.xpose.msra.mxu0 0.0
    %1052 = vmatprep.subr.mxu0 0.0
    %1053 = vmatpush1.xpose.msra.mxu0 0.0
    %1054 = vmatprep.subr.mxu0 0.0
    %1055 = vmatpush1.xpose.msra.mxu0 0.0
    %1056 = vmatprep.subr.mxu0 0.0
    %1057 = vmatpush1.xpose.msra.mxu0 0.0
    %1058 = vmatprep.subr.mxu0 0.0
    %1059 = vmatpush1.xpose.msra.mxu0 0.0
    %1060 = vmatprep.subr.mxu0 0.0
    %1061 = vmatpush1.xpose.msra.mxu0 0.0
    %1062 = vmatprep.subr.mxu0 0.0
    %1063 = vmatpush1.xpose.msra.mxu0 0.0
    %1064 = vmatprep.subr.mxu0 0.0
    %1065 = vmatpush1.xpose.msra.mxu0 0.0
    %1066 = vmatprep.subr.mxu0 0.0
    %1067 = vmatpush1.xpose.msra.mxu0 0.0
    %1068 = vmatprep.subr.mxu0 0.0
    %1069 = vmatpush1.xpose.msra.mxu0 0.0
    %1070 = vmatprep.subr.mxu0 0.0
    %1071 = vmatpush1.xpose.msra.mxu0 0.0
    %1072 = vmatprep.mubr.f32.mxu0 0.0
    %1073 = vmatmul.mubr.f32.gmra.mrb[0].mxu0 %v997
    %v1074 = vpop.f32.mrb[0].mxu0
    %v1075 = vadd.f32 0.0, %v1074
    %v1076 = vpop.f32.mrb[0].mxu0
    %1077 = vmatprep.mubr.f32.mxu0 0.0
    %1078 = vmatmul.mubr.f32.gmra.mrb[0].mxu0 %v1000
    %v1079 = vpop.f32.mrb[0].mxu0
    %v1080 = vadd.f32 0.0, %v1079
    %v1081 = vpop.f32.mrb[0].mxu0
    %1082 = vdwg.mxu0
    %v1083 = vmul.f32 %v1075, 0.35355338
    %v1084 = vmul.f32 %v1080, 0.35355338
    %v1085 = vsel %vm210, %v1083, -1e+09
    %v1086 = vsel %vm211, %v1084, -1e+09
    %v1087 = vsel %vm192, %v1085, -1e+30
    %v1088 = vsel %vm193, %v1086, -1e+30
    %v1089 = vsel %vm890, %v1087, -inf
    %1090 = vmax.xlane.f32.xlu0 %v1089
    %v1091 = vpop.xlane.xlu0 %1090
    %v1092 = vsel %vm890, %v1088, -inf
    %1093 = vmax.xlane.f32.xlu0 %v1092
    %v1094 = vpop.xlane.xlu0 %1093
    %v1095 = vsub.f32 %v1087, %v1091
    %v1096 = vsub.f32 %v1088, %v1094
    %v1097 = vmul.f32 %v1095, 1.442695
    %v1098 = vpow.pop %v1097
    %v1099 = vmul.f32 %v1096, 1.442695
    %v1100 = vpow.pop %v1099
    %v1101 = vsel %vm890, %v1098, 0.0
    %1102 = vadd.xlane.f32.xlu0 %v1101
    %v1103 = vpop.xlane.xlu0 %1102
    %v1104 = vsel %vm890, %v1100, 0.0
    %1105 = vadd.xlane.f32.xlu0 %v1104
    %v1106 = vpop.xlane.xlu0 %1105
    %v1107 = vrcp.pop %v1103
    %v1108 = vrcp.pop %v1106
    %v1109 = vmul.f32 %v1098, %v1107
    %v1110 = vmul.f32 %v1100, %v1108
    %v1112 = vsel %vm890, %v1109, 0
    %v1115 = vsel %vm890, %v1110, 0
    %1117 = vmatprep.subr.mxu0 0.0
    %1118 = vmatpush1.msra.mxu0 %v711
    %1119 = vmatprep.subr.mxu0 0.0
    %1120 = vmatpush1.msra.mxu0 %v717
    %1121 = vmatprep.subr.mxu0 0.0
    %1122 = vmatpush1.msra.mxu0 0.0
    %1123 = vmatprep.subr.mxu0 0.0
    %1124 = vmatpush1.msra.mxu0 0.0
    %1125 = vmatprep.subr.mxu0 0.0
    %1126 = vmatpush1.msra.mxu0 0.0
    %1127 = vmatprep.subr.mxu0 0.0
    %1128 = vmatpush1.msra.mxu0 0.0
    %1129 = vmatprep.subr.mxu0 0.0
    %1130 = vmatpush1.msra.mxu0 0.0
    %1131 = vmatprep.subr.mxu0 0.0
    %1132 = vmatpush1.msra.mxu0 0.0
    %1133 = vmatprep.subr.mxu0 0.0
    %1134 = vmatpush1.msra.mxu0 0.0
    %1135 = vmatprep.subr.mxu0 0.0
    %1136 = vmatpush1.msra.mxu0 0.0
    %1137 = vmatprep.subr.mxu0 0.0
    %1138 = vmatpush1.msra.mxu0 0.0
    %1139 = vmatprep.subr.mxu0 0.0
    %1140 = vmatpush1.msra.mxu0 0.0
    %1141 = vmatprep.subr.mxu0 0.0
    %1142 = vmatpush1.msra.mxu0 0.0
    %1143 = vmatprep.subr.mxu0 0.0
    %1144 = vmatpush1.msra.mxu0 0.0
    %1145 = vmatprep.subr.mxu0 0.0
    %1146 = vmatpush1.msra.mxu0 0.0
    %1147 = vmatprep.subr.mxu0 0.0
    %1148 = vmatpush1.msra.mxu0 0.0
    %1149 = vmatprep.subr.mxu0 0.0
    %1150 = vmatpush1.msra.mxu0 0.0
    %1151 = vmatprep.subr.mxu0 0.0
    %1152 = vmatpush1.msra.mxu0 0.0
    %1153 = vmatprep.subr.mxu0 0.0
    %1154 = vmatpush1.msra.mxu0 0.0
    %1155 = vmatprep.subr.mxu0 0.0
    %1156 = vmatpush1.msra.mxu0 0.0
    %1157 = vmatprep.subr.mxu0 0.0
    %1158 = vmatpush1.msra.mxu0 0.0
    %1159 = vmatprep.subr.mxu0 0.0
    %1160 = vmatpush1.msra.mxu0 0.0
    %1161 = vmatprep.subr.mxu0 0.0
    %1162 = vmatpush1.msra.mxu0 0.0
    %1163 = vmatprep.subr.mxu0 0.0
    %1164 = vmatpush1.msra.mxu0 0.0
    %1165 = vmatprep.subr.mxu0 0.0
    %1166 = vmatpush1.msra.mxu0 0.0
    %1167 = vmatprep.subr.mxu0 0.0
    %1168 = vmatpush1.msra.mxu0 0.0
    %1169 = vmatprep.subr.mxu0 0.0
    %1170 = vmatpush1.msra.mxu0 0.0
    %1171 = vmatprep.subr.mxu0 0.0
    %1172 = vmatpush1.msra.mxu0 0.0
    %1173 = vmatprep.subr.mxu0 0.0
    %1174 = vmatpush1.msra.mxu0 0.0
    %1175 = vmatprep.subr.mxu0 0.0
    %1176 = vmatpush1.msra.mxu0 0.0
    %1177 = vmatprep.subr.mxu0 0.0
    %1178 = vmatpush1.msra.mxu0 0.0
    %1179 = vmatprep.subr.mxu0 0.0
    %1180 = vmatpush1.msra.mxu0 0.0
    %1181 = vmatprep.mubr.f32.mxu0 0.0
    %1182 = vmatmul.mubr.f32.gmra.mrb[0].mxu0 %v1112
    %v1183 = vpop.f32.mrb[0].mxu0
    %v1184 = vadd.f32 0.0, %v1183
    %v1185 = vpop.f32.mrb[0].mxu0
    %1186 = vmatprep.mubr.f32.mxu0 0.0
    %1187 = vmatmul.mubr.f32.gmra.mrb[0].mxu0 %v1115
    %v1188 = vpop.f32.mrb[0].mxu0
    %v1189 = vadd.f32 0.0, %v1188
    %v1190 = vpop.f32.mrb[0].mxu0
    %1191 = vdwg.mxu0
    %1194 = vrot.lane.b32.xlu0 %v1184, 8
    %v1195 = vpop.permute.xlu0 %1194
    %1196 = vrot.lane.b32.xlu0 %v1189, 8
    %v1197 = vpop.permute.xlu0 %1196
    %vm1200 = vcmask 130112
    %1201 = vst.msk [vmem:[#allocation2] sm:$0xff] %vm1200, %v1195
    %1202 = vst.msk [vmem:[#allocation2 + $0x8] sm:$0xff] %vm1200, %v1197
    %v1204 = vsel %vm796, %v478, 0
    %v1207 = vsel %vm796, %v484, 0
    %v1210 = vsel %vm796, %v632, 0
    %v1213 = vsel %vm796, %v638, 0
    %1215 = vmatprep.subr.mxu0 0.0
    %1216 = vmatpush1.xpose.msra.mxu0 %v1210
    %1217 = vmatprep.subr.mxu0 0.0
    %1218 = vmatpush1.xpose.msra.mxu0 %v1213
    %1219 = vmatprep.subr.mxu0 0.0
    %1220 = vmatpush1.xpose.msra.mxu0 0.0
    %1221 = vmatprep.subr.mxu0 0.0
    %1222 = vmatpush1.xpose.msra.mxu0 0.0
    %1223 = vmatprep.subr.mxu0 0.0
    %1224 = vmatpush1.xpose.msra.mxu0 0.0
    %1225 = vmatprep.subr.mxu0 0.0
    %1226 = vmatpush1.xpose.msra.mxu0 0.0
    %1227 = vmatprep.subr.mxu0 0.0
    %1228 = vmatpush1.xpose.msra.mxu0 0.0
    %1229 = vmatprep.subr.mxu0 0.0
    %1230 = vmatpush1.xpose.msra.mxu0 0.0
    %1231 = vmatprep.subr.mxu0 0.0
    %1232 = vmatpush1.xpose.msra.mxu0 0.0
    %1233 = vmatprep.subr.mxu0 0.0
    %1234 = vmatpush1.xpose.msra.mxu0 0.0
    %1235 = vmatprep.subr.mxu0 0.0
    %1236 = vmatpush1.xpose.msra.mxu0 0.0
    %1237 = vmatprep.subr.mxu0 0.0
    %1238 = vmatpush1.xpose.msra.mxu0 0.0
    %1239 = vmatprep.subr.mxu0 0.0
    %1240 = vmatpush1.xpose.msra.mxu0 0.0
    %1241 = vmatprep.subr.mxu0 0.0
    %1242 = vmatpush1.xpose.msra.mxu0 0.0
    %1243 = vmatprep.subr.mxu0 0.0
    %1244 = vmatpush1.xpose.msra.mxu0 0.0
    %1245 = vmatprep.subr.mxu0 0.0
    %1246 = vmatpush1.xpose.msra.mxu0 0.0
    %1247 = vmatprep.subr.mxu0 0.0
    %1248 = vmatpush1.xpose.msra.mxu0 0.0
    %1249 = vmatprep.subr.mxu0 0.0
    %1250 = vmatpush1.xpose.msra.mxu0 0.0
    %1251 = vmatprep.subr.mxu0 0.0
    %1252 = vmatpush1.xpose.msra.mxu0 0.0
    %1253 = vmatprep.subr.mxu0 0.0
    %1254 = vmatpush1.xpose.msra.mxu0 0.0
    %1255 = vmatprep.subr.mxu0 0.0
    %1256 = vmatpush1.xpose.msra.mxu0 0.0
    %1257 = vmatprep.subr.mxu0 0.0
    %1258 = vmatpush1.xpose.msra.mxu0 0.0
    %1259 = vmatprep.subr.mxu0 0.0
    %1260 = vmatpush1.xpose.msra.mxu0 0.0
    %1261 = vmatprep.subr.mxu0 0.0
    %1262 = vmatpush1.xpose.msra.mxu0 0.0
    %1263 = vmatprep.subr.mxu0 0.0
    %1264 = vmatpush1.xpose.msra.mxu0 0.0
    %1265 = vmatprep.subr.mxu0 0.0
    %1266 = vmatpush1.xpose.msra.mxu0 0.0
    %1267 = vmatprep.subr.mxu0 0.0
    %1268 = vmatpush1.xpose.msra.mxu0 0.0
    %1269 = vmatprep.subr.mxu0 0.0
    %1270 = vmatpush1.xpose.msra.mxu0 0.0
    %1271 = vmatprep.subr.mxu0 0.0
    %1272 = vmatpush1.xpose.msra.mxu0 0.0
    %1273 = vmatprep.subr.mxu0 0.0
    %1274 = vmatpush1.xpose.msra.mxu0 0.0
    %1275 = vmatprep.subr.mxu0 0.0
    %1276 = vmatpush1.xpose.msra.mxu0 0.0
    %1277 = vmatprep.subr.mxu0 0.0
    %1278 = vmatpush1.xpose.msra.mxu0 0.0
    %1279 = vmatprep.mubr.f32.mxu0 0.0
    %1280 = vmatmul.mubr.f32.gmra.mrb[0].mxu0 %v1204
    %v1281 = vpop.f32.mrb[0].mxu0
    %v1282 = vadd.f32 0.0, %v1281
    %v1283 = vpop.f32.mrb[0].mxu0
    %1284 = vmatprep.mubr.f32.mxu0 0.0
    %1285 = vmatmul.mubr.f32.gmra.mrb[0].mxu0 %v1207
    %v1286 = vpop.f32.mrb[0].mxu0
    %v1287 = vadd.f32 0.0, %v1286
    %v1288 = vpop.f32.mrb[0].mxu0
    %1289 = vdwg.mxu0
    %v1290 = vmul.f32 %v1282, 0.35355338
    %v1291 = vmul.f32 %v1287, 0.35355338
    %v1292 = vsel %vm210, %v1290, -1e+09
    %v1293 = vsel %vm211, %v1291, -1e+09
    %v1294 = vsel %vm192, %v1292, -1e+30
    %v1295 = vsel %vm193, %v1293, -1e+30
    %v1296 = vsel %vm890, %v1294, -inf
    %1297 = vmax.xlane.f32.xlu0 %v1296
    %v1298 = vpop.xlane.xlu0 %1297
    %v1299 = vsel %vm890, %v1295, -inf
    %1300 = vmax.xlane.f32.xlu0 %v1299
    %v1301 = vpop.xlane.xlu0 %1300
    %v1302 = vsub.f32 %v1294, %v1298
    %v1303 = vsub.f32 %v1295, %v1301
    %v1304 = vmul.f32 %v1302, 1.442695
    %v1305 = vpow.pop %v1304
    %v1306 = vmul.f32 %v1303, 1.442695
    %v1307 = vpow.pop %v1306
    %v1308 = vsel %vm890, %v1305, 0.0
    %1309 = vadd.xlane.f32.xlu0 %v1308
    %v1310 = vpop.xlane.xlu0 %1309
    %v1311 = vsel %vm890, %v1307, 0.0
    %1312 = vadd.xlane.f32.xlu0 %v1311
    %v1313 = vpop.xlane.xlu0 %1312
    %v1314 = vrcp.pop %v1310
    %v1315 = vrcp.pop %v1313
    %v1316 = vmul.f32 %v1305, %v1314
    %v1317 = vmul.f32 %v1307, %v1315
    %v1319 = vsel %vm890, %v1316, 0
    %v1322 = vsel %vm890, %v1317, 0
    %1324 = vmatprep.subr.mxu0 0.0
    %1325 = vmatpush1.msra.mxu0 %v786
    %1326 = vmatprep.subr.mxu0 0.0
    %1327 = vmatpush1.msra.mxu0 %v792
    %1328 = vmatprep.subr.mxu0 0.0
    %1329 = vmatpush1.msra.mxu0 0.0
    %1330 = vmatprep.subr.mxu0 0.0
    %1331 = vmatpush1.msra.mxu0 0.0
    %1332 = vmatprep.subr.mxu0 0.0
    %1333 = vmatpush1.msra.mxu0 0.0
    %1334 = vmatprep.subr.mxu0 0.0
    %1335 = vmatpush1.msra.mxu0 0.0
    %1336 = vmatprep.subr.mxu0 0.0
    %1337 = vmatpush1.msra.mxu0 0.0
    %1338 = vmatprep.subr.mxu0 0.0
    %1339 = vmatpush1.msra.mxu0 0.0
    %1340 = vmatprep.subr.mxu0 0.0
    %1341 = vmatpush1.msra.mxu0 0.0
    %1342 = vmatprep.subr.mxu0 0.0
    %1343 = vmatpush1.msra.mxu0 0.0
    %1344 = vmatprep.subr.mxu0 0.0
    %1345 = vmatpush1.msra.mxu0 0.0
    %1346 = vmatprep.subr.mxu0 0.0
    %1347 = vmatpush1.msra.mxu0 0.0
    %1348 = vmatprep.subr.mxu0 0.0
    %1349 = vmatpush1.msra.mxu0 0.0
    %1350 = vmatprep.subr.mxu0 0.0
    %1351 = vmatpush1.msra.mxu0 0.0
    %1352 = vmatprep.subr.mxu0 0.0
    %1353 = vmatpush1.msra.mxu0 0.0
    %1354 = vmatprep.subr.mxu0 0.0
    %1355 = vmatpush1.msra.mxu0 0.0
    %1356 = vmatprep.subr.mxu0 0.0
    %1357 = vmatpush1.msra.mxu0 0.0
    %1358 = vmatprep.subr.mxu0 0.0
    %1359 = vmatpush1.msra.mxu0 0.0
    %1360 = vmatprep.subr.mxu0 0.0
    %1361 = vmatpush1.msra.mxu0 0.0
    %1362 = vmatprep.subr.mxu0 0.0
    %1363 = vmatpush1.msra.mxu0 0.0
    %1364 = vmatprep.subr.mxu0 0.0
    %1365 = vmatpush1.msra.mxu0 0.0
    %1366 = vmatprep.subr.mxu0 0.0
    %1367 = vmatpush1.msra.mxu0 0.0
    %1368 = vmatprep.subr.mxu0 0.0
    %1369 = vmatpush1.msra.mxu0 0.0
    %1370 = vmatprep.subr.mxu0 0.0
    %1371 = vmatpush1.msra.mxu0 0.0
    %1372 = vmatprep.subr.mxu0 0.0
    %1373 = vmatpush1.msra.mxu0 0.0
    %1374 = vmatprep.subr.mxu0 0.0
    %1375 = vmatpush1.msra.mxu0 0.0
    %1376 = vmatprep.subr.mxu0 0.0
    %1377 = vmatpush1.msra.mxu0 0.0
    %1378 = vmatprep.subr.mxu0 0.0
    %1379 = vmatpush1.msra.mxu0 0.0
    %1380 = vmatprep.subr.mxu0 0.0
    %1381 = vmatpush1.msra.mxu0 0.0
    %1382 = vmatprep.subr.mxu0 0.0
    %1383 = vmatpush1.msra.mxu0 0.0
    %1384 = vmatprep.subr.mxu0 0.0
    %1385 = vmatpush1.msra.mxu0 0.0
    %1386 = vmatprep.subr.mxu0 0.0
    %1387 = vmatpush1.msra.mxu0 0.0
    %1388 = vmatprep.mubr.f32.mxu0 0.0
    %1389 = vmatmul.mubr.f32.gmra.mrb[0].mxu0 %v1319
    %v1390 = vpop.f32.mrb[0].mxu0
    %v1391 = vadd.f32 0.0, %v1390
    %v1392 = vpop.f32.mrb[0].mxu0
    %1393 = vmatprep.mubr.f32.mxu0 0.0
    %1394 = vmatmul.mubr.f32.gmra.mrb[0].mxu0 %v1322
    %v1395 = vpop.f32.mrb[0].mxu0
    %v1396 = vadd.f32 0.0, %v1395
    %v1397 = vpop.f32.mrb[0].mxu0
    %1398 = vdwg.mxu0
    %1401 = vrot.lane.b32.xlu0 %v1391, 16
    %v1402 = vpop.permute.xlu0 %1401
    %1403 = vrot.lane.b32.xlu0 %v1396, 16
    %v1404 = vpop.permute.xlu0 %1403
    %vm1407 = vcmask 195712
    %1408 = vst.msk [vmem:[#allocation2] sm:$0xff] %vm1407, %v1402
    %1409 = vst.msk [vmem:[#allocation2 + $0x8] sm:$0xff] %vm1407, %v1404
    %v1411 = vsel %vm796, %v480, 0
    %v1414 = vsel %vm796, %v486, 0
    %v1417 = vsel %vm796, %v634, 0
    %v1420 = vsel %vm796, %v640, 0
    %1422 = vmatprep.subr.mxu0 0.0
    %1423 = vmatpush1.xpose.msra.mxu0 %v1417
    %1424 = vmatprep.subr.mxu0 0.0
    %1425 = vmatpush1.xpose.msra.mxu0 %v1420
    %1426 = vmatprep.subr.mxu0 0.0
    %1427 = vmatpush1.xpose.msra.mxu0 0.0
    %1428 = vmatprep.subr.mxu0 0.0
    %1429 = vmatpush1.xpose.msra.mxu0 0.0
    %1430 = vmatprep.subr.mxu0 0.0
    %1431 = vmatpush1.xpose.msra.mxu0 0.0
    %1432 = vmatprep.subr.mxu0 0.0
    %1433 = vmatpush1.xpose.msra.mxu0 0.0
    %1434 = vmatprep.subr.mxu0 0.0
    %1435 = vmatpush1.xpose.msra.mxu0 0.0
    %1436 = vmatprep.subr.mxu0 0.0
    %1437 = vmatpush1.xpose.msra.mxu0 0.0
    %1438 = vmatprep.subr.mxu0 0.0
    %1439 = vmatpush1.xpose.msra.mxu0 0.0
    %1440 = vmatprep.subr.mxu0 0.0
    %1441 = vmatpush1.xpose.msra.mxu0 0.0
    %1442 = vmatprep.subr.mxu0 0.0
    %1443 = vmatpush1.xpose.msra.mxu0 0.0
    %1444 = vmatprep.subr.mxu0 0.0
    %1445 = vmatpush1.xpose.msra.mxu0 0.0
    %1446 = vmatprep.subr.mxu0 0.0
    %1447 = vmatpush1.xpose.msra.mxu0 0.0
    %1448 = vmatprep.subr.mxu0 0.0
    %1449 = vmatpush1.xpose.msra.mxu0 0.0
    %1450 = vmatprep.subr.mxu0 0.0
    %1451 = vmatpush1.xpose.msra.mxu0 0.0
    %1452 = vmatprep.subr.mxu0 0.0
    %1453 = vmatpush1.xpose.msra.mxu0 0.0
    %1454 = vmatprep.subr.mxu0 0.0
    %1455 = vmatpush1.xpose.msra.mxu0 0.0
    %1456 = vmatprep.subr.mxu0 0.0
    %1457 = vmatpush1.xpose.msra.mxu0 0.0
    %1458 = vmatprep.subr.mxu0 0.0
    %1459 = vmatpush1.xpose.msra.mxu0 0.0
    %1460 = vmatprep.subr.mxu0 0.0
    %1461 = vmatpush1.xpose.msra.mxu0 0.0
    %1462 = vmatprep.subr.mxu0 0.0
    %1463 = vmatpush1.xpose.msra.mxu0 0.0
    %1464 = vmatprep.subr.mxu0 0.0
    %1465 = vmatpush1.xpose.msra.mxu0 0.0
    %1466 = vmatprep.subr.mxu0 0.0
    %1467 = vmatpush1.xpose.msra.mxu0 0.0
    %1468 = vmatprep.subr.mxu0 0.0
    %1469 = vmatpush1.xpose.msra.mxu0 0.0
    %1470 = vmatprep.subr.mxu0 0.0
    %1471 = vmatpush1.xpose.msra.mxu0 0.0
    %1472 = vmatprep.subr.mxu0 0.0
    %1473 = vmatpush1.xpose.msra.mxu0 0.0
    %1474 = vmatprep.subr.mxu0 0.0
    %1475 = vmatpush1.xpose.msra.mxu0 0.0
    %1476 = vmatprep.subr.mxu0 0.0
    %1477 = vmatpush1.xpose.msra.mxu0 0.0
    %1478 = vmatprep.subr.mxu0 0.0
    %1479 = vmatpush1.xpose.msra.mxu0 0.0
    %1480 = vmatprep.subr.mxu0 0.0
    %1481 = vmatpush1.xpose.msra.mxu0 0.0
    %1482 = vmatprep.subr.mxu0 0.0
    %1483 = vmatpush1.xpose.msra.mxu0 0.0
    %1484 = vmatprep.subr.mxu0 0.0
    %1485 = vmatpush1.xpose.msra.mxu0 0.0
    %1486 = vmatprep.mubr.f32.mxu0 0.0
    %1487 = vmatmul.mubr.f32.gmra.mrb[0].mxu0 %v1411
    %v1488 = vpop.f32.mrb[0].mxu0
    %v1489 = vadd.f32 0.0, %v1488
    %v1490 = vpop.f32.mrb[0].mxu0
    %1491 = vmatprep.mubr.f32.mxu0 0.0
    %1492 = vmatmul.mubr.f32.gmra.mrb[0].mxu0 %v1414
    %v1493 = vpop.f32.mrb[0].mxu0
    %v1494 = vadd.f32 0.0, %v1493
    %v1495 = vpop.f32.mrb[0].mxu0
    %1496 = vdwg.mxu0
    %v1497 = vmul.f32 %v1489, 0.35355338
    %v1498 = vmul.f32 %v1494, 0.35355338
    %v1499 = vsel %vm210, %v1497, -1e+09
    %v1500 = vsel %vm211, %v1498, -1e+09
    %v1501 = vsel %vm192, %v1499, -1e+30
    %v1502 = vsel %vm193, %v1500, -1e+30
    %v1503 = vsel %vm890, %v1501, -inf
    %1504 = vmax.xlane.f32.xlu0 %v1503
    %v1505 = vpop.xlane.xlu0 %1504
    %v1506 = vsel %vm890, %v1502, -inf
    %1507 = vmax.xlane.f32.xlu0 %v1506
    %v1508 = vpop.xlane.xlu0 %1507
    %v1509 = vsub.f32 %v1501, %v1505
    %v1510 = vsub.f32 %v1502, %v1508
    %v1511 = vmul.f32 %v1509, 1.442695
    %v1512 = vpow.pop %v1511
    %v1513 = vmul.f32 %v1510, 1.442695
    %v1514 = vpow.pop %v1513
    %v1515 = vsel %vm890, %v1512, 0.0
    %1516 = vadd.xlane.f32.xlu0 %v1515
    %v1517 = vpop.xlane.xlu0 %1516
    %v1518 = vsel %vm890, %v1514, 0.0
    %1519 = vadd.xlane.f32.xlu0 %v1518
    %v1520 = vpop.xlane.xlu0 %1519
    %v1521 = vrcp.pop %v1517
    %v1522 = vrcp.pop %v1520
    %v1523 = vmul.f32 %v1512, %v1521
    %v1524 = vmul.f32 %v1514, %v1522
    %v1526 = vsel %vm890, %v1523, 0
    %v1529 = vsel %vm890, %v1524, 0
    %1531 = vmatprep.subr.mxu0 0.0
    %1532 = vmatpush1.msra.mxu0 %v788
    %1533 = vmatprep.subr.mxu0 0.0
    %1534 = vmatpush1.msra.mxu0 %v794
    %1535 = vmatprep.subr.mxu0 0.0
    %1536 = vmatpush1.msra.mxu0 0.0
    %1537 = vmatprep.subr.mxu0 0.0
    %1538 = vmatpush1.msra.mxu0 0.0
    %1539 = vmatprep.subr.mxu0 0.0
    %1540 = vmatpush1.msra.mxu0 0.0
    %1541 = vmatprep.subr.mxu0 0.0
    %1542 = vmatpush1.msra.mxu0 0.0
    %1543 = vmatprep.subr.mxu0 0.0
    %1544 = vmatpush1.msra.mxu0 0.0
    %1545 = vmatprep.subr.mxu0 0.0
    %1546 = vmatpush1.msra.mxu0 0.0
    %1547 = vmatprep.subr.mxu0 0.0
    %1548 = vmatpush1.msra.mxu0 0.0
    %1549 = vmatprep.subr.mxu0 0.0
    %1550 = vmatpush1.msra.mxu0 0.0
    %1551 = vmatprep.subr.mxu0 0.0
    %1552 = vmatpush1.msra.mxu0 0.0
    %1553 = vmatprep.subr.mxu0 0.0
    %1554 = vmatpush1.msra.mxu0 0.0
    %1555 = vmatprep.subr.mxu0 0.0
    %1556 = vmatpush1.msra.mxu0 0.0
    %1557 = vmatprep.subr.mxu0 0.0
    %1558 = vmatpush1.msra.mxu0 0.0
    %1559 = vmatprep.subr.mxu0 0.0
    %1560 = vmatpush1.msra.mxu0 0.0
    %1561 = vmatprep.subr.mxu0 0.0
    %1562 = vmatpush1.msra.mxu0 0.0
    %1563 = vmatprep.subr.mxu0 0.0
    %1564 = vmatpush1.msra.mxu0 0.0
    %1565 = vmatprep.subr.mxu0 0.0
    %1566 = vmatpush1.msra.mxu0 0.0
    %1567 = vmatprep.subr.mxu0 0.0
    %1568 = vmatpush1.msra.mxu0 0.0
    %1569 = vmatprep.subr.mxu0 0.0
    %1570 = vmatpush1.msra.mxu0 0.0
    %1571 = vmatprep.subr.mxu0 0.0
    %1572 = vmatpush1.msra.mxu0 0.0
    %1573 = vmatprep.subr.mxu0 0.0
    %1574 = vmatpush1.msra.mxu0 0.0
    %1575 = vmatprep.subr.mxu0 0.0
    %1576 = vmatpush1.msra.mxu0 0.0
    %1577 = vmatprep.subr.mxu0 0.0
    %1578 = vmatpush1.msra.mxu0 0.0
    %1579 = vmatprep.subr.mxu0 0.0
    %1580 = vmatpush1.msra.mxu0 0.0
    %1581 = vmatprep.subr.mxu0 0.0
    %1582 = vmatpush1.msra.mxu0 0.0
    %1583 = vmatprep.subr.mxu0 0.0
    %1584 = vmatpush1.msra.mxu0 0.0
    %1585 = vmatprep.subr.mxu0 0.0
    %1586 = vmatpush1.msra.mxu0 0.0
    %1587 = vmatprep.subr.mxu0 0.0
    %1588 = vmatpush1.msra.mxu0 0.0
    %1589 = vmatprep.subr.mxu0 0.0
    %1590 = vmatpush1.msra.mxu0 0.0
    %1591 = vmatprep.subr.mxu0 0.0
    %1592 = vmatpush1.msra.mxu0 0.0
    %1593 = vmatprep.subr.mxu0 0.0
    %1594 = vmatpush1.msra.mxu0 0.0
    %1595 = vmatprep.mubr.f32.mxu0 0.0
    %1596 = vmatmul.mubr.f32.gmra.mrb[0].mxu0 %v1526
    %v1597 = vpop.f32.mrb[0].mxu0
    %v1598 = vadd.f32 0.0, %v1597
    %v1599 = vpop.f32.mrb[0].mxu0
    %1600 = vmatprep.mubr.f32.mxu0 0.0
    %1601 = vmatmul.mubr.f32.gmra.mrb[0].mxu0 %v1529
    %v1602 = vpop.f32.mrb[0].mxu0
    %v1603 = vadd.f32 0.0, %v1602
    %v1604 = vpop.f32.mrb[0].mxu0
    %1605 = vdwg.mxu0
    %1608 = vrot.lane.b32.xlu0 %v1598, 24
    %v1609 = vpop.permute.xlu0 %1608
    %1610 = vrot.lane.b32.xlu0 %v1603, 24
    %v1611 = vpop.permute.xlu0 %1610
    %vm1614 = vcmask 261312
    %1615 = vst.msk [vmem:[#allocation2] sm:$0xff] %vm1614, %v1609
    %1616 = vst.msk [vmem:[#allocation2 + $0x8] sm:$0xff] %vm1614, %v1611
    %v1617 = vld [vmem:[#allocation2] sm:$0xff]
    %v1618 = vld [vmem:[#allocation2 + $0x8] sm:$0xff]
    %v1619 = vld [vmem:[#allocation3 + $0x60] sm:$0xff]
    %v1620 = vld [vmem:[#allocation3 + $0xd8] sm:$0xff]
    %v1621 = vld [vmem:[#allocation3 + $0x150] sm:$0xff]
    %v1622 = vld [vmem:[#allocation3 + $0x1c8] sm:$0xff]
    %v1623 = vld [vmem:[#allocation5 + $0x60] ss:$0 sm:$0xff]
    %v1625 = vsel %vm327, %v1617, 0
    %v1628 = vsel %vm327, %v1618, 0
    %1630 = vmatprep.subr.mxu0 0.0
    %1631 = vmatpush1.msra.mxu0 %v1619
    %1632 = vmatprep.subr.mxu0 0.0
    %1633 = vmatpush1.msra.mxu0 %v1620
    %1634 = vmatprep.subr.mxu0 0.0
    %1635 = vmatpush1.msra.mxu0 %v1621
    %1636 = vmatprep.subr.mxu0 0.0
    %1637 = vmatpush1.msra.mxu0 %v1622
    %1638 = vmatprep.subr.mxu0 0.0
    %1639 = vmatpush1.msra.mxu0 0.0
    %1640 = vmatprep.subr.mxu0 0.0
    %1641 = vmatpush1.msra.mxu0 0.0
    %1642 = vmatprep.subr.mxu0 0.0
    %1643 = vmatpush1.msra.mxu0 0.0
    %1644 = vmatprep.subr.mxu0 0.0
    %1645 = vmatpush1.msra.mxu0 0.0
    %1646 = vmatprep.subr.mxu0 0.0
    %1647 = vmatpush1.msra.mxu0 0.0
    %1648 = vmatprep.subr.mxu0 0.0
    %1649 = vmatpush1.msra.mxu0 0.0
    %1650 = vmatprep.subr.mxu0 0.0
    %1651 = vmatpush1.msra.mxu0 0.0
    %1652 = vmatprep.subr.mxu0 0.0
    %1653 = vmatpush1.msra.mxu0 0.0
    %1654 = vmatprep.subr.mxu0 0.0
    %1655 = vmatpush1.msra.mxu0 0.0
    %1656 = vmatprep.subr.mxu0 0.0
    %1657 = vmatpush1.msra.mxu0 0.0
    %1658 = vmatprep.subr.mxu0 0.0
    %1659 = vmatpush1.msra.mxu0 0.0
    %1660 = vmatprep.subr.mxu0 0.0
    %1661 = vmatpush1.msra.mxu0 0.0
    %1662 = vmatprep.subr.mxu0 0.0
    %1663 = vmatpush1.msra.mxu0 0.0
    %1664 = vmatprep.subr.mxu0 0.0
    %1665 = vmatpush1.msra.mxu0 0.0
    %1666 = vmatprep.subr.mxu0 0.0
    %1667 = vmatpush1.msra.mxu0 0.0
    %1668 = vmatprep.subr.mxu0 0.0
    %1669 = vmatpush1.msra.mxu0 0.0
    %1670 = vmatprep.subr.mxu0 0.0
    %1671 = vmatpush1.msra.mxu0 0.0
    %1672 = vmatprep.subr.mxu0 0.0
    %1673 = vmatpush1.msra.mxu0 0.0
    %1674 = vmatprep.subr.mxu0 0.0
    %1675 = vmatpush1.msra.mxu0 0.0
    %1676 = vmatprep.subr.mxu0 0.0
    %1677 = vmatpush1.msra.mxu0 0.0
    %1678 = vmatprep.subr.mxu0 0.0
    %1679 = vmatpush1.msra.mxu0 0.0
    %1680 = vmatprep.subr.mxu0 0.0
    %1681 = vmatpush1.msra.mxu0 0.0
    %1682 = vmatprep.subr.mxu0 0.0
    %1683 = vmatpush1.msra.mxu0 0.0
    %1684 = vmatprep.subr.mxu0 0.0
    %1685 = vmatpush1.msra.mxu0 0.0
    %1686 = vmatprep.subr.mxu0 0.0
    %1687 = vmatpush1.msra.mxu0 0.0
    %1688 = vmatprep.subr.mxu0 0.0
    %1689 = vmatpush1.msra.mxu0 0.0
    %1690 = vmatprep.subr.mxu0 0.0
    %1691 = vmatpush1.msra.mxu0 0.0
    %1692 = vmatprep.subr.mxu0 0.0
    %1693 = vmatpush1.msra.mxu0 0.0
    %1694 = vmatprep.mubr.f32.mxu0 0.0
    %1695 = vmatmul.mubr.f32.gmra.mrb[0].mxu0 %v1625
    %v1696 = vpop.f32.mrb[0].mxu0
    %v1697 = vadd.f32 %v1623, %v1696
    %v1698 = vpop.f32.mrb[0].mxu0
    %1699 = vmatprep.mubr.f32.mxu0 0.0
    %1700 = vmatmul.mubr.f32.gmra.mrb[0].mxu0 %v1628
    %v1701 = vpop.f32.mrb[0].mxu0
    %v1702 = vadd.f32 %v1623, %v1701
    %v1703 = vpop.f32.mrb[0].mxu0
    %1704 = vdwg.mxu0
    %v1705 = vadd.f32 %v157, %v1697
    %v1706 = vadd.f32 %v162, %v1702
    %v1707 = vld [vmem:[#allocation5 + $0x1] ss:$0 sm:$0xff]
    %v1708 = vld [vmem:[#allocation5 + $0x2] ss:$0 sm:$0xff]
    %v1709 = vsel %vm327, %v1705, 0.0
    %1710 = vadd.xlane.f32.xlu0 %v1709
    %v1711 = vpop.xlane.xlu0 %1710
    %v1712 = vsel %vm327, %v1706, 0.0
    %1713 = vadd.xlane.f32.xlu0 %v1712
    %v1714 = vpop.xlane.xlu0 %1713
    %v1715 = vrcp.pop 32.0
    %v1716 = vmul.f32 %v1711, %v1715
    %v1717 = vmul.f32 %v1714, %v1715
    %v1718 = vsub.f32 %v1705, %v1716
    %v1719 = vsub.f32 %v1706, %v1717
    %v1720 = vmul.f32 %v1718, %v1718
    %v1721 = vmul.f32 %v1719, %v1719
    %v1722 = vsel %vm327, %v1720, 0.0
    %1723 = vadd.xlane.f32.xlu0 %v1722
    %v1724 = vpop.xlane.xlu0 %1723
    %v1725 = vsel %vm327, %v1721, 0.0
    %1726 = vadd.xlane.f32.xlu0 %v1725
    %v1727 = vpop.xlane.xlu0 %1726
    %v1728 = vmul.f32 %v1724, %v1715
    %v1729 = vmul.f32 %v1727, %v1715
    %v1730 = vadd.f32 %v1728, 1e-05
    %v1731 = vadd.f32 %v1729, 1e-05
    %v1732 = vrsqrt.pop %v1730
    %v1733 = vrsqrt.pop %v1731
    %v1734 = vmul.f32 %v1718, %v1732
    %v1735 = vmul.f32 %v1719, %v1733
    %v1736 = vmul.f32 %v1734, %v1707
    %v1737 = vmul.f32 %v1735, %v1707
    %v1738 = vadd.f32 %v1736, %v1708
    %v1739 = vadd.f32 %v1737, %v1708
    %v1740 = vld [vmem:[#allocation3 + $0x68] sm:$0xff]
    %v1741 = vld [vmem:[#allocation3 + $0xe0] sm:$0xff]
    %v1742 = vld [vmem:[#allocation3 + $0x158] sm:$0xff]
    %v1743 = vld [vmem:[#allocation3 + $0x1d0] sm:$0xff]
    %v1744 = vld [vmem:[#allocation5 + $0x68] ss:$0 sm:$0xff]
    %v1746 = vsel %vm327, %v1738, 0
    %v1749 = vsel %vm327, %v1739, 0
    %1751 = vmatprep.subr.mxu0 0.0
    %1752 = vmatpush1.msra.mxu0 %v1740
    %1753 = vmatprep.subr.mxu0 0.0
    %1754 = vmatpush1.msra.mxu0 %v1741
    %1755 = vmatprep.subr.mxu0 0.0
    %1756 = vmatpush1.msra.mxu0 %v1742
    %1757 = vmatprep.subr.mxu0 0.0
    %1758 = vmatpush1.msra.mxu0 %v1743
    %1759 = vmatprep.subr.mxu0 0.0
    %1760 = vmatpush1.msra.mxu0 0.0
    %1761 = vmatprep.subr.mxu0 0.0
    %1762 = vmatpush1.msra.mxu0 0.0
    %1763 = vmatprep.subr.mxu0 0.0
    %1764 = vmatpush1.msra.mxu0 0.0
    %1765 = vmatprep.subr.mxu0 0.0
    %1766 = vmatpush1.msra.mxu0 0.0
    %1767 = vmatprep.subr.mxu0 0.0
    %1768 = vmatpush1.msra.mxu0 0.0
    %1769 = vmatprep.subr.mxu0 0.0
    %1770 = vmatpush1.msra.mxu0 0.0
    %1771 = vmatprep.subr.mxu0 0.0
    %1772 = vmatpush1.msra.mxu0 0.0
    %1773 = vmatprep.subr.mxu0 0.0
    %1774 = vmatpush1.msra.mxu0 0.0
    %1775 = vmatprep.subr.mxu0 0.0
    %1776 = vmatpush1.msra.mxu0 0.0
    %1777 = vmatprep.subr.mxu0 0.0
    %1778 = vmatpush1.msra.mxu0 0.0
    %1779 = vmatprep.subr.mxu0 0.0
    %1780 = vmatpush1.msra.mxu0 0.0
    %1781 = vmatprep.subr.mxu0 0.0
    %1782 = vmatpush1.msra.mxu0 0.0
    %1783 = vmatprep.subr.mxu0 0.0
    %1784 = vmatpush1.msra.mxu0 0.0
    %1785 = vmatprep.subr.mxu0 0.0
    %1786 = vmatpush1.msra.mxu0 0.0
    %1787 = vmatprep.subr.mxu0 0.0
    %1788 = vmatpush1.msra.mxu0 0.0
    %1789 = vmatprep.subr.mxu0 0.0
    %1790 = vmatpush1.msra.mxu0 0.0
    %1791 = vmatprep.subr.mxu0 0.0
    %1792 = vmatpush1.msra.mxu0 0.0
    %1793 = vmatprep.subr.mxu0 0.0
    %1794 = vmatpush1.msra.mxu0 0.0
    %1795 = vmatprep.subr.mxu0 0.0
    %1796 = vmatpush1.msra.mxu0 0.0
    %1797 = vmatprep.subr.mxu0 0.0
    %1798 = vmatpush1.msra.mxu0 0.0
    %1799 = vmatprep.subr.mxu0 0.0
    %1800 = vmatpush1.msra.mxu0 0.0
    %1801 = vmatprep.subr.mxu0 0.0
    %1802 = vmatpush1.msra.mxu0 0.0
    %1803 = vmatprep.subr.mxu0 0.0
    %1804 = vmatpush1.msra.mxu0 0.0
    %1805 = vmatprep.subr.mxu0 0.0
    %1806 = vmatpush1.msra.mxu0 0.0
    %1807 = vmatprep.subr.mxu0 0.0
    %1808 = vmatpush1.msra.mxu0 0.0
    %1809 = vmatprep.subr.mxu0 0.0
    %1810 = vmatpush1.msra.mxu0 0.0
    %1811 = vmatprep.subr.mxu0 0.0
    %1812 = vmatpush1.msra.mxu0 0.0
    %1813 = vmatprep.subr.mxu0 0.0
    %1814 = vmatpush1.msra.mxu0 0.0
    %1815 = vmatprep.mubr.f32.mxu0 0.0
    %1816 = vmatmul.mubr.f32.gmra.mrb[0].mxu0 %v1746
    %v1817 = vpop.f32.mrb[0].mxu0
    %v1818 = vadd.f32 %v1744, %v1817
    %v1819 = vpop.f32.mrb[0].mxu0
    %1820 = vmatprep.mubr.f32.mxu0 0.0
    %1821 = vmatmul.mubr.f32.gmra.mrb[0].mxu0 %v1749
    %v1822 = vpop.f32.mrb[0].mxu0
    %v1823 = vadd.f32 %v1744, %v1822
    %v1824 = vpop.f32.mrb[0].mxu0
    %1825 = vdwg.mxu0
    %v1826 = vmax.f32 %v1818, 0.0
    %v1827 = vmax.f32 %v1823, 0.0
    %v1828 = vld [vmem:[#allocation3 + $0x70] sm:$0xff]
    %v1829 = vld [vmem:[#allocation3 + $0xe8] sm:$0xff]
    %v1830 = vld [vmem:[#allocation3 + $0x160] sm:$0xff]
    %v1831 = vld [vmem:[#allocation3 + $0x1d8] sm:$0xff]
    %v1832 = vld [vmem:[#allocation3 + $0x250] sm:$0xff]
    %v1833 = vld [vmem:[#allocation3 + $0x2c8] sm:$0xff]
    %v1834 = vld [vmem:[#allocation3 + $0x340] sm:$0xff]
    %v1835 = vld [vmem:[#allocation3 + $0x3b8] sm:$0xff]
    %v1836 = vld [vmem:[#allocation5 + $0x70] ss:$0 sm:$0xff]
    %vm1837 = vcmask 523264
    %v1839 = vsel %vm1837, %v1826, 0
    %v1842 = vsel %vm1837, %v1827, 0
    %1844 = vmatprep.subr.mxu0 0.0
    %1845 = vmatpush1.msra.mxu0 %v1828
    %1846 = vmatprep.subr.mxu0 0.0
    %1847 = vmatpush1.msra.mxu0 %v1829
    %1848 = vmatprep.subr.mxu0 0.0
    %1849 = vmatpush1.msra.mxu0 %v1830
    %1850 = vmatprep.subr.mxu0 0.0
    %1851 = vmatpush1.msra.mxu0 %v1831
    %1852 = vmatprep.subr.mxu0 0.0
    %1853 = vmatpush1.msra.mxu0 %v1832
    %1854 = vmatprep.subr.mxu0 0.0
    %1855 = vmatpush1.msra.mxu0 %v1833
    %1856 = vmatprep.subr.mxu0 0.0
    %1857 = vmatpush1.msra.mxu0 %v1834
    %1858 = vmatprep.subr.mxu0 0.0
    %1859 = vmatpush1.msra.mxu0 %v1835
    %1860 = vmatprep.subr.mxu0 0.0
    %1861 = vmatpush1.msra.mxu0 0.0
    %1862 = vmatprep.subr.mxu0 0.0
    %1863 = vmatpush1.msra.mxu0 0.0
    %1864 = vmatprep.subr.mxu0 0.0
    %1865 = vmatpush1.msra.mxu0 0.0
    %1866 = vmatprep.subr.mxu0 0.0
    %1867 = vmatpush1.msra.mxu0 0.0
    %1868 = vmatprep.subr.mxu0 0.0
    %1869 = vmatpush1.msra.mxu0 0.0
    %1870 = vmatprep.subr.mxu0 0.0
    %1871 = vmatpush1.msra.mxu0 0.0
    %1872 = vmatprep.subr.mxu0 0.0
    %1873 = vmatpush1.msra.mxu0 0.0
    %1874 = vmatprep.subr.mxu0 0.0
    %1875 = vmatpush1.msra.mxu0 0.0
    %1876 = vmatprep.subr.mxu0 0.0
    %1877 = vmatpush1.msra.mxu0 0.0
    %1878 = vmatprep.subr.mxu0 0.0
    %1879 = vmatpush1.msra.mxu0 0.0
    %1880 = vmatprep.subr.mxu0 0.0
    %1881 = vmatpush1.msra.mxu0 0.0
    %1882 = vmatprep.subr.mxu0 0.0
    %1883 = vmatpush1.msra.mxu0 0.0
    %1884 = vmatprep.subr.mxu0 0.0
    %1885 = vmatpush1.msra.mxu0 0.0
    %1886 = vmatprep.subr.mxu0 0.0
    %1887 = vmatpush1.msra.mxu0 0.0
    %1888 = vmatprep.subr.mxu0 0.0
    %1889 = vmatpush1.msra.mxu0 0.0
    %1890 = vmatprep.subr.mxu0 0.0
    %1891 = vmatpush1.msra.mxu0 0.0
    %1892 = vmatprep.subr.mxu0 0.0
    %1893 = vmatpush1.msra.mxu0 0.0
    %1894 = vmatprep.subr.mxu0 0.0
    %1895 = vmatpush1.msra.mxu0 0.0
    %1896 = vmatprep.subr.mxu0 0.0
    %1897 = vmatpush1.msra.mxu0 0.0
    %1898 = vmatprep.subr.mxu0 0.0
    %1899 = vmatpush1.msra.mxu0 0.0
    %1900 = vmatprep.subr.mxu0 0.0
    %1901 = vmatpush1.msra.mxu0 0.0
    %1902 = vmatprep.subr.mxu0 0.0
    %1903 = vmatpush1.msra.mxu0 0.0
    %1904 = vmatprep.subr.mxu0 0.0
    %1905 = vmatpush1.msra.mxu0 0.0
    %1906 = vmatprep.subr.mxu0 0.0
    %1907 = vmatpush1.msra.mxu0 0.0
    %1908 = vmatprep.mubr.f32.mxu0 0.0
    %1909 = vmatmul.mubr.f32.gmra.mrb[0].mxu0 %v1839
    %v1910 = vpop.f32.mrb[0].mxu0
    %v1911 = vadd.f32 %v1836, %v1910
    %v1912 = vpop.f32.mrb[0].mxu0
    %1913 = vmatprep.mubr.f32.mxu0 0.0
    %1914 = vmatmul.mubr.f32.gmra.mrb[0].mxu0 %v1842
    %v1915 = vpop.f32.mrb[0].mxu0
    %v1916 = vadd.f32 %v1836, %v1915
    %v1917 = vpop.f32.mrb[0].mxu0
    %1918 = vdwg.mxu0
    %v1919 = vadd.f32 %v1738, %v1911
    %v1920 = vadd.f32 %v1739, %v1916
    %v1921 = vld [vmem:[#allocation5 + $0x3] ss:$0 sm:$0xff]
    %v1922 = vld [vmem:[#allocation5 + $0x4] ss:$0 sm:$0xff]
    %v1923 = vsel %vm327, %v1919, 0.0
    %1924 = vadd.xlane.f32.xlu0 %v1923
    %v1925 = vpop.xlane.xlu0 %1924
    %v1926 = vsel %vm327, %v1920, 0.0
    %1927 = vadd.xlane.f32.xlu0 %v1926
    %v1928 = vpop.xlane.xlu0 %1927
    %v1929 = vmul.f32 %v1925, %v1715
    %v1930 = vmul.f32 %v1928, %v1715
    %v1931 = vsub.f32 %v1919, %v1929
    %v1932 = vsub.f32 %v1920, %v1930
    %v1933 = vmul.f32 %v1931, %v1931
    %v1934 = vmul.f32 %v1932, %v1932
    %v1935 = vsel %vm327, %v1933, 0.0
    %1936 = vadd.xlane.f32.xlu0 %v1935
    %v1937 = vpop.xlane.xlu0 %1936
    %v1938 = vsel %vm327, %v1934, 0.0
    %1939 = vadd.xlane.f32.xlu0 %v1938
    %v1940 = vpop.xlane.xlu0 %1939
    %v1941 = vmul.f32 %v1937, %v1715
    %v1942 = vmul.f32 %v1940, %v1715
    %v1943 = vadd.f32 %v1941, 1e-05
    %v1944 = vadd.f32 %v1942, 1e-05
    %v1945 = vrsqrt.pop %v1943
    %v1946 = vrsqrt.pop %v1944
    %v1947 = vmul.f32 %v1931, %v1945
    %v1948 = vmul.f32 %v1932, %v1946
    %v1949 = vmul.f32 %v1947, %v1921
    %v1950 = vmul.f32 %v1948, %v1921
    %v1951 = vadd.f32 %v1949, %v1922
    %v1952 = vadd.f32 %v1950, %v1922
    %s1953 = scalar_lea.vmem [#allocation3], 960
    %v1954 = vld [vmem:[%s1953] sm:$0xff]
    %v1955 = vld [vmem:[%s1953 + $0x8] sm:$0xff]
    %v1956 = vld [vmem:[%s1953 + $0x10] sm:$0xff]
    %v1957 = vld [vmem:[%s1953 + $0x18] sm:$0xff]
    %v1958 = vld [vmem:[%s1953 + $0x20] sm:$0xff]
    %v1959 = vld [vmem:[%s1953 + $0x28] sm:$0xff]
    %v1960 = vld [vmem:[%s1953 + $0x30] sm:$0xff]
    %v1961 = vld [vmem:[%s1953 + $0x38] sm:$0xff]
    %v1962 = vld [vmem:[%s1953 + $0x40] sm:$0xff]
    %v1963 = vld [vmem:[%s1953 + $0x48] sm:$0xff]
    %v1964 = vld [vmem:[%s1953 + $0x50] sm:$0xff]
    %v1965 = vld [vmem:[%s1953 + $0x58] sm:$0xff]
    %v1966 = vld [vmem:[%s1953 + $0x78] sm:$0xff]
    %v1967 = vld [vmem:[%s1953 + $0x80] sm:$0xff]
    %v1968 = vld [vmem:[%s1953 + $0x88] sm:$0xff]
    %v1969 = vld [vmem:[%s1953 + $0x90] sm:$0xff]
    %v1970 = vld [vmem:[%s1953 + $0x98] sm:$0xff]
    %v1971 = vld [vmem:[%s1953 + $0xa0] sm:$0xff]
    %v1972 = vld [vmem:[%s1953 + $0xa8] sm:$0xff]
    %v1973 = vld [vmem:[%s1953 + $0xb0] sm:$0xff]
    %v1974 = vld [vmem:[%s1953 + $0xb8] sm:$0xff]
    %v1975 = vld [vmem:[%s1953 + $0xc0] sm:$0xff]
    %v1976 = vld [vmem:[%s1953 + $0xc8] sm:$0xff]
    %v1977 = vld [vmem:[%s1953 + $0xd0] sm:$0xff]
    %v1978 = vld [vmem:[%s1953 + $0xf0] sm:$0xff]
    %v1979 = vld [vmem:[%s1953 + $0xf8] sm:$0xff]
    %v1980 = vld [vmem:[%s1953 + $0x100] sm:$0xff]
    %v1981 = vld [vmem:[%s1953 + $0x108] sm:$0xff]
    %v1982 = vld [vmem:[%s1953 + $0x110] sm:$0xff]
    %v1983 = vld [vmem:[%s1953 + $0x118] sm:$0xff]
    %v1984 = vld [vmem:[%s1953 + $0x120] sm:$0xff]
    %v1985 = vld [vmem:[%s1953 + $0x128] sm:$0xff]
    %v1986 = vld [vmem:[%s1953 + $0x130] sm:$0xff]
    %v1987 = vld [vmem:[%s1953 + $0x138] sm:$0xff]
    %v1988 = vld [vmem:[%s1953 + $0x140] sm:$0xff]
    %v1989 = vld [vmem:[%s1953 + $0x148] sm:$0xff]
    %v1990 = vld [vmem:[%s1953 + $0x168] sm:$0xff]
    %v1991 = vld [vmem:[%s1953 + $0x170] sm:$0xff]
    %v1992 = vld [vmem:[%s1953 + $0x178] sm:$0xff]
    %v1993 = vld [vmem:[%s1953 + $0x180] sm:$0xff]
    %v1994 = vld [vmem:[%s1953 + $0x188] sm:$0xff]
    %v1995 = vld [vmem:[%s1953 + $0x190] sm:$0xff]
    %v1996 = vld [vmem:[%s1953 + $0x198] sm:$0xff]
    %v1997 = vld [vmem:[%s1953 + $0x1a0] sm:$0xff]
    %v1998 = vld [vmem:[%s1953 + $0x1a8] sm:$0xff]
    %v1999 = vld [vmem:[%s1953 + $0x1b0] sm:$0xff]
    %v2000 = vld [vmem:[%s1953 + $0x1b8] sm:$0xff]
    %v2001 = vld [vmem:[%s1953 + $0x1c0] sm:$0xff]
    %s2002 = scalar_lea.vmem [#allocation5], 120
    %v2003 = vld [vmem:[%s2002] ss:$8 sm:$0xf]
    %v2004 = vld [vmem:[%s2002] ss:$8 sm:$0xf0]
    %v2005 = vor.u32 %v2003, %v2004
    %s2006 = scalar_lea.vmem %s2002, 64 [#allocation5]
    %v2007 = vld [vmem:[%s2006] ss:$8 sm:$0xf]
    %v2010 = vlaneseq
    %v2011 = vshrl.u32 %v2010, 7
    %v2012 = vsub.s32 0, %v2011
    %v2013 = vrot.slane %v2005, %v2012
    %v2014 = vlaneseq
    %v2015 = vshrl.u32 %v2014, 7
    %v2016 = vsub.s32 1, %v2015
    %v2017 = vrot.slane %v2005, %v2016
    %v2018 = vlaneseq
    %v2019 = vshrl.u32 %v2018, 7
    %v2020 = vsub.s32 2, %v2019
    %v2021 = vrot.slane %v2005, %v2020
    %v2022 = vlaneseq
    %v2023 = vshrl.u32 %v2022, 7
    %v2024 = vsub.s32 3, %v2023
    %v2025 = vrot.slane %v2005, %v2024
    %v2026 = vlaneseq
    %v2027 = vshrl.u32 %v2026, 7
    %v2028 = vsub.s32 4, %v2027
    %v2029 = vrot.slane %v2005, %v2028
    %v2030 = vlaneseq
    %v2031 = vshrl.u32 %v2030, 7
    %v2032 = vsub.s32 5, %v2031
    %v2033 = vrot.slane %v2005, %v2032
    %v2034 = vlaneseq
    %v2035 = vshrl.u32 %v2034, 7
    %v2036 = vsub.s32 6, %v2035
    %v2037 = vrot.slane %v2005, %v2036
    %v2038 = vlaneseq
    %v2039 = vshrl.u32 %v2038, 7
    %v2040 = vsub.s32 7, %v2039
    %v2041 = vrot.slane %v2005, %v2040
    %v2042 = vlaneseq
    %v2043 = vshrl.u32 %v2042, 7
    %v2044 = vsub.s32 0, %v2043
    %v2045 = vrot.slane %v2007, %v2044
    %v2046 = vlaneseq
    %v2047 = vshrl.u32 %v2046, 7
    %v2048 = vsub.s32 1, %v2047
    %v2049 = vrot.slane %v2007, %v2048
    %v2050 = vlaneseq
    %v2051 = vshrl.u32 %v2050, 7
    %v2052 = vsub.s32 2, %v2051
    %v2053 = vrot.slane %v2007, %v2052
    %v2054 = vlaneseq
    %v2055 = vshrl.u32 %v2054, 7
    %v2056 = vsub.s32 3, %v2055
    %v2057 = vrot.slane %v2007, %v2056
    %v2071 = vsel %vm327, %v1951, 0
    %v2074 = vsel %vm327, %v1952, 0
    %2076 = vmatprep.subr.mxu0 %v1955
    %2077 = vmatpush1.msra.mxu0 %v1954
    %2078 = vmatprep.subr.mxu0 %v1967
    %2079 = vmatpush1.msra.mxu0 %v1966
    %2080 = vmatprep.subr.mxu0 %v1979
    %2081 = vmatpush1.msra.mxu0 %v1978
    %2082 = vmatprep.subr.mxu0 %v1991
    %2083 = vmatpush1.msra.mxu0 %v1990
    %2084 = vmatprep.subr.mxu0 0.0
    %2085 = vmatpush1.msra.mxu0 0.0
    %2086 = vmatprep.subr.mxu0 0.0
    %2087 = vmatpush1.msra.mxu0 0.0
    %2088 = vmatprep.subr.mxu0 0.0
    %2089 = vmatpush1.msra.mxu0 0.0
    %2090 = vmatprep.subr.mxu0 0.0
    %2091 = vmatpush1.msra.mxu0 0.0
    %2092 = vmatprep.subr.mxu0 0.0
    %2093 = vmatpush1.msra.mxu0 0.0
    %2094 = vmatprep.subr.mxu0 0.0
    %2095 = vmatpush1.msra.mxu0 0.0
    %2096 = vmatprep.subr.mxu0 0.0
    %2097 = vmatpush1.msra.mxu0 0.0
    %2098 = vmatprep.subr.mxu0 0.0
    %2099 = vmatpush1.msra.mxu0 0.0
    %2100 = vmatprep.subr.mxu0 0.0
    %2101 = vmatpush1.msra.mxu0 0.0
    %2102 = vmatprep.subr.mxu0 0.0
    %2103 = vmatpush1.msra.mxu0 0.0
    %2104 = vmatprep.subr.mxu0 0.0
    %2105 = vmatpush1.msra.mxu0 0.0
    %2106 = vmatprep.subr.mxu0 0.0
    %2107 = vmatpush1.msra.mxu0 0.0
    %2108 = vmatprep.subr.mxu0 0.0
    %2109 = vmatpush1.msra.mxu0 0.0
    %2110 = vmatprep.subr.mxu0 0.0
    %2111 = vmatpush1.msra.mxu0 0.0
    %2112 = vmatprep.subr.mxu0 0.0
    %2113 = vmatpush1.msra.mxu0 0.0
    %2114 = vmatprep.subr.mxu0 0.0
    %2115 = vmatpush1.msra.mxu0 0.0
    %2116 = vmatprep.subr.mxu0 0.0
    %2117 = vmatpush1.msra.mxu0 0.0
    %2118 = vmatprep.subr.mxu0 0.0
    %2119 = vmatpush1.msra.mxu0 0.0
    %2120 = vmatprep.subr.mxu0 0.0
    %2121 = vmatpush1.msra.mxu0 0.0
    %2122 = vmatprep.subr.mxu0 0.0
    %2123 = vmatpush1.msra.mxu0 0.0
    %2124 = vmatprep.subr.mxu0 0.0
    %2125 = vmatpush1.msra.mxu0 0.0
    %2126 = vmatprep.subr.mxu0 0.0
    %2127 = vmatpush1.msra.mxu0 0.0
    %2128 = vmatprep.subr.mxu0 0.0
    %2129 = vmatpush1.msra.mxu0 0.0
    %2130 = vmatprep.subr.mxu0 0.0
    %2131 = vmatpush1.msra.mxu0 0.0
    %2132 = vmatprep.subr.mxu0 0.0
    %2133 = vmatpush1.msra.mxu0 0.0
    %2134 = vmatprep.subr.mxu0 0.0
    %2135 = vmatpush1.msra.mxu0 0.0
    %2136 = vmatprep.subr.mxu0 0.0
    %2137 = vmatpush1.msra.mxu0 0.0
    %2138 = vmatprep.subr.mxu0 0.0
    %2139 = vmatpush1.msra.mxu0 0.0
    %2140 = vmatprep.mubr.f32.mxu0 0.0
    %2141 = vmatmul.mubr.f32.gmra.mrb[0].mxu0 %v2071
    %v2142 = vpop.f32.mrb[0].mxu0
    %v2143 = vadd.f32 %v2013, %v2142
    %v2144 = vpop.f32.mrb[0].mxu0
    %v2145 = vadd.f32 %v2017, %v2144
    %2146 = vmatprep.mubr.f32.mxu0 0.0
    %2147 = vmatmul.mubr.f32.gmra.mrb[0].mxu0 %v2074
    %v2148 = vpop.f32.mrb[0].mxu0
    %v2149 = vadd.f32 %v2013, %v2148
    %v2150 = vpop.f32.mrb[0].mxu0
    %v2151 = vadd.f32 %v2017, %v2150
    %2152 = vdwg.mxu0
    %2153 = vmatprep.subr.mxu0 %v1957
    %2154 = vmatpush1.msra.mxu0 %v1956
    %2155 = vmatprep.subr.mxu0 %v1969
    %2156 = vmatpush1.msra.mxu0 %v1968
    %2157 = vmatprep.subr.mxu0 %v1981
    %2158 = vmatpush1.msra.mxu0 %v1980
    %2159 = vmatprep.subr.mxu0 %v1993
    %2160 = vmatpush1.msra.mxu0 %v1992
    %2161 = vmatprep.subr.mxu0 0.0
    %2162 = vmatpush1.msra.mxu0 0.0
    %2163 = vmatprep.subr.mxu0 0.0
    %2164 = vmatpush1.msra.mxu0 0.0
    %2165 = vmatprep.subr.mxu0 0.0
    %2166 = vmatpush1.msra.mxu0 0.0
    %2167 = vmatprep.subr.mxu0 0.0
    %2168 = vmatpush1.msra.mxu0 0.0
    %2169 = vmatprep.subr.mxu0 0.0
    %2170 = vmatpush1.msra.mxu0 0.0
    %2171 = vmatprep.subr.mxu0 0.0
    %2172 = vmatpush1.msra.mxu0 0.0
    %2173 = vmatprep.subr.mxu0 0.0
    %2174 = vmatpush1.msra.mxu0 0.0
    %2175 = vmatprep.subr.mxu0 0.0
    %2176 = vmatpush1.msra.mxu0 0.0
    %2177 = vmatprep.subr.mxu0 0.0
    %2178 = vmatpush1.msra.mxu0 0.0
    %2179 = vmatprep.subr.mxu0 0.0
    %2180 = vmatpush1.msra.mxu0 0.0
    %2181 = vmatprep.subr.mxu0 0.0
    %2182 = vmatpush1.msra.mxu0 0.0
    %2183 = vmatprep.subr.mxu0 0.0
    %2184 = vmatpush1.msra.mxu0 0.0
    %2185 = vmatprep.subr.mxu0 0.0
    %2186 = vmatpush1.msra.mxu0 0.0
    %2187 = vmatprep.subr.mxu0 0.0
    %2188 = vmatpush1.msra.mxu0 0.0
    %2189 = vmatprep.subr.mxu0 0.0
    %2190 = vmatpush1.msra.mxu0 0.0
    %2191 = vmatprep.subr.mxu0 0.0
    %2192 = vmatpush1.msra.mxu0 0.0
    %2193 = vmatprep.subr.mxu0 0.0
    %2194 = vmatpush1.msra.mxu0 0.0
    %2195 = vmatprep.subr.mxu0 0.0
    %2196 = vmatpush1.msra.mxu0 0.0
    %2197 = vmatprep.subr.mxu0 0.0
    %2198 = vmatpush1.msra.mxu0 0.0
    %2199 = vmatprep.subr.mxu0 0.0
    %2200 = vmatpush1.msra.mxu0 0.0
    %2201 = vmatprep.subr.mxu0 0.0
    %2202 = vmatpush1.msra.mxu0 0.0
    %2203 = vmatprep.subr.mxu0 0.0
    %2204 = vmatpush1.msra.mxu0 0.0
    %2205 = vmatprep.subr.mxu0 0.0
    %2206 = vmatpush1.msra.mxu0 0.0
    %2207 = vmatprep.subr.mxu0 0.0
    %2208 = vmatpush1.msra.mxu0 0.0
    %2209 = vmatprep.subr.mxu0 0.0
    %2210 = vmatpush1.msra.mxu0 0.0
    %2211 = vmatprep.subr.mxu0 0.0
    %2212 = vmatpush1.msra.mxu0 0.0
    %2213 = vmatprep.subr.mxu0 0.0
    %2214 = vmatpush1.msra.mxu0 0.0
    %2215 = vmatprep.subr.mxu0 0.0
    %2216 = vmatpush1.msra.mxu0 0.0
    %2217 = vmatprep.mubr.f32.mxu0 0.0
    %2218 = vmatmul.mubr.f32.gmra.mrb[0].mxu0 %v2071
    %v2219 = vpop.f32.mrb[0].mxu0
    %v2220 = vadd.f32 %v2021, %v2219
    %v2221 = vpop.f32.mrb[0].mxu0
    %v2222 = vadd.f32 %v2025, %v2221
    %2223 = vmatprep.mubr.f32.mxu0 0.0
    %2224 = vmatmul.mubr.f32.gmra.mrb[0].mxu0 %v2074
    %v2225 = vpop.f32.mrb[0].mxu0
    %v2226 = vadd.f32 %v2021, %v2225
    %v2227 = vpop.f32.mrb[0].mxu0
    %v2228 = vadd.f32 %v2025, %v2227
    %2229 = vdwg.mxu0
    %2230 = vmatprep.subr.mxu0 %v1959
    %2231 = vmatpush1.msra.mxu0 %v1958
    %2232 = vmatprep.subr.mxu0 %v1971
    %2233 = vmatpush1.msra.mxu0 %v1970
    %2234 = vmatprep.subr.mxu0 %v1983
    %2235 = vmatpush1.msra.mxu0 %v1982
    %2236 = vmatprep.subr.mxu0 %v1995
    %2237 = vmatpush1.msra.mxu0 %v1994
    %2238 = vmatprep.subr.mxu0 0.0
    %2239 = vmatpush1.msra.mxu0 0.0
    %2240 = vmatprep.subr.mxu0 0.0
    %2241 = vmatpush1.msra.mxu0 0.0
    %2242 = vmatprep.subr.mxu0 0.0
    %2243 = vmatpush1.msra.mxu0 0.0
    %2244 = vmatprep.subr.mxu0 0.0
    %2245 = vmatpush1.msra.mxu0 0.0
    %2246 = vmatprep.subr.mxu0 0.0
    %2247 = vmatpush1.msra.mxu0 0.0
    %2248 = vmatprep.subr.mxu0 0.0
    %2249 = vmatpush1.msra.mxu0 0.0
    %2250 = vmatprep.subr.mxu0 0.0
    %2251 = vmatpush1.msra.mxu0 0.0
    %2252 = vmatprep.subr.mxu0 0.0
    %2253 = vmatpush1.msra.mxu0 0.0
    %2254 = vmatprep.subr.mxu0 0.0
    %2255 = vmatpush1.msra.mxu0 0.0
    %2256 = vmatprep.subr.mxu0 0.0
    %2257 = vmatpush1.msra.mxu0 0.0
    %2258 = vmatprep.subr.mxu0 0.0
    %2259 = vmatpush1.msra.mxu0 0.0
    %2260 = vmatprep.subr.mxu0 0.0
    %2261 = vmatpush1.msra.mxu0 0.0
    %2262 = vmatprep.subr.mxu0 0.0
    %2263 = vmatpush1.msra.mxu0 0.0
    %2264 = vmatprep.subr.mxu0 0.0
    %2265 = vmatpush1.msra.mxu0 0.0
    %2266 = vmatprep.subr.mxu0 0.0
    %2267 = vmatpush1.msra.mxu0 0.0
    %2268 = vmatprep.subr.mxu0 0.0
    %2269 = vmatpush1.msra.mxu0 0.0
    %2270 = vmatprep.subr.mxu0 0.0
    %2271 = vmatpush1.msra.mxu0 0.0
    %2272 = vmatprep.subr.mxu0 0.0
    %2273 = vmatpush1.msra.mxu0 0.0
    %2274 = vmatprep.subr.mxu0 0.0
    %2275 = vmatpush1.msra.mxu0 0.0
    %2276 = vmatprep.subr.mxu0 0.0
    %2277 = vmatpush1.msra.mxu0 0.0
    %2278 = vmatprep.subr.mxu0 0.0
    %2279 = vmatpush1.msra.mxu0 0.0
    %2280 = vmatprep.subr.mxu0 0.0
    %2281 = vmatpush1.msra.mxu0 0.0
    %2282 = vmatprep.subr.mxu0 0.0
    %2283 = vmatpush1.msra.mxu0 0.0
    %2284 = vmatprep.subr.mxu0 0.0
    %2285 = vmatpush1.msra.mxu0 0.0
    %2286 = vmatprep.subr.mxu0 0.0
    %2287 = vmatpush1.msra.mxu0 0.0
    %2288 = vmatprep.subr.mxu0 0.0
    %2289 = vmatpush1.msra.mxu0 0.0
    %2290 = vmatprep.subr.mxu0 0.0
    %2291 = vmatpush1.msra.mxu0 0.0
    %2292 = vmatprep.subr.mxu0 0.0
    %2293 = vmatpush1.msra.mxu0 0.0
    %2294 = vmatprep.mubr.f32.mxu0 0.0
    %2295 = vmatmul.mubr.f32.gmra.mrb[0].mxu0 %v2071
    %v2296 = vpop.f32.mrb[0].mxu0
    %v2297 = vadd.f32 %v2029, %v2296
    %v2298 = vpop.f32.mrb[0].mxu0
    %v2299 = vadd.f32 %v2033, %v2298
    %2300 = vmatprep.mubr.f32.mxu0 0.0
    %2301 = vmatmul.mubr.f32.gmra.mrb[0].mxu0 %v2074
    %v2302 = vpop.f32.mrb[0].mxu0
    %v2303 = vadd.f32 %v2029, %v2302
    %v2304 = vpop.f32.mrb[0].mxu0
    %v2305 = vadd.f32 %v2033, %v2304
    %2306 = vdwg.mxu0
    %2307 = vmatprep.subr.mxu0 %v1961
    %2308 = vmatpush1.msra.mxu0 %v1960
    %2309 = vmatprep.subr.mxu0 %v1973
    %2310 = vmatpush1.msra.mxu0 %v1972
    %2311 = vmatprep.subr.mxu0 %v1985
    %2312 = vmatpush1.msra.mxu0 %v1984
    %2313 = vmatprep.subr.mxu0 %v1997
    %2314 = vmatpush1.msra.mxu0 %v1996
    %2315 = vmatprep.subr.mxu0 0.0
    %2316 = vmatpush1.msra.mxu0 0.0
    %2317 = vmatprep.subr.mxu0 0.0
    %2318 = vmatpush1.msra.mxu0 0.0
    %2319 = vmatprep.subr.mxu0 0.0
    %2320 = vmatpush1.msra.mxu0 0.0
    %2321 = vmatprep.subr.mxu0 0.0
    %2322 = vmatpush1.msra.mxu0 0.0
    %2323 = vmatprep.subr.mxu0 0.0
    %2324 = vmatpush1.msra.mxu0 0.0
    %2325 = vmatprep.subr.mxu0 0.0
    %2326 = vmatpush1.msra.mxu0 0.0
    %2327 = vmatprep.subr.mxu0 0.0
    %2328 = vmatpush1.msra.mxu0 0.0
    %2329 = vmatprep.subr.mxu0 0.0
    %2330 = vmatpush1.msra.mxu0 0.0
    %2331 = vmatprep.subr.mxu0 0.0
    %2332 = vmatpush1.msra.mxu0 0.0
    %2333 = vmatprep.subr.mxu0 0.0
    %2334 = vmatpush1.msra.mxu0 0.0
    %2335 = vmatprep.subr.mxu0 0.0
    %2336 = vmatpush1.msra.mxu0 0.0
    %2337 = vmatprep.subr.mxu0 0.0
    %2338 = vmatpush1.msra.mxu0 0.0
    %2339 = vmatprep.subr.mxu0 0.0
    %2340 = vmatpush1.msra.mxu0 0.0
    %2341 = vmatprep.subr.mxu0 0.0
    %2342 = vmatpush1.msra.mxu0 0.0
    %2343 = vmatprep.subr.mxu0 0.0
    %2344 = vmatpush1.msra.mxu0 0.0
    %2345 = vmatprep.subr.mxu0 0.0
    %2346 = vmatpush1.msra.mxu0 0.0
    %2347 = vmatprep.subr.mxu0 0.0
    %2348 = vmatpush1.msra.mxu0 0.0
    %2349 = vmatprep.subr.mxu0 0.0
    %2350 = vmatpush1.msra.mxu0 0.0
    %2351 = vmatprep.subr.mxu0 0.0
    %2352 = vmatpush1.msra.mxu0 0.0
    %2353 = vmatprep.subr.mxu0 0.0
    %2354 = vmatpush1.msra.mxu0 0.0
    %2355 = vmatprep.subr.mxu0 0.0
    %2356 = vmatpush1.msra.mxu0 0.0
    %2357 = vmatprep.subr.mxu0 0.0
    %2358 = vmatpush1.msra.mxu0 0.0
    %2359 = vmatprep.subr.mxu0 0.0
    %2360 = vmatpush1.msra.mxu0 0.0
    %2361 = vmatprep.subr.mxu0 0.0
    %2362 = vmatpush1.msra.mxu0 0.0
    %2363 = vmatprep.subr.mxu0 0.0
    %2364 = vmatpush1.msra.mxu0 0.0
    %2365 = vmatprep.subr.mxu0 0.0
    %2366 = vmatpush1.msra.mxu0 0.0
    %2367 = vmatprep.subr.mxu0 0.0
    %2368 = vmatpush1.msra.mxu0 0.0
    %2369 = vmatprep.subr.mxu0 0.0
    %2370 = vmatpush1.msra.mxu0 0.0
    %2371 = vmatprep.mubr.f32.mxu0 0.0
    %2372 = vmatmul.mubr.f32.gmra.mrb[0].mxu0 %v2071
    %v2373 = vpop.f32.mrb[0].mxu0
    %v2374 = vadd.f32 %v2037, %v2373
    %v2375 = vpop.f32.mrb[0].mxu0
    %v2376 = vadd.f32 %v2041, %v2375
    %2377 = vmatprep.mubr.f32.mxu0 0.0
    %2378 = vmatmul.mubr.f32.gmra.mrb[0].mxu0 %v2074
    %v2379 = vpop.f32.mrb[0].mxu0
    %v2380 = vadd.f32 %v2037, %v2379
    %v2381 = vpop.f32.mrb[0].mxu0
    %v2382 = vadd.f32 %v2041, %v2381
    %2383 = vdwg.mxu0
    %2384 = vmatprep.subr.mxu0 %v1963
    %2385 = vmatpush1.msra.mxu0 %v1962
    %2386 = vmatprep.subr.mxu0 %v1975
    %2387 = vmatpush1.msra.mxu0 %v1974
    %2388 = vmatprep.subr.mxu0 %v1987
    %2389 = vmatpush1.msra.mxu0 %v1986
    %2390 = vmatprep.subr.mxu0 %v1999
    %2391 = vmatpush1.msra.mxu0 %v1998
    %2392 = vmatprep.subr.mxu0 0.0
    %2393 = vmatpush1.msra.mxu0 0.0
    %2394 = vmatprep.subr.mxu0 0.0
    %2395 = vmatpush1.msra.mxu0 0.0
    %2396 = vmatprep.subr.mxu0 0.0
    %2397 = vmatpush1.msra.mxu0 0.0
    %2398 = vmatprep.subr.mxu0 0.0
    %2399 = vmatpush1.msra.mxu0 0.0
    %2400 = vmatprep.subr.mxu0 0.0
    %2401 = vmatpush1.msra.mxu0 0.0
    %2402 = vmatprep.subr.mxu0 0.0
    %2403 = vmatpush1.msra.mxu0 0.0
    %2404 = vmatprep.subr.mxu0 0.0
    %2405 = vmatpush1.msra.mxu0 0.0
    %2406 = vmatprep.subr.mxu0 0.0
    %2407 = vmatpush1.msra.mxu0 0.0
    %2408 = vmatprep.subr.mxu0 0.0
    %2409 = vmatpush1.msra.mxu0 0.0
    %2410 = vmatprep.subr.mxu0 0.0
    %2411 = vmatpush1.msra.mxu0 0.0
    %2412 = vmatprep.subr.mxu0 0.0
    %2413 = vmatpush1.msra.mxu0 0.0
    %2414 = vmatprep.subr.mxu0 0.0
    %2415 = vmatpush1.msra.mxu0 0.0
    %2416 = vmatprep.subr.mxu0 0.0
    %2417 = vmatpush1.msra.mxu0 0.0
    %2418 = vmatprep.subr.mxu0 0.0
    %2419 = vmatpush1.msra.mxu0 0.0
    %2420 = vmatprep.subr.mxu0 0.0
    %2421 = vmatpush1.msra.mxu0 0.0
    %2422 = vmatprep.subr.mxu0 0.0
    %2423 = vmatpush1.msra.mxu0 0.0
    %2424 = vmatprep.subr.mxu0 0.0
    %2425 = vmatpush1.msra.mxu0 0.0
    %2426 = vmatprep.subr.mxu0 0.0
    %2427 = vmatpush1.msra.mxu0 0.0
    %2428 = vmatprep.subr.mxu0 0.0
    %2429 = vmatpush1.msra.mxu0 0.0
    %2430 = vmatprep.subr.mxu0 0.0
    %2431 = vmatpush1.msra.mxu0 0.0
    %2432 = vmatprep.subr.mxu0 0.0
    %2433 = vmatpush1.msra.mxu0 0.0
    %2434 = vmatprep.subr.mxu0 0.0
    %2435 = vmatpush1.msra.mxu0 0.0
    %2436 = vmatprep.subr.mxu0 0.0
    %2437 = vmatpush1.msra.mxu0 0.0
    %2438 = vmatprep.subr.mxu0 0.0
    %2439 = vmatpush1.msra.mxu0 0.0
    %2440 = vmatprep.subr.mxu0 0.0
    %2441 = vmatpush1.msra.mxu0 0.0
    %2442 = vmatprep.subr.mxu0 0.0
    %2443 = vmatpush1.msra.mxu0 0.0
    %2444 = vmatprep.subr.mxu0 0.0
    %2445 = vmatpush1.msra.mxu0 0.0
    %2446 = vmatprep.subr.mxu0 0.0
    %2447 = vmatpush1.msra.mxu0 0.0
    %2448 = vmatprep.mubr.f32.mxu0 0.0
    %2449 = vmatmul.mubr.f32.gmra.mrb[0].mxu0 %v2071
    %v2450 = vpop.f32.mrb[0].mxu0
    %v2451 = vadd.f32 %v2045, %v2450
    %v2452 = vpop.f32.mrb[0].mxu0
    %v2453 = vadd.f32 %v2049, %v2452
    %2454 = vmatprep.mubr.f32.mxu0 0.0
    %2455 = vmatmul.mubr.f32.gmra.mrb[0].mxu0 %v2074
    %v2456 = vpop.f32.mrb[0].mxu0
    %v2457 = vadd.f32 %v2045, %v2456
    %v2458 = vpop.f32.mrb[0].mxu0
    %v2459 = vadd.f32 %v2049, %v2458
    %2460 = vdwg.mxu0
    %2461 = vmatprep.subr.mxu0 %v1965
    %2462 = vmatpush1.msra.mxu0 %v1964
    %2463 = vmatprep.subr.mxu0 %v1977
    %2464 = vmatpush1.msra.mxu0 %v1976
    %2465 = vmatprep.subr.mxu0 %v1989
    %2466 = vmatpush1.msra.mxu0 %v1988
    %2467 = vmatprep.subr.mxu0 %v2001
    %2468 = vmatpush1.msra.mxu0 %v2000
    %2469 = vmatprep.subr.mxu0 0.0
    %2470 = vmatpush1.msra.mxu0 0.0
    %2471 = vmatprep.subr.mxu0 0.0
    %2472 = vmatpush1.msra.mxu0 0.0
    %2473 = vmatprep.subr.mxu0 0.0
    %2474 = vmatpush1.msra.mxu0 0.0
    %2475 = vmatprep.subr.mxu0 0.0
    %2476 = vmatpush1.msra.mxu0 0.0
    %2477 = vmatprep.subr.mxu0 0.0
    %2478 = vmatpush1.msra.mxu0 0.0
    %2479 = vmatprep.subr.mxu0 0.0
    %2480 = vmatpush1.msra.mxu0 0.0
    %2481 = vmatprep.subr.mxu0 0.0
    %2482 = vmatpush1.msra.mxu0 0.0
    %2483 = vmatprep.subr.mxu0 0.0
    %2484 = vmatpush1.msra.mxu0 0.0
    %2485 = vmatprep.subr.mxu0 0.0
    %2486 = vmatpush1.msra.mxu0 0.0
    %2487 = vmatprep.subr.mxu0 0.0
    %2488 = vmatpush1.msra.mxu0 0.0
    %2489 = vmatprep.subr.mxu0 0.0
    %2490 = vmatpush1.msra.mxu0 0.0
    %2491 = vmatprep.subr.mxu0 0.0
    %2492 = vmatpush1.msra.mxu0 0.0
    %2493 = vmatprep.subr.mxu0 0.0
    %2494 = vmatpush1.msra.mxu0 0.0
    %2495 = vmatprep.subr.mxu0 0.0
    %2496 = vmatpush1.msra.mxu0 0.0
    %2497 = vmatprep.subr.mxu0 0.0
    %2498 = vmatpush1.msra.mxu0 0.0
    %2499 = vmatprep.subr.mxu0 0.0
    %2500 = vmatpush1.msra.mxu0 0.0
    %2501 = vmatprep.subr.mxu0 0.0
    %2502 = vmatpush1.msra.mxu0 0.0
    %2503 = vmatprep.subr.mxu0 0.0
    %2504 = vmatpush1.msra.mxu0 0.0
    %2505 = vmatprep.subr.mxu0 0.0
    %2506 = vmatpush1.msra.mxu0 0.0
    %2507 = vmatprep.subr.mxu0 0.0
    %2508 = vmatpush1.msra.mxu0 0.0
    %2509 = vmatprep.subr.mxu0 0.0
    %2510 = vmatpush1.msra.mxu0 0.0
    %2511 = vmatprep.subr.mxu0 0.0
    %2512 = vmatpush1.msra.mxu0 0.0
    %2513 = vmatprep.subr.mxu0 0.0
    %2514 = vmatpush1.msra.mxu0 0.0
    %2515 = vmatprep.subr.mxu0 0.0
    %2516 = vmatpush1.msra.mxu0 0.0
    %2517 = vmatprep.subr.mxu0 0.0
    %2518 = vmatpush1.msra.mxu0 0.0
    %2519 = vmatprep.subr.mxu0 0.0
    %2520 = vmatpush1.msra.mxu0 0.0
    %2521 = vmatprep.subr.mxu0 0.0
    %2522 = vmatpush1.msra.mxu0 0.0
    %2523 = vmatprep.subr.mxu0 0.0
    %2524 = vmatpush1.msra.mxu0 0.0
    %2525 = vmatprep.mubr.f32.mxu0 0.0
    %2526 = vmatmul.mubr.f32.gmra.mrb[0].mxu0 %v2071
    %v2527 = vpop.f32.mrb[0].mxu0
    %v2528 = vadd.f32 %v2053, %v2527
    %v2529 = vpop.f32.mrb[0].mxu0
    %v2530 = vadd.f32 %v2057, %v2529
    %2531 = vmatprep.mubr.f32.mxu0 0.0
    %2532 = vmatmul.mubr.f32.gmra.mrb[0].mxu0 %v2074
    %v2533 = vpop.f32.mrb[0].mxu0
    %v2534 = vadd.f32 %v2053, %v2533
    %v2535 = vpop.f32.mrb[0].mxu0
    %v2536 = vadd.f32 %v2057, %v2535
    %2537 = vdwg.mxu0
    %v2539 = vsel %vm796, %v2143, 0
    %v2542 = vsel %vm796, %v2149, 0
    %v2545 = vsel %vm796, %v2297, 0
    %v2548 = vsel %vm796, %v2303, 0
    %2550 = vmatprep.subr.mxu0 0.0
    %2551 = vmatpush1.xpose.msra.mxu0 %v2545
    %2552 = vmatprep.subr.mxu0 0.0
    %2553 = vmatpush1.xpose.msra.mxu0 %v2548
    %2554 = vmatprep.subr.mxu0 0.0
    %2555 = vmatpush1.xpose.msra.mxu0 0.0
    %2556 = vmatprep.subr.mxu0 0.0
    %2557 = vmatpush1.xpose.msra.mxu0 0.0
    %2558 = vmatprep.subr.mxu0 0.0
    %2559 = vmatpush1.xpose.msra.mxu0 0.0
    %2560 = vmatprep.subr.mxu0 0.0
    %2561 = vmatpush1.xpose.msra.mxu0 0.0
    %2562 = vmatprep.subr.mxu0 0.0
    %2563 = vmatpush1.xpose.msra.mxu0 0.0
    %2564 = vmatprep.subr.mxu0 0.0
    %2565 = vmatpush1.xpose.msra.mxu0 0.0
    %2566 = vmatprep.subr.mxu0 0.0
    %2567 = vmatpush1.xpose.msra.mxu0 0.0
    %2568 = vmatprep.subr.mxu0 0.0
    %2569 = vmatpush1.xpose.msra.mxu0 0.0
    %2570 = vmatprep.subr.mxu0 0.0
    %2571 = vmatpush1.xpose.msra.mxu0 0.0
    %2572 = vmatprep.subr.mxu0 0.0
    %2573 = vmatpush1.xpose.msra.mxu0 0.0
    %2574 = vmatprep.subr.mxu0 0.0
    %2575 = vmatpush1.xpose.msra.mxu0 0.0
    %2576 = vmatprep.subr.mxu0 0.0
    %2577 = vmatpush1.xpose.msra.mxu0 0.0
    %2578 = vmatprep.subr.mxu0 0.0
    %2579 = vmatpush1.xpose.msra.mxu0 0.0
    %2580 = vmatprep.subr.mxu0 0.0
    %2581 = vmatpush1.xpose.msra.mxu0 0.0
    %2582 = vmatprep.subr.mxu0 0.0
    %2583 = vmatpush1.xpose.msra.mxu0 0.0
    %2584 = vmatprep.subr.mxu0 0.0
    %2585 = vmatpush1.xpose.msra.mxu0 0.0
    %2586 = vmatprep.subr.mxu0 0.0
    %2587 = vmatpush1.xpose.msra.mxu0 0.0
    %2588 = vmatprep.subr.mxu0 0.0
    %2589 = vmatpush1.xpose.msra.mxu0 0.0
    %2590 = vmatprep.subr.mxu0 0.0
    %2591 = vmatpush1.xpose.msra.mxu0 0.0
    %2592 = vmatprep.subr.mxu0 0.0
    %2593 = vmatpush1.xpose.msra.mxu0 0.0
    %2594 = vmatprep.subr.mxu0 0.0
    %2595 = vmatpush1.xpose.msra.mxu0 0.0
    %2596 = vmatprep.subr.mxu0 0.0
    %2597 = vmatpush1.xpose.msra.mxu0 0.0
    %2598 = vmatprep.subr.mxu0 0.0
    %2599 = vmatpush1.xpose.msra.mxu0 0.0
    %2600 = vmatprep.subr.mxu0 0.0
    %2601 = vmatpush1.xpose.msra.mxu0 0.0
    %2602 = vmatprep.subr.mxu0 0.0
    %2603 = vmatpush1.xpose.msra.mxu0 0.0
    %2604 = vmatprep.subr.mxu0 0.0
    %2605 = vmatpush1.xpose.msra.mxu0 0.0
    %2606 = vmatprep.subr.mxu0 0.0
    %2607 = vmatpush1.xpose.msra.mxu0 0.0
    %2608 = vmatprep.subr.mxu0 0.0
    %2609 = vmatpush1.xpose.msra.mxu0 0.0
    %2610 = vmatprep.subr.mxu0 0.0
    %2611 = vmatpush1.xpose.msra.mxu0 0.0
    %2612 = vmatprep.subr.mxu0 0.0
    %2613 = vmatpush1.xpose.msra.mxu0 0.0
    %2614 = vmatprep.mubr.f32.mxu0 0.0
    %2615 = vmatmul.mubr.f32.gmra.mrb[0].mxu0 %v2539
    %v2616 = vpop.f32.mrb[0].mxu0
    %v2617 = vadd.f32 0.0, %v2616
    %v2618 = vpop.f32.mrb[0].mxu0
    %2619 = vmatprep.mubr.f32.mxu0 0.0
    %2620 = vmatmul.mubr.f32.gmra.mrb[0].mxu0 %v2542
    %v2621 = vpop.f32.mrb[0].mxu0
    %v2622 = vadd.f32 0.0, %v2621
    %v2623 = vpop.f32.mrb[0].mxu0
    %2624 = vdwg.mxu0
    %v2625 = vmul.f32 %v2617, 0.35355338
    %v2626 = vmul.f32 %v2622, 0.35355338
    %v2627 = vsel %vm210, %v2625, -1e+09
    %v2628 = vsel %vm211, %v2626, -1e+09
    %v2629 = vsel %vm192, %v2627, -1e+30
    %v2630 = vsel %vm193, %v2628, -1e+30
    %v2631 = vsel %vm890, %v2629, -inf
    %2632 = vmax.xlane.f32.xlu0 %v2631
    %v2633 = vpop.xlane.xlu0 %2632
    %v2634 = vsel %vm890, %v2630, -inf
    %2635 = vmax.xlane.f32.xlu0 %v2634
    %v2636 = vpop.xlane.xlu0 %2635
    %v2637 = vsub.f32 %v2629, %v2633
    %v2638 = vsub.f32 %v2630, %v2636
    %v2639 = vmul.f32 %v2637, 1.442695
    %v2640 = vpow.pop %v2639
    %v2641 = vmul.f32 %v2638, 1.442695
    %v2642 = vpow.pop %v2641
    %v2643 = vsel %vm890, %v2640, 0.0
    %2644 = vadd.xlane.f32.xlu0 %v2643
    %v2645 = vpop.xlane.xlu0 %2644
    %v2646 = vsel %vm890, %v2642, 0.0
    %2647 = vadd.xlane.f32.xlu0 %v2646
    %v2648 = vpop.xlane.xlu0 %2647
    %v2649 = vrcp.pop %v2645
    %v2650 = vrcp.pop %v2648
    %v2651 = vmul.f32 %v2640, %v2649
    %v2652 = vmul.f32 %v2642, %v2650
    %v2654 = vsel %vm890, %v2651, 0
    %v2657 = vsel %vm890, %v2652, 0
    %2659 = vmatprep.subr.mxu0 0.0
    %2660 = vmatpush1.msra.mxu0 %v2451
    %2661 = vmatprep.subr.mxu0 0.0
    %2662 = vmatpush1.msra.mxu0 %v2457
    %2663 = vmatprep.subr.mxu0 0.0
    %2664 = vmatpush1.msra.mxu0 0.0
    %2665 = vmatprep.subr.mxu0 0.0
    %2666 = vmatpush1.msra.mxu0 0.0
    %2667 = vmatprep.subr.mxu0 0.0
    %2668 = vmatpush1.msra.mxu0 0.0
    %2669 = vmatprep.subr.mxu0 0.0
    %2670 = vmatpush1.msra.mxu0 0.0
    %2671 = vmatprep.subr.mxu0 0.0
    %2672 = vmatpush1.msra.mxu0 0.0
    %2673 = vmatprep.subr.mxu0 0.0
    %2674 = vmatpush1.msra.mxu0 0.0
    %2675 = vmatprep.subr.mxu0 0.0
    %2676 = vmatpush1.msra.mxu0 0.0
    %2677 = vmatprep.subr.mxu0 0.0
    %2678 = vmatpush1.msra.mxu0 0.0
    %2679 = vmatprep.subr.mxu0 0.0
    %2680 = vmatpush1.msra.mxu0 0.0
    %2681 = vmatprep.subr.mxu0 0.0
    %2682 = vmatpush1.msra.mxu0 0.0
    %2683 = vmatprep.subr.mxu0 0.0
    %2684 = vmatpush1.msra.mxu0 0.0
    %2685 = vmatprep.subr.mxu0 0.0
    %2686 = vmatpush1.msra.mxu0 0.0
    %2687 = vmatprep.subr.mxu0 0.0
    %2688 = vmatpush1.msra.mxu0 0.0
    %2689 = vmatprep.subr.mxu0 0.0
    %2690 = vmatpush1.msra.mxu0 0.0
    %2691 = vmatprep.subr.mxu0 0.0
    %2692 = vmatpush1.msra.mxu0 0.0
    %2693 = vmatprep.subr.mxu0 0.0
    %2694 = vmatpush1.msra.mxu0 0.0
    %2695 = vmatprep.subr.mxu0 0.0
    %2696 = vmatpush1.msra.mxu0 0.0
    %2697 = vmatprep.subr.mxu0 0.0
    %2698 = vmatpush1.msra.mxu0 0.0
    %2699 = vmatprep.subr.mxu0 0.0
    %2700 = vmatpush1.msra.mxu0 0.0
    %2701 = vmatprep.subr.mxu0 0.0
    %2702 = vmatpush1.msra.mxu0 0.0
    %2703 = vmatprep.subr.mxu0 0.0
    %2704 = vmatpush1.msra.mxu0 0.0
    %2705 = vmatprep.subr.mxu0 0.0
    %2706 = vmatpush1.msra.mxu0 0.0
    %2707 = vmatprep.subr.mxu0 0.0
    %2708 = vmatpush1.msra.mxu0 0.0
    %2709 = vmatprep.subr.mxu0 0.0
    %2710 = vmatpush1.msra.mxu0 0.0
    %2711 = vmatprep.subr.mxu0 0.0
    %2712 = vmatpush1.msra.mxu0 0.0
    %2713 = vmatprep.subr.mxu0 0.0
    %2714 = vmatpush1.msra.mxu0 0.0
    %2715 = vmatprep.subr.mxu0 0.0
    %2716 = vmatpush1.msra.mxu0 0.0
    %2717 = vmatprep.subr.mxu0 0.0
    %2718 = vmatpush1.msra.mxu0 0.0
    %2719 = vmatprep.subr.mxu0 0.0
    %2720 = vmatpush1.msra.mxu0 0.0
    %2721 = vmatprep.subr.mxu0 0.0
    %2722 = vmatpush1.msra.mxu0 0.0
    %2723 = vmatprep.mubr.f32.mxu0 0.0
    %2724 = vmatmul.mubr.f32.gmra.mrb[0].mxu0 %v2654
    %v2725 = vpop.f32.mrb[0].mxu0
    %v2726 = vadd.f32 0.0, %v2725
    %v2727 = vpop.f32.mrb[0].mxu0
    %2728 = vmatprep.mubr.f32.mxu0 0.0
    %2729 = vmatmul.mubr.f32.gmra.mrb[0].mxu0 %v2657
    %v2730 = vpop.f32.mrb[0].mxu0
    %v2731 = vadd.f32 0.0, %v2730
    %v2732 = vpop.f32.mrb[0].mxu0
    %2733 = vdwg.mxu0
    %2734 = vst.msk [vmem:[#allocation2] sm:$0xff] %vm796, %v2726
    %2735 = vst.msk [vmem:[#allocation2 + $0x8] sm:$0xff] %vm796, %v2731
    %v2737 = vsel %vm796, %v2145, 0
    %v2740 = vsel %vm796, %v2151, 0
    %v2743 = vsel %vm796, %v2299, 0
    %v2746 = vsel %vm796, %v2305, 0
    %2748 = vmatprep.subr.mxu0 0.0
    %2749 = vmatpush1.xpose.msra.mxu0 %v2743
    %2750 = vmatprep.subr.mxu0 0.0
    %2751 = vmatpush1.xpose.msra.mxu0 %v2746
    %2752 = vmatprep.subr.mxu0 0.0
    %2753 = vmatpush1.xpose.msra.mxu0 0.0
    %2754 = vmatprep.subr.mxu0 0.0
    %2755 = vmatpush1.xpose.msra.mxu0 0.0
    %2756 = vmatprep.subr.mxu0 0.0
    %2757 = vmatpush1.xpose.msra.mxu0 0.0
    %2758 = vmatprep.subr.mxu0 0.0
    %2759 = vmatpush1.xpose.msra.mxu0 0.0
    %2760 = vmatprep.subr.mxu0 0.0
    %2761 = vmatpush1.xpose.msra.mxu0 0.0
    %2762 = vmatprep.subr.mxu0 0.0
    %2763 = vmatpush1.xpose.msra.mxu0 0.0
    %2764 = vmatprep.subr.mxu0 0.0
    %2765 = vmatpush1.xpose.msra.mxu0 0.0
    %2766 = vmatprep.subr.mxu0 0.0
    %2767 = vmatpush1.xpose.msra.mxu0 0.0
    %2768 = vmatprep.subr.mxu0 0.0
    %2769 = vmatpush1.xpose.msra.mxu0 0.0
    %2770 = vmatprep.subr.mxu0 0.0
    %2771 = vmatpush1.xpose.msra.mxu0 0.0
    %2772 = vmatprep.subr.mxu0 0.0
    %2773 = vmatpush1.xpose.msra.mxu0 0.0
    %2774 = vmatprep.subr.mxu0 0.0
    %2775 = vmatpush1.xpose.msra.mxu0 0.0
    %2776 = vmatprep.subr.mxu0 0.0
    %2777 = vmatpush1.xpose.msra.mxu0 0.0
    %2778 = vmatprep.subr.mxu0 0.0
    %2779 = vmatpush1.xpose.msra.mxu0 0.0
    %2780 = vmatprep.subr.mxu0 0.0
    %2781 = vmatpush1.xpose.msra.mxu0 0.0
    %2782 = vmatprep.subr.mxu0 0.0
    %2783 = vmatpush1.xpose.msra.mxu0 0.0
    %2784 = vmatprep.subr.mxu0 0.0
    %2785 = vmatpush1.xpose.msra.mxu0 0.0
    %2786 = vmatprep.subr.mxu0 0.0
    %2787 = vmatpush1.xpose.msra.mxu0 0.0
    %2788 = vmatprep.subr.mxu0 0.0
    %2789 = vmatpush1.xpose.msra.mxu0 0.0
    %2790 = vmatprep.subr.mxu0 0.0
    %2791 = vmatpush1.xpose.msra.mxu0 0.0
    %2792 = vmatprep.subr.mxu0 0.0
    %2793 = vmatpush1.xpose.msra.mxu0 0.0
    %2794 = vmatprep.subr.mxu0 0.0
    %2795 = vmatpush1.xpose.msra.mxu0 0.0
    %2796 = vmatprep.subr.mxu0 0.0
    %2797 = vmatpush1.xpose.msra.mxu0 0.0
    %2798 = vmatprep.subr.mxu0 0.0
    %2799 = vmatpush1.xpose.msra.mxu0 0.0
    %2800 = vmatprep.subr.mxu0 0.0
    %2801 = vmatpush1.xpose.msra.mxu0 0.0
    %2802 = vmatprep.subr.mxu0 0.0
    %2803 = vmatpush1.xpose.msra.mxu0 0.0
    %2804 = vmatprep.subr.mxu0 0.0
    %2805 = vmatpush1.xpose.msra.mxu0 0.0
    %2806 = vmatprep.subr.mxu0 0.0
    %2807 = vmatpush1.xpose.msra.mxu0 0.0
    %2808 = vmatprep.subr.mxu0 0.0
    %2809 = vmatpush1.xpose.msra.mxu0 0.0
    %2810 = vmatprep.subr.mxu0 0.0
    %2811 = vmatpush1.xpose.msra.mxu0 0.0
    %2812 = vmatprep.mubr.f32.mxu0 0.0
    %2813 = vmatmul.mubr.f32.gmra.mrb[0].mxu0 %v2737
    %v2814 = vpop.f32.mrb[0].mxu0
    %v2815 = vadd.f32 0.0, %v2814
    %v2816 = vpop.f32.mrb[0].mxu0
    %2817 = vmatprep.mubr.f32.mxu0 0.0
    %2818 = vmatmul.mubr.f32.gmra.mrb[0].mxu0 %v2740
    %v2819 = vpop.f32.mrb[0].mxu0
    %v2820 = vadd.f32 0.0, %v2819
    %v2821 = vpop.f32.mrb[0].mxu0
    %2822 = vdwg.mxu0
    %v2823 = vmul.f32 %v2815, 0.35355338
    %v2824 = vmul.f32 %v2820, 0.35355338
    %v2825 = vsel %vm210, %v2823, -1e+09
    %v2826 = vsel %vm211, %v2824, -1e+09
    %v2827 = vsel %vm192, %v2825, -1e+30
    %v2828 = vsel %vm193, %v2826, -1e+30
    %v2829 = vsel %vm890, %v2827, -inf
    %2830 = vmax.xlane.f32.xlu0 %v2829
    %v2831 = vpop.xlane.xlu0 %2830
    %v2832 = vsel %vm890, %v2828, -inf
    %2833 = vmax.xlane.f32.xlu0 %v2832
    %v2834 = vpop.xlane.xlu0 %2833
    %v2835 = vsub.f32 %v2827, %v2831
    %v2836 = vsub.f32 %v2828, %v2834
    %v2837 = vmul.f32 %v2835, 1.442695
    %v2838 = vpow.pop %v2837
    %v2839 = vmul.f32 %v2836, 1.442695
    %v2840 = vpow.pop %v2839
    %v2841 = vsel %vm890, %v2838, 0.0
    %2842 = vadd.xlane.f32.xlu0 %v2841
    %v2843 = vpop.xlane.xlu0 %2842
    %v2844 = vsel %vm890, %v2840, 0.0
    %2845 = vadd.xlane.f32.xlu0 %v2844
    %v2846 = vpop.xlane.xlu0 %2845
    %v2847 = vrcp.pop %v2843
    %v2848 = vrcp.pop %v2846
    %v2849 = vmul.f32 %v2838, %v2847
    %v2850 = vmul.f32 %v2840, %v2848
    %v2852 = vsel %vm890, %v2849, 0
    %v2855 = vsel %vm890, %v2850, 0
    %2857 = vmatprep.subr.mxu0 0.0
    %2858 = vmatpush1.msra.mxu0 %v2453
    %2859 = vmatprep.subr.mxu0 0.0
    %2860 = vmatpush1.msra.mxu0 %v2459
    %2861 = vmatprep.subr.mxu0 0.0
    %2862 = vmatpush1.msra.mxu0 0.0
    %2863 = vmatprep.subr.mxu0 0.0
    %2864 = vmatpush1.msra.mxu0 0.0
    %2865 = vmatprep.subr.mxu0 0.0
    %2866 = vmatpush1.msra.mxu0 0.0
    %2867 = vmatprep.subr.mxu0 0.0
    %2868 = vmatpush1.msra.mxu0 0.0
    %2869 = vmatprep.subr.mxu0 0.0
    %2870 = vmatpush1.msra.mxu0 0.0
    %2871 = vmatprep.subr.mxu0 0.0
    %2872 = vmatpush1.msra.mxu0 0.0
    %2873 = vmatprep.subr.mxu0 0.0
    %2874 = vmatpush1.msra.mxu0 0.0
    %2875 = vmatprep.subr.mxu0 0.0
    %2876 = vmatpush1.msra.mxu0 0.0
    %2877 = vmatprep.subr.mxu0 0.0
    %2878 = vmatpush1.msra.mxu0 0.0
    %2879 = vmatprep.subr.mxu0 0.0
    %2880 = vmatpush1.msra.mxu0 0.0
    %2881 = vmatprep.subr.mxu0 0.0
    %2882 = vmatpush1.msra.mxu0 0.0
    %2883 = vmatprep.subr.mxu0 0.0
    %2884 = vmatpush1.msra.mxu0 0.0
    %2885 = vmatprep.subr.mxu0 0.0
    %2886 = vmatpush1.msra.mxu0 0.0
    %2887 = vmatprep.subr.mxu0 0.0
    %2888 = vmatpush1.msra.mxu0 0.0
    %2889 = vmatprep.subr.mxu0 0.0
    %2890 = vmatpush1.msra.mxu0 0.0
    %2891 = vmatprep.subr.mxu0 0.0
    %2892 = vmatpush1.msra.mxu0 0.0
    %2893 = vmatprep.subr.mxu0 0.0
    %2894 = vmatpush1.msra.mxu0 0.0
    %2895 = vmatprep.subr.mxu0 0.0
    %2896 = vmatpush1.msra.mxu0 0.0
    %2897 = vmatprep.subr.mxu0 0.0
    %2898 = vmatpush1.msra.mxu0 0.0
    %2899 = vmatprep.subr.mxu0 0.0
    %2900 = vmatpush1.msra.mxu0 0.0
    %2901 = vmatprep.subr.mxu0 0.0
    %2902 = vmatpush1.msra.mxu0 0.0
    %2903 = vmatprep.subr.mxu0 0.0
    %2904 = vmatpush1.msra.mxu0 0.0
    %2905 = vmatprep.subr.mxu0 0.0
    %2906 = vmatpush1.msra.mxu0 0.0
    %2907 = vmatprep.subr.mxu0 0.0
    %2908 = vmatpush1.msra.mxu0 0.0
    %2909 = vmatprep.subr.mxu0 0.0
    %2910 = vmatpush1.msra.mxu0 0.0
    %2911 = vmatprep.subr.mxu0 0.0
    %2912 = vmatpush1.msra.mxu0 0.0
    %2913 = vmatprep.subr.mxu0 0.0
    %2914 = vmatpush1.msra.mxu0 0.0
    %2915 = vmatprep.subr.mxu0 0.0
    %2916 = vmatpush1.msra.mxu0 0.0
    %2917 = vmatprep.subr.mxu0 0.0
    %2918 = vmatpush1.msra.mxu0 0.0
    %2919 = vmatprep.subr.mxu0 0.0
    %2920 = vmatpush1.msra.mxu0 0.0
    %2921 = vmatprep.mubr.f32.mxu0 0.0
    %2922 = vmatmul.mubr.f32.gmra.mrb[0].mxu0 %v2852
    %v2923 = vpop.f32.mrb[0].mxu0
    %v2924 = vadd.f32 0.0, %v2923
    %v2925 = vpop.f32.mrb[0].mxu0
    %2926 = vmatprep.mubr.f32.mxu0 0.0
    %2927 = vmatmul.mubr.f32.gmra.mrb[0].mxu0 %v2855
    %v2928 = vpop.f32.mrb[0].mxu0
    %v2929 = vadd.f32 0.0, %v2928
    %v2930 = vpop.f32.mrb[0].mxu0
    %2931 = vdwg.mxu0
    %2934 = vrot.lane.b32.xlu0 %v2924, 8
    %v2935 = vpop.permute.xlu0 %2934
    %2936 = vrot.lane.b32.xlu0 %v2929, 8
    %v2937 = vpop.permute.xlu0 %2936
    %2940 = vst.msk [vmem:[#allocation2] sm:$0xff] %vm1200, %v2935
    %2941 = vst.msk [vmem:[#allocation2 + $0x8] sm:$0xff] %vm1200, %v2937
    %v2943 = vsel %vm796, %v2220, 0
    %v2946 = vsel %vm796, %v2226, 0
    %v2949 = vsel %vm796, %v2374, 0
    %v2952 = vsel %vm796, %v2380, 0
    %2954 = vmatprep.subr.mxu0 0.0
    %2955 = vmatpush1.xpose.msra.mxu0 %v2949
    %2956 = vmatprep.subr.mxu0 0.0
    %2957 = vmatpush1.xpose.msra.mxu0 %v2952
    %2958 = vmatprep.subr.mxu0 0.0
    %2959 = vmatpush1.xpose.msra.mxu0 0.0
    %2960 = vmatprep.subr.mxu0 0.0
    %2961 = vmatpush1.xpose.msra.mxu0 0.0
    %2962 = vmatprep.subr.mxu0 0.0
    %2963 = vmatpush1.xpose.msra.mxu0 0.0
    %2964 = vmatprep.subr.mxu0 0.0
    %2965 = vmatpush1.xpose.msra.mxu0 0.0
    %2966 = vmatprep.subr.mxu0 0.0
    %2967 = vmatpush1.xpose.msra.mxu0 0.0
    %2968 = vmatprep.subr.mxu0 0.0
    %2969 = vmatpush1.xpose.msra.mxu0 0.0
    %2970 = vmatprep.subr.mxu0 0.0
    %2971 = vmatpush1.xpose.msra.mxu0 0.0
    %2972 = vmatprep.subr.mxu0 0.0
    %2973 = vmatpush1.xpose.msra.mxu0 0.0
    %2974 = vmatprep.subr.mxu0 0.0
    %2975 = vmatpush1.xpose.msra.mxu0 0.0
    %2976 = vmatprep.subr.mxu0 0.0
    %2977 = vmatpush1.xpose.msra.mxu0 0.0
    %2978 = vmatprep.subr.mxu0 0.0
    %2979 = vmatpush1.xpose.msra.mxu0 0.0
    %2980 = vmatprep.subr.mxu0 0.0
    %2981 = vmatpush1.xpose.msra.mxu0 0.0
    %2982 = vmatprep.subr.mxu0 0.0
    %2983 = vmatpush1.xpose.msra.mxu0 0.0
    %2984 = vmatprep.subr.mxu0 0.0
    %2985 = vmatpush1.xpose.msra.mxu0 0.0
    %2986 = vmatprep.subr.mxu0 0.0
    %2987 = vmatpush1.xpose.msra.mxu0 0.0
    %2988 = vmatprep.subr.mxu0 0.0
    %2989 = vmatpush1.xpose.msra.mxu0 0.0
    %2990 = vmatprep.subr.mxu0 0.0
    %2991 = vmatpush1.xpose.msra.mxu0 0.0
    %2992 = vmatprep.subr.mxu0 0.0
    %2993 = vmatpush1.xpose.msra.mxu0 0.0
    %2994 = vmatprep.subr.mxu0 0.0
    %2995 = vmatpush1.xpose.msra.mxu0 0.0
    %2996 = vmatprep.subr.mxu0 0.0
    %2997 = vmatpush1.xpose.msra.mxu0 0.0
    %2998 = vmatprep.subr.mxu0 0.0
    %2999 = vmatpush1.xpose.msra.mxu0 0.0
    %3000 = vmatprep.subr.mxu0 0.0
    %3001 = vmatpush1.xpose.msra.mxu0 0.0
    %3002 = vmatprep.subr.mxu0 0.0
    %3003 = vmatpush1.xpose.msra.mxu0 0.0
    %3004 = vmatprep.subr.mxu0 0.0
    %3005 = vmatpush1.xpose.msra.mxu0 0.0
    %3006 = vmatprep.subr.mxu0 0.0
    %3007 = vmatpush1.xpose.msra.mxu0 0.0
    %3008 = vmatprep.subr.mxu0 0.0
    %3009 = vmatpush1.xpose.msra.mxu0 0.0
    %3010 = vmatprep.subr.mxu0 0.0
    %3011 = vmatpush1.xpose.msra.mxu0 0.0
    %3012 = vmatprep.subr.mxu0 0.0
    %3013 = vmatpush1.xpose.msra.mxu0 0.0
    %3014 = vmatprep.subr.mxu0 0.0
    %3015 = vmatpush1.xpose.msra.mxu0 0.0
    %3016 = vmatprep.subr.mxu0 0.0
    %3017 = vmatpush1.xpose.msra.mxu0 0.0
    %3018 = vmatprep.mubr.f32.mxu0 0.0
    %3019 = vmatmul.mubr.f32.gmra.mrb[0].mxu0 %v2943
    %v3020 = vpop.f32.mrb[0].mxu0
    %v3021 = vadd.f32 0.0, %v3020
    %v3022 = vpop.f32.mrb[0].mxu0
    %3023 = vmatprep.mubr.f32.mxu0 0.0
    %3024 = vmatmul.mubr.f32.gmra.mrb[0].mxu0 %v2946
    %v3025 = vpop.f32.mrb[0].mxu0
    %v3026 = vadd.f32 0.0, %v3025
    %v3027 = vpop.f32.mrb[0].mxu0
    %3028 = vdwg.mxu0
    %v3029 = vmul.f32 %v3021, 0.35355338
    %v3030 = vmul.f32 %v3026, 0.35355338
    %v3031 = vsel %vm210, %v3029, -1e+09
    %v3032 = vsel %vm211, %v3030, -1e+09
    %v3033 = vsel %vm192, %v3031, -1e+30
    %v3034 = vsel %vm193, %v3032, -1e+30
    %v3035 = vsel %vm890, %v3033, -inf
    %3036 = vmax.xlane.f32.xlu0 %v3035
    %v3037 = vpop.xlane.xlu0 %3036
    %v3038 = vsel %vm890, %v3034, -inf
    %3039 = vmax.xlane.f32.xlu0 %v3038
    %v3040 = vpop.xlane.xlu0 %3039
    %v3041 = vsub.f32 %v3033, %v3037
    %v3042 = vsub.f32 %v3034, %v3040
    %v3043 = vmul.f32 %v3041, 1.442695
    %v3044 = vpow.pop %v3043
    %v3045 = vmul.f32 %v3042, 1.442695
    %v3046 = vpow.pop %v3045
    %v3047 = vsel %vm890, %v3044, 0.0
    %3048 = vadd.xlane.f32.xlu0 %v3047
    %v3049 = vpop.xlane.xlu0 %3048
    %v3050 = vsel %vm890, %v3046, 0.0
    %3051 = vadd.xlane.f32.xlu0 %v3050
    %v3052 = vpop.xlane.xlu0 %3051
    %v3053 = vrcp.pop %v3049
    %v3054 = vrcp.pop %v3052
    %v3055 = vmul.f32 %v3044, %v3053
    %v3056 = vmul.f32 %v3046, %v3054
    %v3058 = vsel %vm890, %v3055, 0
    %v3061 = vsel %vm890, %v3056, 0
    %3063 = vmatprep.subr.mxu0 0.0
    %3064 = vmatpush1.msra.mxu0 %v2528
    %3065 = vmatprep.subr.mxu0 0.0
    %3066 = vmatpush1.msra.mxu0 %v2534
    %3067 = vmatprep.subr.mxu0 0.0
    %3068 = vmatpush1.msra.mxu0 0.0
    %3069 = vmatprep.subr.mxu0 0.0
    %3070 = vmatpush1.msra.mxu0 0.0
    %3071 = vmatprep.subr.mxu0 0.0
    %3072 = vmatpush1.msra.mxu0 0.0
    %3073 = vmatprep.subr.mxu0 0.0
    %3074 = vmatpush1.msra.mxu0 0.0
    %3075 = vmatprep.subr.mxu0 0.0
    %3076 = vmatpush1.msra.mxu0 0.0
    %3077 = vmatprep.subr.mxu0 0.0
    %3078 = vmatpush1.msra.mxu0 0.0
    %3079 = vmatprep.subr.mxu0 0.0
    %3080 = vmatpush1.msra.mxu0 0.0
    %3081 = vmatprep.subr.mxu0 0.0
    %3082 = vmatpush1.msra.mxu0 0.0
    %3083 = vmatprep.subr.mxu0 0.0
    %3084 = vmatpush1.msra.mxu0 0.0
    %3085 = vmatprep.subr.mxu0 0.0
    %3086 = vmatpush1.msra.mxu0 0.0
    %3087 = vmatprep.subr.mxu0 0.0
    %3088 = vmatpush1.msra.mxu0 0.0
    %3089 = vmatprep.subr.mxu0 0.0
    %3090 = vmatpush1.msra.mxu0 0.0
    %3091 = vmatprep.subr.mxu0 0.0
    %3092 = vmatpush1.msra.mxu0 0.0
    %3093 = vmatprep.subr.mxu0 0.0
    %3094 = vmatpush1.msra.mxu0 0.0
    %3095 = vmatprep.subr.mxu0 0.0
    %3096 = vmatpush1.msra.mxu0 0.0
    %3097 = vmatprep.subr.mxu0 0.0
    %3098 = vmatpush1.msra.mxu0 0.0
    %3099 = vmatprep.subr.mxu0 0.0
    %3100 = vmatpush1.msra.mxu0 0.0
    %3101 = vmatprep.subr.mxu0 0.0
    %3102 = vmatpush1.msra.mxu0 0.0
    %3103 = vmatprep.subr.mxu0 0.0
    %3104 = vmatpush1.msra.mxu0 0.0
    %3105 = vmatprep.subr.mxu0 0.0
    %3106 = vmatpush1.msra.mxu0 0.0
    %3107 = vmatprep.subr.mxu0 0.0
    %3108 = vmatpush1.msra.mxu0 0.0
    %3109 = vmatprep.subr.mxu0 0.0
    %3110 = vmatpush1.msra.mxu0 0.0
    %3111 = vmatprep.subr.mxu0 0.0
    %3112 = vmatpush1.msra.mxu0 0.0
    %3113 = vmatprep.subr.mxu0 0.0
    %3114 = vmatpush1.msra.mxu0 0.0
    %3115 = vmatprep.subr.mxu0 0.0
    %3116 = vmatpush1.msra.mxu0 0.0
    %3117 = vmatprep.subr.mxu0 0.0
    %3118 = vmatpush1.msra.mxu0 0.0
    %3119 = vmatprep.subr.mxu0 0.0
    %3120 = vmatpush1.msra.mxu0 0.0
    %3121 = vmatprep.subr.mxu0 0.0
    %3122 = vmatpush1.msra.mxu0 0.0
    %3123 = vmatprep.subr.mxu0 0.0
    %3124 = vmatpush1.msra.mxu0 0.0
    %3125 = vmatprep.subr.mxu0 0.0
    %3126 = vmatpush1.msra.mxu0 0.0
    %3127 = vmatprep.mubr.f32.mxu0 0.0
    %3128 = vmatmul.mubr.f32.gmra.mrb[0].mxu0 %v3058
    %v3129 = vpop.f32.mrb[0].mxu0
    %v3130 = vadd.f32 0.0, %v3129
    %v3131 = vpop.f32.mrb[0].mxu0
    %3132 = vmatprep.mubr.f32.mxu0 0.0
    %3133 = vmatmul.mubr.f32.gmra.mrb[0].mxu0 %v3061
    %v3134 = vpop.f32.mrb[0].mxu0
    %v3135 = vadd.f32 0.0, %v3134
    %v3136 = vpop.f32.mrb[0].mxu0
    %3137 = vdwg.mxu0
    %3140 = vrot.lane.b32.xlu0 %v3130, 16
    %v3141 = vpop.permute.xlu0 %3140
    %3142 = vrot.lane.b32.xlu0 %v3135, 16
    %v3143 = vpop.permute.xlu0 %3142
    %3146 = vst.msk [vmem:[#allocation2] sm:$0xff] %vm1407, %v3141
    %3147 = vst.msk [vmem:[#allocation2 + $0x8] sm:$0xff] %vm1407, %v3143
    %v3149 = vsel %vm796, %v2222, 0
    %v3152 = vsel %vm796, %v2228, 0
    %v3155 = vsel %vm796, %v2376, 0
    %v3158 = vsel %vm796, %v2382, 0
    %3160 = vmatprep.subr.mxu0 0.0
    %3161 = vmatpush1.xpose.msra.mxu0 %v3155
    %3162 = vmatprep.subr.mxu0 0.0
    %3163 = vmatpush1.xpose.msra.mxu0 %v3158
    %3164 = vmatprep.subr.mxu0 0.0
    %3165 = vmatpush1.xpose.msra.mxu0 0.0
    %3166 = vmatprep.subr.mxu0 0.0
    %3167 = vmatpush1.xpose.msra.mxu0 0.0
    %3168 = vmatprep.subr.mxu0 0.0
    %3169 = vmatpush1.xpose.msra.mxu0 0.0
    %3170 = vmatprep.subr.mxu0 0.0
    %3171 = vmatpush1.xpose.msra.mxu0 0.0
    %3172 = vmatprep.subr.mxu0 0.0
    %3173 = vmatpush1.xpose.msra.mxu0 0.0
    %3174 = vmatprep.subr.mxu0 0.0
    %3175 = vmatpush1.xpose.msra.mxu0 0.0
    %3176 = vmatprep.subr.mxu0 0.0
    %3177 = vmatpush1.xpose.msra.mxu0 0.0
    %3178 = vmatprep.subr.mxu0 0.0
    %3179 = vmatpush1.xpose.msra.mxu0 0.0
    %3180 = vmatprep.subr.mxu0 0.0
    %3181 = vmatpush1.xpose.msra.mxu0 0.0
    %3182 = vmatprep.subr.mxu0 0.0
    %3183 = vmatpush1.xpose.msra.mxu0 0.0
    %3184 = vmatprep.subr.mxu0 0.0
    %3185 = vmatpush1.xpose.msra.mxu0 0.0
    %3186 = vmatprep.subr.mxu0 0.0
    %3187 = vmatpush1.xpose.msra.mxu0 0.0
    %3188 = vmatprep.subr.mxu0 0.0
    %3189 = vmatpush1.xpose.msra.mxu0 0.0
    %3190 = vmatprep.subr.mxu0 0.0
    %3191 = vmatpush1.xpose.msra.mxu0 0.0
    %3192 = vmatprep.subr.mxu0 0.0
    %3193 = vmatpush1.xpose.msra.mxu0 0.0
    %3194 = vmatprep.subr.mxu0 0.0
    %3195 = vmatpush1.xpose.msra.mxu0 0.0
    %3196 = vmatprep.subr.mxu0 0.0
    %3197 = vmatpush1.xpose.msra.mxu0 0.0
    %3198 = vmatprep.subr.mxu0 0.0
    %3199 = vmatpush1.xpose.msra.mxu0 0.0
    %3200 = vmatprep.subr.mxu0 0.0
    %3201 = vmatpush1.xpose.msra.mxu0 0.0
    %3202 = vmatprep.subr.mxu0 0.0
    %3203 = vmatpush1.xpose.msra.mxu0 0.0
    %3204 = vmatprep.subr.mxu0 0.0
    %3205 = vmatpush1.xpose.msra.mxu0 0.0
    %3206 = vmatprep.subr.mxu0 0.0
    %3207 = vmatpush1.xpose.msra.mxu0 0.0
    %3208 = vmatprep.subr.mxu0 0.0
    %3209 = vmatpush1.xpose.msra.mxu0 0.0
    %3210 = vmatprep.subr.mxu0 0.0
    %3211 = vmatpush1.xpose.msra.mxu0 0.0
    %3212 = vmatprep.subr.mxu0 0.0
    %3213 = vmatpush1.xpose.msra.mxu0 0.0
    %3214 = vmatprep.subr.mxu0 0.0
    %3215 = vmatpush1.xpose.msra.mxu0 0.0
    %3216 = vmatprep.subr.mxu0 0.0
    %3217 = vmatpush1.xpose.msra.mxu0 0.0
    %3218 = vmatprep.subr.mxu0 0.0
    %3219 = vmatpush1.xpose.msra.mxu0 0.0
    %3220 = vmatprep.subr.mxu0 0.0
    %3221 = vmatpush1.xpose.msra.mxu0 0.0
    %3222 = vmatprep.subr.mxu0 0.0
    %3223 = vmatpush1.xpose.msra.mxu0 0.0
    %3224 = vmatprep.mubr.f32.mxu0 0.0
    %3225 = vmatmul.mubr.f32.gmra.mrb[0].mxu0 %v3149
    %v3226 = vpop.f32.mrb[0].mxu0
    %v3227 = vadd.f32 0.0, %v3226
    %v3228 = vpop.f32.mrb[0].mxu0
    %3229 = vmatprep.mubr.f32.mxu0 0.0
    %3230 = vmatmul.mubr.f32.gmra.mrb[0].mxu0 %v3152
    %v3231 = vpop.f32.mrb[0].mxu0
    %v3232 = vadd.f32 0.0, %v3231
    %v3233 = vpop.f32.mrb[0].mxu0
    %3234 = vdwg.mxu0
    %v3235 = vmul.f32 %v3227, 0.35355338
    %v3236 = vmul.f32 %v3232, 0.35355338
    %v3237 = vsel %vm210, %v3235, -1e+09
    %v3238 = vsel %vm211, %v3236, -1e+09
    %v3239 = vsel %vm192, %v3237, -1e+30
    %v3240 = vsel %vm193, %v3238, -1e+30
    %v3241 = vsel %vm890, %v3239, -inf
    %3242 = vmax.xlane.f32.xlu0 %v3241
    %v3243 = vpop.xlane.xlu0 %3242
    %v3244 = vsel %vm890, %v3240, -inf
    %3245 = vmax.xlane.f32.xlu0 %v3244
    %v3246 = vpop.xlane.xlu0 %3245
    %v3247 = vsub.f32 %v3239, %v3243
    %v3248 = vsub.f32 %v3240, %v3246
    %v3249 = vmul.f32 %v3247, 1.442695
    %v3250 = vpow.pop %v3249
    %v3251 = vmul.f32 %v3248, 1.442695
    %v3252 = vpow.pop %v3251
    %v3253 = vsel %vm890, %v3250, 0.0
    %3254 = vadd.xlane.f32.xlu0 %v3253
    %v3255 = vpop.xlane.xlu0 %3254
    %v3256 = vsel %vm890, %v3252, 0.0
    %3257 = vadd.xlane.f32.xlu0 %v3256
    %v3258 = vpop.xlane.xlu0 %3257
    %v3259 = vrcp.pop %v3255
    %v3260 = vrcp.pop %v3258
    %v3261 = vmul.f32 %v3250, %v3259
    %v3262 = vmul.f32 %v3252, %v3260
    %v3264 = vsel %vm890, %v3261, 0
    %v3267 = vsel %vm890, %v3262, 0
    %3269 = vmatprep.subr.mxu0 0.0
    %3270 = vmatpush1.msra.mxu0 %v2530
    %3271 = vmatprep.subr.mxu0 0.0
    %3272 = vmatpush1.msra.mxu0 %v2536
    %3273 = vmatprep.subr.mxu0 0.0
    %3274 = vmatpush1.msra.mxu0 0.0
    %3275 = vmatprep.subr.mxu0 0.0
    %3276 = vmatpush1.msra.mxu0 0.0
    %3277 = vmatprep.subr.mxu0 0.0
    %3278 = vmatpush1.msra.mxu0 0.0
    %3279 = vmatprep.subr.mxu0 0.0
    %3280 = vmatpush1.msra.mxu0 0.0
    %3281 = vmatprep.subr.mxu0 0.0
    %3282 = vmatpush1.msra.mxu0 0.0
    %3283 = vmatprep.subr.mxu0 0.0
    %3284 = vmatpush1.msra.mxu0 0.0
    %3285 = vmatprep.subr.mxu0 0.0
    %3286 = vmatpush1.msra.mxu0 0.0
    %3287 = vmatprep.subr.mxu0 0.0
    %3288 = vmatpush1.msra.mxu0 0.0
    %3289 = vmatprep.subr.mxu0 0.0
    %3290 = vmatpush1.msra.mxu0 0.0
    %3291 = vmatprep.subr.mxu0 0.0
    %3292 = vmatpush1.msra.mxu0 0.0
    %3293 = vmatprep.subr.mxu0 0.0
    %3294 = vmatpush1.msra.mxu0 0.0
    %3295 = vmatprep.subr.mxu0 0.0
    %3296 = vmatpush1.msra.mxu0 0.0
    %3297 = vmatprep.subr.mxu0 0.0
    %3298 = vmatpush1.msra.mxu0 0.0
    %3299 = vmatprep.subr.mxu0 0.0
    %3300 = vmatpush1.msra.mxu0 0.0
    %3301 = vmatprep.subr.mxu0 0.0
    %3302 = vmatpush1.msra.mxu0 0.0
    %3303 = vmatprep.subr.mxu0 0.0
    %3304 = vmatpush1.msra.mxu0 0.0
    %3305 = vmatprep.subr.mxu0 0.0
    %3306 = vmatpush1.msra.mxu0 0.0
    %3307 = vmatprep.subr.mxu0 0.0
    %3308 = vmatpush1.msra.mxu0 0.0
    %3309 = vmatprep.subr.mxu0 0.0
    %3310 = vmatpush1.msra.mxu0 0.0
    %3311 = vmatprep.subr.mxu0 0.0
    %3312 = vmatpush1.msra.mxu0 0.0
    %3313 = vmatprep.subr.mxu0 0.0
    %3314 = vmatpush1.msra.mxu0 0.0
    %3315 = vmatprep.subr.mxu0 0.0
    %3316 = vmatpush1.msra.mxu0 0.0
    %3317 = vmatprep.subr.mxu0 0.0
    %3318 = vmatpush1.msra.mxu0 0.0
    %3319 = vmatprep.subr.mxu0 0.0
    %3320 = vmatpush1.msra.mxu0 0.0
    %3321 = vmatprep.subr.mxu0 0.0
    %3322 = vmatpush1.msra.mxu0 0.0
    %3323 = vmatprep.subr.mxu0 0.0
    %3324 = vmatpush1.msra.mxu0 0.0
    %3325 = vmatprep.subr.mxu0 0.0
    %3326 = vmatpush1.msra.mxu0 0.0
    %3327 = vmatprep.subr.mxu0 0.0
    %3328 = vmatpush1.msra.mxu0 0.0
    %3329 = vmatprep.subr.mxu0 0.0
    %3330 = vmatpush1.msra.mxu0 0.0
    %3331 = vmatprep.subr.mxu0 0.0
    %3332 = vmatpush1.msra.mxu0 0.0
    %3333 = vmatprep.mubr.f32.mxu0 0.0
    %3334 = vmatmul.mubr.f32.gmra.mrb[0].mxu0 %v3264
    %v3335 = vpop.f32.mrb[0].mxu0
    %v3336 = vadd.f32 0.0, %v3335
    %v3337 = vpop.f32.mrb[0].mxu0
    %3338 = vmatprep.mubr.f32.mxu0 0.0
    %3339 = vmatmul.mubr.f32.gmra.mrb[0].mxu0 %v3267
    %v3340 = vpop.f32.mrb[0].mxu0
    %v3341 = vadd.f32 0.0, %v3340
    %v3342 = vpop.f32.mrb[0].mxu0
    %3343 = vdwg.mxu0
    %3346 = vrot.lane.b32.xlu0 %v3336, 24
    %v3347 = vpop.permute.xlu0 %3346
    %3348 = vrot.lane.b32.xlu0 %v3341, 24
    %v3349 = vpop.permute.xlu0 %3348
    %3352 = vst.msk [vmem:[#allocation2] sm:$0xff] %vm1614, %v3347
    %3353 = vst.msk [vmem:[#allocation2 + $0x8] sm:$0xff] %vm1614, %v3349
    %v3354 = vld [vmem:[#allocation2] sm:$0xff]
    %v3355 = vld [vmem:[#allocation2 + $0x8] sm:$0xff]
    %v3356 = vld [vmem:[%s1953 + $0x60] sm:$0xff]
    %v3357 = vld [vmem:[%s1953 + $0xd8] sm:$0xff]
    %v3358 = vld [vmem:[%s1953 + $0x150] sm:$0xff]
    %v3359 = vld [vmem:[%s1953 + $0x1c8] sm:$0xff]
    %v3360 = vld [vmem:[%s2002 + $0x60] ss:$0 sm:$0xff]
    %v3362 = vsel %vm327, %v3354, 0
    %v3365 = vsel %vm327, %v3355, 0
    %3367 = vmatprep.subr.mxu0 0.0
    %3368 = vmatpush1.msra.mxu0 %v3356
    %3369 = vmatprep.subr.mxu0 0.0
    %3370 = vmatpush1.msra.mxu0 %v3357
    %3371 = vmatprep.subr.mxu0 0.0
    %3372 = vmatpush1.msra.mxu0 %v3358
    %3373 = vmatprep.subr.mxu0 0.0
    %3374 = vmatpush1.msra.mxu0 %v3359
    %3375 = vmatprep.subr.mxu0 0.0
    %3376 = vmatpush1.msra.mxu0 0.0
    %3377 = vmatprep.subr.mxu0 0.0
    %3378 = vmatpush1.msra.mxu0 0.0
    %3379 = vmatprep.subr.mxu0 0.0
    %3380 = vmatpush1.msra.mxu0 0.0
    %3381 = vmatprep.subr.mxu0 0.0
    %3382 = vmatpush1.msra.mxu0 0.0
    %3383 = vmatprep.subr.mxu0 0.0
    %3384 = vmatpush1.msra.mxu0 0.0
    %3385 = vmatprep.subr.mxu0 0.0
    %3386 = vmatpush1.msra.mxu0 0.0
    %3387 = vmatprep.subr.mxu0 0.0
    %3388 = vmatpush1.msra.mxu0 0.0
    %3389 = vmatprep.subr.mxu0 0.0
    %3390 = vmatpush1.msra.mxu0 0.0
    %3391 = vmatprep.subr.mxu0 0.0
    %3392 = vmatpush1.msra.mxu0 0.0
    %3393 = vmatprep.subr.mxu0 0.0
    %3394 = vmatpush1.msra.mxu0 0.0
    %3395 = vmatprep.subr.mxu0 0.0
    %3396 = vmatpush1.msra.mxu0 0.0
    %3397 = vmatprep.subr.mxu0 0.0
    %3398 = vmatpush1.msra.mxu0 0.0
    %3399 = vmatprep.subr.mxu0 0.0
    %3400 = vmatpush1.msra.mxu0 0.0
    %3401 = vmatprep.subr.mxu0 0.0
    %3402 = vmatpush1.msra.mxu0 0.0
    %3403 = vmatprep.subr.mxu0 0.0
    %3404 = vmatpush1.msra.mxu0 0.0
    %3405 = vmatprep.subr.mxu0 0.0
    %3406 = vmatpush1.msra.mxu0 0.0
    %3407 = vmatprep.subr.mxu0 0.0
    %3408 = vmatpush1.msra.mxu0 0.0
    %3409 = vmatprep.subr.mxu0 0.0
    %3410 = vmatpush1.msra.mxu0 0.0
    %3411 = vmatprep.subr.mxu0 0.0
    %3412 = vmatpush1.msra.mxu0 0.0
    %3413 = vmatprep.subr.mxu0 0.0
    %3414 = vmatpush1.msra.mxu0 0.0
    %3415 = vmatprep.subr.mxu0 0.0
    %3416 = vmatpush1.msra.mxu0 0.0
    %3417 = vmatprep.subr.mxu0 0.0
    %3418 = vmatpush1.msra.mxu0 0.0
    %3419 = vmatprep.subr.mxu0 0.0
    %3420 = vmatpush1.msra.mxu0 0.0
    %3421 = vmatprep.subr.mxu0 0.0
    %3422 = vmatpush1.msra.mxu0 0.0
    %3423 = vmatprep.subr.mxu0 0.0
    %3424 = vmatpush1.msra.mxu0 0.0
    %3425 = vmatprep.subr.mxu0 0.0
    %3426 = vmatpush1.msra.mxu0 0.0
    %3427 = vmatprep.subr.mxu0 0.0
    %3428 = vmatpush1.msra.mxu0 0.0
    %3429 = vmatprep.subr.mxu0 0.0
    %3430 = vmatpush1.msra.mxu0 0.0
    %3431 = vmatprep.mubr.f32.mxu0 0.0
    %3432 = vmatmul.mubr.f32.gmra.mrb[0].mxu0 %v3362
    %v3433 = vpop.f32.mrb[0].mxu0
    %v3434 = vadd.f32 %v3360, %v3433
    %v3435 = vpop.f32.mrb[0].mxu0
    %3436 = vmatprep.mubr.f32.mxu0 0.0
    %3437 = vmatmul.mubr.f32.gmra.mrb[0].mxu0 %v3365
    %v3438 = vpop.f32.mrb[0].mxu0
    %v3439 = vadd.f32 %v3360, %v3438
    %v3440 = vpop.f32.mrb[0].mxu0
    %3441 = vdwg.mxu0
    %v3442 = vadd.f32 %v1951, %v3434
    %v3443 = vadd.f32 %v1952, %v3439
    %v3444 = vld [vmem:[%s2002 + $0x1] ss:$0 sm:$0xff]
    %v3445 = vld [vmem:[%s2002 + $0x2] ss:$0 sm:$0xff]
    %v3446 = vsel %vm327, %v3442, 0.0
    %3447 = vadd.xlane.f32.xlu0 %v3446
    %v3448 = vpop.xlane.xlu0 %3447
    %v3449 = vsel %vm327, %v3443, 0.0
    %3450 = vadd.xlane.f32.xlu0 %v3449
    %v3451 = vpop.xlane.xlu0 %3450
    %v3452 = vmul.f32 %v3448, %v1715
    %v3453 = vmul.f32 %v3451, %v1715
    %v3454 = vsub.f32 %v3442, %v3452
    %v3455 = vsub.f32 %v3443, %v3453
    %v3456 = vmul.f32 %v3454, %v3454
    %v3457 = vmul.f32 %v3455, %v3455
    %v3458 = vsel %vm327, %v3456, 0.0
    %3459 = vadd.xlane.f32.xlu0 %v3458
    %v3460 = vpop.xlane.xlu0 %3459
    %v3461 = vsel %vm327, %v3457, 0.0
    %3462 = vadd.xlane.f32.xlu0 %v3461
    %v3463 = vpop.xlane.xlu0 %3462
    %v3464 = vmul.f32 %v3460, %v1715
    %v3465 = vmul.f32 %v3463, %v1715
    %v3466 = vadd.f32 %v3464, 1e-05
    %v3467 = vadd.f32 %v3465, 1e-05
    %v3468 = vrsqrt.pop %v3466
    %v3469 = vrsqrt.pop %v3467
    %v3470 = vmul.f32 %v3454, %v3468
    %v3471 = vmul.f32 %v3455, %v3469
    %v3472 = vmul.f32 %v3470, %v3444
    %v3473 = vmul.f32 %v3471, %v3444
    %v3474 = vadd.f32 %v3472, %v3445
    %v3475 = vadd.f32 %v3473, %v3445
    %v3476 = vld [vmem:[%s1953 + $0x68] sm:$0xff]
    %v3477 = vld [vmem:[%s1953 + $0xe0] sm:$0xff]
    %v3478 = vld [vmem:[%s1953 + $0x158] sm:$0xff]
    %v3479 = vld [vmem:[%s1953 + $0x1d0] sm:$0xff]
    %v3480 = vld [vmem:[%s2002 + $0x68] ss:$0 sm:$0xff]
    %v3482 = vsel %vm327, %v3474, 0
    %v3485 = vsel %vm327, %v3475, 0
    %3487 = vmatprep.subr.mxu0 0.0
    %3488 = vmatpush1.msra.mxu0 %v3476
    %3489 = vmatprep.subr.mxu0 0.0
    %3490 = vmatpush1.msra.mxu0 %v3477
    %3491 = vmatprep.subr.mxu0 0.0
    %3492 = vmatpush1.msra.mxu0 %v3478
    %3493 = vmatprep.subr.mxu0 0.0
    %3494 = vmatpush1.msra.mxu0 %v3479
    %3495 = vmatprep.subr.mxu0 0.0
    %3496 = vmatpush1.msra.mxu0 0.0
    %3497 = vmatprep.subr.mxu0 0.0
    %3498 = vmatpush1.msra.mxu0 0.0
    %3499 = vmatprep.subr.mxu0 0.0
    %3500 = vmatpush1.msra.mxu0 0.0
    %3501 = vmatprep.subr.mxu0 0.0
    %3502 = vmatpush1.msra.mxu0 0.0
    %3503 = vmatprep.subr.mxu0 0.0
    %3504 = vmatpush1.msra.mxu0 0.0
    %3505 = vmatprep.subr.mxu0 0.0
    %3506 = vmatpush1.msra.mxu0 0.0
    %3507 = vmatprep.subr.mxu0 0.0
    %3508 = vmatpush1.msra.mxu0 0.0
    %3509 = vmatprep.subr.mxu0 0.0
    %3510 = vmatpush1.msra.mxu0 0.0
    %3511 = vmatprep.subr.mxu0 0.0
    %3512 = vmatpush1.msra.mxu0 0.0
    %3513 = vmatprep.subr.mxu0 0.0
    %3514 = vmatpush1.msra.mxu0 0.0
    %3515 = vmatprep.subr.mxu0 0.0
    %3516 = vmatpush1.msra.mxu0 0.0
    %3517 = vmatprep.subr.mxu0 0.0
    %3518 = vmatpush1.msra.mxu0 0.0
    %3519 = vmatprep.subr.mxu0 0.0
    %3520 = vmatpush1.msra.mxu0 0.0
    %3521 = vmatprep.subr.mxu0 0.0
    %3522 = vmatpush1.msra.mxu0 0.0
    %3523 = vmatprep.subr.mxu0 0.0
    %3524 = vmatpush1.msra.mxu0 0.0
    %3525 = vmatprep.subr.mxu0 0.0
    %3526 = vmatpush1.msra.mxu0 0.0
    %3527 = vmatprep.subr.mxu0 0.0
    %3528 = vmatpush1.msra.mxu0 0.0
    %3529 = vmatprep.subr.mxu0 0.0
    %3530 = vmatpush1.msra.mxu0 0.0
    %3531 = vmatprep.subr.mxu0 0.0
    %3532 = vmatpush1.msra.mxu0 0.0
    %3533 = vmatprep.subr.mxu0 0.0
    %3534 = vmatpush1.msra.mxu0 0.0
    %3535 = vmatprep.subr.mxu0 0.0
    %3536 = vmatpush1.msra.mxu0 0.0
    %3537 = vmatprep.subr.mxu0 0.0
    %3538 = vmatpush1.msra.mxu0 0.0
    %3539 = vmatprep.subr.mxu0 0.0
    %3540 = vmatpush1.msra.mxu0 0.0
    %3541 = vmatprep.subr.mxu0 0.0
    %3542 = vmatpush1.msra.mxu0 0.0
    %3543 = vmatprep.subr.mxu0 0.0
    %3544 = vmatpush1.msra.mxu0 0.0
    %3545 = vmatprep.subr.mxu0 0.0
    %3546 = vmatpush1.msra.mxu0 0.0
    %3547 = vmatprep.subr.mxu0 0.0
    %3548 = vmatpush1.msra.mxu0 0.0
    %3549 = vmatprep.subr.mxu0 0.0
    %3550 = vmatpush1.msra.mxu0 0.0
    %3551 = vmatprep.mubr.f32.mxu0 0.0
    %3552 = vmatmul.mubr.f32.gmra.mrb[0].mxu0 %v3482
    %v3553 = vpop.f32.mrb[0].mxu0
    %v3554 = vadd.f32 %v3480, %v3553
    %v3555 = vpop.f32.mrb[0].mxu0
    %3556 = vmatprep.mubr.f32.mxu0 0.0
    %3557 = vmatmul.mubr.f32.gmra.mrb[0].mxu0 %v3485
    %v3558 = vpop.f32.mrb[0].mxu0
    %v3559 = vadd.f32 %v3480, %v3558
    %v3560 = vpop.f32.mrb[0].mxu0
    %3561 = vdwg.mxu0
    %v3562 = vmax.f32 %v3554, 0.0
    %v3563 = vmax.f32 %v3559, 0.0
    %v3564 = vld [vmem:[%s1953 + $0x70] sm:$0xff]
    %v3565 = vld [vmem:[%s1953 + $0xe8] sm:$0xff]
    %v3566 = vld [vmem:[%s1953 + $0x160] sm:$0xff]
    %v3567 = vld [vmem:[%s1953 + $0x1d8] sm:$0xff]
    %v3568 = vld [vmem:[%s1953 + $0x250] sm:$0xff]
    %v3569 = vld [vmem:[%s1953 + $0x2c8] sm:$0xff]
    %v3570 = vld [vmem:[%s1953 + $0x340] sm:$0xff]
    %v3571 = vld [vmem:[%s1953 + $0x3b8] sm:$0xff]
    %v3572 = vld [vmem:[%s2002 + $0x70] ss:$0 sm:$0xff]
    %v3574 = vsel %vm1837, %v3562, 0
    %v3577 = vsel %vm1837, %v3563, 0
    %3579 = vmatprep.subr.mxu0 0.0
    %3580 = vmatpush1.msra.mxu0 %v3564
    %3581 = vmatprep.subr.mxu0 0.0
    %3582 = vmatpush1.msra.mxu0 %v3565
    %3583 = vmatprep.subr.mxu0 0.0
    %3584 = vmatpush1.msra.mxu0 %v3566
    %3585 = vmatprep.subr.mxu0 0.0
    %3586 = vmatpush1.msra.mxu0 %v3567
    %3587 = vmatprep.subr.mxu0 0.0
    %3588 = vmatpush1.msra.mxu0 %v3568
    %3589 = vmatprep.subr.mxu0 0.0
    %3590 = vmatpush1.msra.mxu0 %v3569
    %3591 = vmatprep.subr.mxu0 0.0
    %3592 = vmatpush1.msra.mxu0 %v3570
    %3593 = vmatprep.subr.mxu0 0.0
    %3594 = vmatpush1.msra.mxu0 %v3571
    %3595 = vmatprep.subr.mxu0 0.0
    %3596 = vmatpush1.msra.mxu0 0.0
    %3597 = vmatprep.subr.mxu0 0.0
    %3598 = vmatpush1.msra.mxu0 0.0
    %3599 = vmatprep.subr.mxu0 0.0
    %3600 = vmatpush1.msra.mxu0 0.0
    %3601 = vmatprep.subr.mxu0 0.0
    %3602 = vmatpush1.msra.mxu0 0.0
    %3603 = vmatprep.subr.mxu0 0.0
    %3604 = vmatpush1.msra.mxu0 0.0
    %3605 = vmatprep.subr.mxu0 0.0
    %3606 = vmatpush1.msra.mxu0 0.0
    %3607 = vmatprep.subr.mxu0 0.0
    %3608 = vmatpush1.msra.mxu0 0.0
    %3609 = vmatprep.subr.mxu0 0.0
    %3610 = vmatpush1.msra.mxu0 0.0
    %3611 = vmatprep.subr.mxu0 0.0
    %3612 = vmatpush1.msra.mxu0 0.0
    %3613 = vmatprep.subr.mxu0 0.0
    %3614 = vmatpush1.msra.mxu0 0.0
    %3615 = vmatprep.subr.mxu0 0.0
    %3616 = vmatpush1.msra.mxu0 0.0
    %3617 = vmatprep.subr.mxu0 0.0
    %3618 = vmatpush1.msra.mxu0 0.0
    %3619 = vmatprep.subr.mxu0 0.0
    %3620 = vmatpush1.msra.mxu0 0.0
    %3621 = vmatprep.subr.mxu0 0.0
    %3622 = vmatpush1.msra.mxu0 0.0
    %3623 = vmatprep.subr.mxu0 0.0
    %3624 = vmatpush1.msra.mxu0 0.0
    %3625 = vmatprep.subr.mxu0 0.0
    %3626 = vmatpush1.msra.mxu0 0.0
    %3627 = vmatprep.subr.mxu0 0.0
    %3628 = vmatpush1.msra.mxu0 0.0
    %3629 = vmatprep.subr.mxu0 0.0
    %3630 = vmatpush1.msra.mxu0 0.0
    %3631 = vmatprep.subr.mxu0 0.0
    %3632 = vmatpush1.msra.mxu0 0.0
    %3633 = vmatprep.subr.mxu0 0.0
    %3634 = vmatpush1.msra.mxu0 0.0
    %3635 = vmatprep.subr.mxu0 0.0
    %3636 = vmatpush1.msra.mxu0 0.0
    %3637 = vmatprep.subr.mxu0 0.0
    %3638 = vmatpush1.msra.mxu0 0.0
    %3639 = vmatprep.subr.mxu0 0.0
    %3640 = vmatpush1.msra.mxu0 0.0
    %3641 = vmatprep.subr.mxu0 0.0
    %3642 = vmatpush1.msra.mxu0 0.0
    %3643 = vmatprep.mubr.f32.mxu0 0.0
    %3644 = vmatmul.mubr.f32.gmra.mrb[0].mxu0 %v3574
    %v3645 = vpop.f32.mrb[0].mxu0
    %v3646 = vadd.f32 %v3572, %v3645
    %v3647 = vpop.f32.mrb[0].mxu0
    %3648 = vmatprep.mubr.f32.mxu0 0.0
    %3649 = vmatmul.mubr.f32.gmra.mrb[0].mxu0 %v3577
    %v3650 = vpop.f32.mrb[0].mxu0
    %v3651 = vadd.f32 %v3572, %v3650
    %v3652 = vpop.f32.mrb[0].mxu0
    %3653 = vdwg.mxu0
    %v3654 = vadd.f32 %v3474, %v3646
    %v3655 = vadd.f32 %v3475, %v3651
    %v3656 = vld [vmem:[%s2002 + $0x3] ss:$0 sm:$0xff]
    %v3657 = vld [vmem:[%s2002 + $0x4] ss:$0 sm:$0xff]
    %v3658 = vsel %vm327, %v3654, 0.0
    %3659 = vadd.xlane.f32.xlu0 %v3658
    %v3660 = vpop.xlane.xlu0 %3659
    %v3661 = vsel %vm327, %v3655, 0.0
    %3662 = vadd.xlane.f32.xlu0 %v3661
    %v3663 = vpop.xlane.xlu0 %3662
    %v3664 = vmul.f32 %v3660, %v1715
    %v3665 = vmul.f32 %v3663, %v1715
    %v3666 = vsub.f32 %v3654, %v3664
    %v3667 = vsub.f32 %v3655, %v3665
    %v3668 = vmul.f32 %v3666, %v3666
    %v3669 = vmul.f32 %v3667, %v3667
    %v3670 = vsel %vm327, %v3668, 0.0
    %3671 = vadd.xlane.f32.xlu0 %v3670
    %v3672 = vpop.xlane.xlu0 %3671
    %v3673 = vsel %vm327, %v3669, 0.0
    %3674 = vadd.xlane.f32.xlu0 %v3673
    %v3675 = vpop.xlane.xlu0 %3674
    %v3676 = vmul.f32 %v3672, %v1715
    %v3677 = vmul.f32 %v3675, %v1715
    %v3678 = vadd.f32 %v3676, 1e-05
    %v3679 = vadd.f32 %v3677, 1e-05
    %v3680 = vrsqrt.pop %v3678
    %v3681 = vrsqrt.pop %v3679
    %v3682 = vmul.f32 %v3666, %v3680
    %v3683 = vmul.f32 %v3667, %v3681
    %v3684 = vmul.f32 %v3682, %v3656
    %v3685 = vmul.f32 %v3683, %v3656
    %v3686 = vadd.f32 %v3684, %v3657
    %v3687 = vadd.f32 %v3685, %v3657
    %v3688 = vld [vmem:[%s4] sm:$0xff]
    %v3689 = vld [vmem:[%s4 + $0x8] sm:$0xff]
    %v3690 = vld [vmem:[%s4 + $0x10] sm:$0xff]
    %v3691 = vld [vmem:[%s4 + $0x18] sm:$0xff]
    %v3692 = vld [vmem:[%s4 + $0x20] sm:$0x1]
    %v3693 = vlaneseq
    %v3694 = vshrl.u32 %v3693, 7
    %v3695 = vsub.s32 0, %v3694
    %v3696 = vrot.slane %v3692, %v3695
    %v3698 = vsel %vm327, %v3686, 0
    %v3701 = vsel %vm327, %v3687, 0
    %3703 = vmatprep.subr.mxu0 0.0
    %3704 = vmatpush1.msra.mxu0 %v3688
    %3705 = vmatprep.subr.mxu0 0.0
    %3706 = vmatpush1.msra.mxu0 %v3689
    %3707 = vmatprep.subr.mxu0 0.0
    %3708 = vmatpush1.msra.mxu0 %v3690
    %3709 = vmatprep.subr.mxu0 0.0
    %3710 = vmatpush1.msra.mxu0 %v3691
    %3711 = vmatprep.subr.mxu0 0.0
    %3712 = vmatpush1.msra.mxu0 0.0
    %3713 = vmatprep.subr.mxu0 0.0
    %3714 = vmatpush1.msra.mxu0 0.0
    %3715 = vmatprep.subr.mxu0 0.0
    %3716 = vmatpush1.msra.mxu0 0.0
    %3717 = vmatprep.subr.mxu0 0.0
    %3718 = vmatpush1.msra.mxu0 0.0
    %3719 = vmatprep.subr.mxu0 0.0
    %3720 = vmatpush1.msra.mxu0 0.0
    %3721 = vmatprep.subr.mxu0 0.0
    %3722 = vmatpush1.msra.mxu0 0.0
    %3723 = vmatprep.subr.mxu0 0.0
    %3724 = vmatpush1.msra.mxu0 0.0
    %3725 = vmatprep.subr.mxu0 0.0
    %3726 = vmatpush1.msra.mxu0 0.0
    %3727 = vmatprep.subr.mxu0 0.0
    %3728 = vmatpush1.msra.mxu0 0.0
    %3729 = vmatprep.subr.mxu0 0.0
    %3730 = vmatpush1.msra.mxu0 0.0
    %3731 = vmatprep.subr.mxu0 0.0
    %3732 = vmatpush1.msra.mxu0 0.0
    %3733 = vmatprep.subr.mxu0 0.0
    %3734 = vmatpush1.msra.mxu0 0.0
    %3735 = vmatprep.subr.mxu0 0.0
    %3736 = vmatpush1.msra.mxu0 0.0
    %3737 = vmatprep.subr.mxu0 0.0
    %3738 = vmatpush1.msra.mxu0 0.0
    %3739 = vmatprep.subr.mxu0 0.0
    %3740 = vmatpush1.msra.mxu0 0.0
    %3741 = vmatprep.subr.mxu0 0.0
    %3742 = vmatpush1.msra.mxu0 0.0
    %3743 = vmatprep.subr.mxu0 0.0
    %3744 = vmatpush1.msra.mxu0 0.0
    %3745 = vmatprep.subr.mxu0 0.0
    %3746 = vmatpush1.msra.mxu0 0.0
    %3747 = vmatprep.subr.mxu0 0.0
    %3748 = vmatpush1.msra.mxu0 0.0
    %3749 = vmatprep.subr.mxu0 0.0
    %3750 = vmatpush1.msra.mxu0 0.0
    %3751 = vmatprep.subr.mxu0 0.0
    %3752 = vmatpush1.msra.mxu0 0.0
    %3753 = vmatprep.subr.mxu0 0.0
    %3754 = vmatpush1.msra.mxu0 0.0
    %3755 = vmatprep.subr.mxu0 0.0
    %3756 = vmatpush1.msra.mxu0 0.0
    %3757 = vmatprep.subr.mxu0 0.0
    %3758 = vmatpush1.msra.mxu0 0.0
    %3759 = vmatprep.subr.mxu0 0.0
    %3760 = vmatpush1.msra.mxu0 0.0
    %3761 = vmatprep.subr.mxu0 0.0
    %3762 = vmatpush1.msra.mxu0 0.0
    %3763 = vmatprep.subr.mxu0 0.0
    %3764 = vmatpush1.msra.mxu0 0.0
    %3765 = vmatprep.subr.mxu0 0.0
    %3766 = vmatpush1.msra.mxu0 0.0
    %3767 = vmatprep.mubr.f32.mxu0 0.0
    %3768 = vmatmul.mubr.f32.gmra.mrb[0].mxu0 %v3698
    %v3769 = vpop.f32.mrb[0].mxu0
    %v3770 = vadd.f32 %v3696, %v3769
    %v3771 = vpop.f32.mrb[0].mxu0
    %3772 = vmatprep.mubr.f32.mxu0 0.0
    %3773 = vmatmul.mubr.f32.gmra.mrb[0].mxu0 %v3701
    %v3774 = vpop.f32.mrb[0].mxu0
    %v3775 = vadd.f32 %v3696, %v3774
    %v3776 = vpop.f32.mrb[0].mxu0
    %3777 = vdwg.mxu0
    %3778 = vst [vmem:[%s5] sm:$0xff] %v3770
    %3779 = vst [vmem:[%s5 + $0x8] sm:$0xff] %v3775
    // Predicated region
    $region30: #{decoder_only_transformer_forward.1} parent=1 // pred_check
      _
    $region31: #{decoder_only_transformer_forward.1} parent=1 // pred_check_branch
      %3781 = sbr.rel (0) target = $region33
    $region32: #{decoder_only_transformer_forward.1} parent=1 // pred_region
      _
    $region33: #{decoder_only_transformer_forward.1} parent=1 // pred_fallthru
      _
    // Predicated region
    $region34: #{decoder_only_transformer_forward.1} parent=1 // pred_check
      _
    $region35: #{decoder_only_transformer_forward.1} parent=1 // pred_check_branch
      %3783 = sbr.rel (0) target = $region37
    $region36: #{decoder_only_transformer_forward.1} parent=1 // pred_region
      _
    $region37: #{decoder_only_transformer_forward.1} parent=1 // pred_fallthru
      _
    %3784 = vsyncpa [#allocation4], 1
    %3785 = vsyncpa [#allocation6], 1

</llo_original>
